<compile_context>
chip_gen: v6e
topology: v6e:2x2x1
jax: 0.10.0
libtpu: 0.0.40
codegen_flags: <defaults>
</compile_context>

<pallas_src>
import jax
import jax.numpy as jnp
import numpy as np
from jax.experimental import pallas as pl
from jax.experimental.pallas import tpu as pltpu

VOCAB = 100
D_MODEL = 32
N_HEAD = 4
D_HEAD = 8
D_INNER = 64
N_LAYER = 2
NUM_CLASSES = 3
LN_EPS = 1e-12


def _layernorm(x, g, b):
    mu = jnp.mean(x, axis=-1, keepdims=True)
    var = jnp.mean(jnp.square(x - mu), axis=-1, keepdims=True)
    return (x - mu) * jax.lax.rsqrt(var + LN_EPS) * g + b


# ----------------------------------------------------------------------------
# One fused kernel: embeddings -> [rel-attn + LN + FFN + LN] x N_LAYER ->
# SequenceSummary("last", proj+tanh) -> classifier.
# ----------------------------------------------------------------------------
def xlnet_fused_kernel(h0_ref, r_ref, mask_ref,
                       wqr_ref, rwb_ref, rrb_ref, wo_ref,
                       ln1g_ref, ln1b_ref, ff1w_ref, ff1b_ref,
                       ff2w_ref, ff2b_ref, ln2g_ref, ln2b_ref,
                       sw_ref, sb_ref, cw_ref, cb_ref,
                       out_ref):
    B, S, D = h0_ref.shape
    H, Dh = N_HEAD, D_HEAD
    HD = H * Dh
    T = B * S
    scale = 1.0 / (Dh ** 0.5)

    h = h0_ref[...].reshape(T, D)              # (T, D)   f32 residual stream
    r_bf = r_ref[...]                          # (2S, D)  bf16 rel-pos encodings
    # additive mask replicated per head once (layer-invariant), head-major order
    mask_all = jnp.concatenate([mask_ref[...]] * H, axis=0)    # (H*B, S, S) f32

    for l in range(N_LAYER):                   # all layers fused in one kernel
        # ---- single lane-dense projection: [h ; r] @ [wq|wk|wv|wr] ----
        x_in = jnp.concatenate([h.astype(jnp.bfloat16), r_bf], axis=0)  # (T+2S,D)
        proj = jnp.dot(x_in, wqr_ref[l],
                       preferred_element_type=jnp.float32)              # (T+2S,4HD)
        q = proj[:T, 0 * HD:1 * HD]
        k = proj[:T, 1 * HD:2 * HD]
        v = proj[:T, 2 * HD:3 * HD]
        kr = proj[T:, 3 * HD:4 * HD]                                    # (2S, HD)

        # hoisted head-bias adds + 1/sqrt(d) folded into q (not the SxS scores)
        q_rw = ((q + rwb_ref[l]) * scale).reshape(B, S, HD).astype(jnp.bfloat16)
        q_rr = ((q + rrb_ref[l]) * scale).astype(jnp.bfloat16)          # (T, HD)
        k_b = k.reshape(B, S, HD).astype(jnp.bfloat16)
        v_b = v.reshape(B, S, HD).astype(jnp.bfloat16)

        # ---- per-head score matmuls, stacked head-major on the leading axis ----
        scores_ac, scores_bd = [], []
        for n in range(H):                     # static unroll over heads
            lo, hi = n * Dh, n * Dh + Dh
            # content term AC, batched over the batch dim
            scores_ac.append(
                jnp.einsum('bid,bjd->bij', q_rw[:, :, lo:hi], k_b[:, :, lo:hi],
                           preferred_element_type=jnp.float32))         # (B,S,S)
            # position term BD on the flattened (T, Dh) query block
            krn_t = kr[:, lo:hi].T.astype(jnp.bfloat16)                  # (Dh,2S)
            scores_bd.append(
                jnp.dot(q_rr[:, lo:hi], krn_t,
                        preferred_element_type=jnp.float32)
                .reshape(B, S, 2 * S))                                   # (B,S,2S)

        ac = jnp.concatenate(scores_ac, axis=0)        # (H*B, S, S)
        bd_raw = jnp.concatenate(scores_bd, axis=0)    # (H*B, S, 2S)
        # XLNet rel_shift done ONCE for all heads: bd[x,i,j] = bd_raw[x,i,S-i+j]
        # (at real S this would be a single pltpu.roll with a per-row stride)
        bd = jnp.concatenate(
            [bd_raw[:, i:i + 1, S - i:2 * S - i] for i in range(S)], axis=1)

        # softmax in f32 over all heads together
        score = ac + bd + mask_all
        score = score - jnp.max(score, axis=-1, keepdims=True)
        p = jnp.exp(score)
        p = (p * pl.reciprocal(jnp.sum(p, axis=-1, keepdims=True), approx=True)
             ).astype(jnp.bfloat16)                                      # (H*B,S,S)

        # weighted values per head (leading-axis slices of p), merged onto lanes
        head_outs = [
            jnp.einsum('bij,bjd->bid',
                       p[n * B:(n + 1) * B], v_b[:, :, n * Dh:(n + 1) * Dh],
                       preferred_element_type=jnp.float32)
            for n in range(H)]
        av = jnp.concatenate(head_outs, axis=-1).reshape(T, HD)          # (T, HD)

        attn_out = jnp.dot(av.astype(jnp.bfloat16), wo_ref[l],
                           preferred_element_type=jnp.float32)           # (T, D)
        x = _layernorm(attn_out + h, ln1g_ref[l], ln1b_ref[l])

        y = jnp.dot(x.astype(jnp.bfloat16), ff1w_ref[l],
                    preferred_element_type=jnp.float32) + ff1b_ref[l]
        # TODO(synk): HF XLNet uses the exact erf GELU; tanh approximation kept
        #             for a guaranteed Mosaic lowering (difference ~1e-3).
        y = jax.nn.gelu(y, approximate=True)
        y = jnp.dot(y.astype(jnp.bfloat16), ff2w_ref[l],
                    preferred_element_type=jnp.float32) + ff2b_ref[l]
        h = _layernorm(y + x, ln2g_ref[l], ln2b_ref[l])

    # ---- SequenceSummary("last", proj + tanh) + final Linear, fused here ----
    last = jnp.concatenate(
        [h[(b + 1) * S - 1:(b + 1) * S, :] for b in range(B)], axis=0)   # (B, D)
    pooled = jnp.tanh(jnp.dot(last.astype(jnp.bfloat16), sw_ref[...],
                              preferred_element_type=jnp.float32) + sb_ref[...])
    out_ref[...] = (jnp.dot(pooled.astype(jnp.bfloat16), cw_ref[...],
                            preferred_element_type=jnp.float32) + cb_ref[...]
                    ).astype(out_ref.dtype)


# ----------------------------------------------------------------------------
# Wrapper: embedding lookup + rel-pos encodings + mask in plain JAX, then one
# pallas_call with all weights stacked along a leading layer axis.
# ----------------------------------------------------------------------------
def sinusoid_pos_emb(S, D):
    inv_freq = 1.0 / (10000.0 ** (np.arange(0, D, 2.0) / D))
    pos_seq = np.arange(S, -S, -1.0)                   # klen .. -qlen+1 (len 2S)
    sinus = np.einsum('i,d->id', pos_seq, inv_freq)
    return jnp.asarray(np.concatenate([np.sin(sinus), np.cos(sinus)], axis=-1),
                       jnp.float32)


def make_mask_bias(att_mask):
    # HF XLNet (h-stream): key j masked for query i iff attention_mask[b,j]==0
    # and i != j (tokens always see themselves).  Additive bias 0 / -1e30.
    att = np.asarray(att_mask, np.float32)
    B, S = att.shape
    pad = (1.0 - att)[:, None, :]                      # (B, 1, S)
    eye = np.eye(S, dtype=np.float32)[None, :, :]
    masked = ((pad - eye) > 0).astype(np.float32)
    return jnp.asarray(-1e30 * masked, jnp.float32)


def stack_layer_params(layers):
    HD = N_HEAD * D_HEAD

    def stack(name, dtype=None):
        a = jnp.stack([lp[name] for lp in layers], axis=0)
        return a.astype(dtype) if dtype is not None else a

    # fused projection weight: [wq | wk | wv | wr]  -> (L, D, 4*HD)
    wqr = jnp.stack(
        [jnp.concatenate([lp['wq'], lp['wk'], lp['wv'], lp['wr']], axis=1)
         for lp in layers], axis=0).astype(jnp.bfloat16)
    rwb = jnp.stack([lp['rwb'].reshape(1, HD) for lp in layers], axis=0)
    rrb = jnp.stack([lp['rrb'].reshape(1, HD) for lp in layers], axis=0)
    return dict(
        wqr=wqr, rwb=rwb, rrb=rrb,
        wo=stack('wo', jnp.bfloat16),
        ln1g=stack('ln1g'), ln1b=stack('ln1b'),
        ff1w=stack('ff1w', jnp.bfloat16), ff1b=stack('ff1b'),
        ff2w=stack('ff2w', jnp.bfloat16), ff2b=stack('ff2b'),
        ln2g=stack('ln2g'), ln2b=stack('ln2b'))


def xlnet_forward(params, input_ids, att_mask):
    B, S = input_ids.shape
    # TODO(synk): embedding gather stays in the XLA wrapper (a Pallas version
    #             would need a manual DMA gather, not worth it at this size).
    h0 = jnp.take(params['word_emb'], input_ids, axis=0).astype(jnp.float32)
    r = sinusoid_pos_emb(S, D_MODEL).astype(jnp.bfloat16)
    mask_bias = make_mask_bias(att_mask)
    st = stack_layer_params(params['layers'])

    vmem = lambda: pl.BlockSpec(memory_space=pltpu.MemorySpace.VMEM)
    args = (h0, r, mask_bias,
            st['wqr'], st['rwb'], st['rrb'], st['wo'],
            st['ln1g'], st['ln1b'], st['ff1w'], st['ff1b'],
            st['ff2w'], st['ff2b'], st['ln2g'], st['ln2b'],
            params['sw'].astype(jnp.bfloat16), params['sb'],
            params['cw'].astype(jnp.bfloat16), params['cb'])
    return pl.pallas_call(
        xlnet_fused_kernel,
        out_shape=jax.ShapeDtypeStruct((B, NUM_CLASSES), jnp.float32),
        in_specs=[vmem() for _ in args],
        out_specs=vmem(),
    )(*args)


# ----------------------------------------------------------------------------
# Pure-JAX f32 reference (same math) for the correctness check.
# ----------------------------------------------------------------------------
def ref_forward(params, input_ids, att_mask):
    B, S = input_ids.shape
    D, H, Dh = D_MODEL, N_HEAD, D_HEAD
    h = jnp.take(params['word_emb'], input_ids, axis=0).astype(jnp.float32)
    r = sinusoid_pos_emb(S, D)
    mask_bias = make_mask_bias(att_mask)
    scale = 1.0 / (Dh ** 0.5)
    for lp in params['layers']:
        q = h @ lp['wq']; k = h @ lp['wk']; v = h @ lp['wv']; kr = r @ lp['wr']
        qh = q.reshape(B, S, H, Dh); kh = k.reshape(B, S, H, Dh)
        vh = v.reshape(B, S, H, Dh); krh = kr.reshape(2 * S, H, Dh)
        ac = jnp.einsum('bind,bjnd->bnij', qh + lp['rwb'], kh)
        bd_raw = jnp.einsum('bind,knd->bnik', qh + lp['rrb'], krh)
        bd = jnp.stack([bd_raw[:, :, i, S - i:2 * S - i] for i in range(S)], axis=2)
        score = (ac + bd) * scale + mask_bias[:, None, :, :]
        p = jax.nn.softmax(score, axis=-1)
        av = jnp.einsum('bnij,bjnd->bind', p, vh).reshape(B, S, H * Dh)
        x = _layernorm(av @ lp['wo'] + h, lp['ln1g'], lp['ln1b'])
        y = jax.nn.gelu(x @ lp['ff1w'] + lp['ff1b'], approximate=True)
        y = y @ lp['ff2w'] + lp['ff2b']
        h = _layernorm(y + x, lp['ln2g'], lp['ln2b'])
    pooled = jnp.tanh(h[:, -1, :] @ params['sw'] + params['sb'])
    return pooled @ params['cw'] + params['cb']


def init_params(key):
    D, H, Dh, Di = D_MODEL, N_HEAD, D_HEAD, D_INNER
    HD = H * Dh
    keys = iter(jax.random.split(key, 64))

    def nrm(shape, std=0.02):
        return std * jax.random.normal(next(keys), shape, jnp.float32)

    params = {'word_emb': nrm((VOCAB, D))}
    layers = []
    for _ in range(N_LAYER):
        layers.append(dict(
            wq=nrm((D, HD)), wk=nrm((D, HD)), wv=nrm((D, HD)), wr=nrm((D, HD)),
            rwb=nrm((H, Dh)), rrb=nrm((H, Dh)),
            wo=nrm((HD, D)),
            ln1g=jnp.ones((1, D), jnp.float32), ln1b=jnp.zeros((1, D), jnp.float32),
            ff1w=nrm((D, Di)), ff1b=nrm((1, Di)),
            ff2w=nrm((Di, D)), ff2b=nrm((1, D)),
            ln2g=jnp.ones((1, D), jnp.float32), ln2b=jnp.zeros((1, D), jnp.float32),
        ))
    params['layers'] = layers
    params['sw'] = nrm((D, D))                       # SequenceSummary proj
    params['sb'] = jnp.zeros((1, D), jnp.float32)
    params['cw'] = nrm((D, NUM_CLASSES))             # final classifier
    params['cb'] = jnp.zeros((1, NUM_CLASSES), jnp.float32)
    return params


if __name__ == "__main__":
    key = jax.random.PRNGKey(0)
    pkey, ikey = jax.random.split(key)
    params = init_params(pkey)

    B, S = 2, 8
    input_ids = jax.random.randint(ikey, (B, S), 0, VOCAB)
    att_mask = jnp.array([[1, 1, 1, 1, 1, 1, 1, 1],
                          [1, 1, 1, 1, 1, 1, 0, 0]], jnp.float32)

    logits = xlnet_forward(params, input_ids, att_mask)
    logits = jax.block_until_ready(logits)

    assert logits.shape == (B, NUM_CLASSES)
    assert np.all(np.isfinite(np.asarray(logits)))
    ref = np.asarray(ref_forward(params, input_ids, att_mask))
    np.testing.assert_allclose(np.asarray(logits), ref, rtol=2e-2, atol=2e-2)
    print("KERNEL_OK")
</pallas_src>

<mosaic_0001>
module attributes {stable_mosaic.version = 11 : i64} {
  func.func @xlnet_fused_kernel(%arg0: memref<2x8x32xf32, #tpu.memory_space<vmem>>, %arg1: memref<16x32xbf16, #tpu.memory_space<vmem>>, %arg2: memref<2x8x8xf32, #tpu.memory_space<vmem>>, %arg3: memref<2x32x128xbf16, #tpu.memory_space<vmem>>, %arg4: memref<2x1x32xf32, #tpu.memory_space<vmem>>, %arg5: memref<2x1x32xf32, #tpu.memory_space<vmem>>, %arg6: memref<2x32x32xbf16, #tpu.memory_space<vmem>>, %arg7: memref<2x1x32xf32, #tpu.memory_space<vmem>>, %arg8: memref<2x1x32xf32, #tpu.memory_space<vmem>>, %arg9: memref<2x32x64xbf16, #tpu.memory_space<vmem>>, %arg10: memref<2x1x64xf32, #tpu.memory_space<vmem>>, %arg11: memref<2x64x32xbf16, #tpu.memory_space<vmem>>, %arg12: memref<2x1x32xf32, #tpu.memory_space<vmem>>, %arg13: memref<2x1x32xf32, #tpu.memory_space<vmem>>, %arg14: memref<2x1x32xf32, #tpu.memory_space<vmem>>, %arg15: memref<32x32xbf16, #tpu.memory_space<vmem>>, %arg16: memref<1x32xf32, #tpu.memory_space<vmem>>, %arg17: memref<32x3xbf16, #tpu.memory_space<vmem>>, %arg18: memref<1x3xf32, #tpu.memory_space<vmem>>, %arg19: memref<2x3xf32, #tpu.memory_space<vmem>>) attributes {dimension_semantics = [], scalar_prefetch = 0 : i64, scratch_operands = 0 : i64, tpu.core_type = #tpu.core_type<tc>} {
    %c0 = arith.constant 0 : index
    %c0_0 = arith.constant 0 : index
    %c0_1 = arith.constant 0 : index
    %0 = vector.load %arg0[%c0, %c0_0, %c0_1] : memref<2x8x32xf32, #tpu.memory_space<vmem>>, vector<2x8x32xf32>
    %1 = vector.shape_cast %0 : vector<2x8x32xf32> to vector<16x32xf32>
    %c0_2 = arith.constant 0 : index
    %c0_3 = arith.constant 0 : index
    %2 = vector.load %arg1[%c0_2, %c0_3] : memref<16x32xbf16, #tpu.memory_space<vmem>>, vector<16x32xbf16>
    %c0_4 = arith.constant 0 : index
    %c0_5 = arith.constant 0 : index
    %c0_6 = arith.constant 0 : index
    %3 = vector.load %arg2[%c0_4, %c0_5, %c0_6] : memref<2x8x8xf32, #tpu.memory_space<vmem>>, vector<2x8x8xf32>
    %4 = tpu.concatenate %3, %3, %3, %3 in 0 : vector<2x8x8xf32>, vector<2x8x8xf32>, vector<2x8x8xf32>, vector<2x8x8xf32> -> vector<8x8x8xf32>
    %5 = arith.truncf %1 : vector<16x32xf32> to vector<16x32xbf16>
    %6 = tpu.concatenate %5, %2 in 0 : vector<16x32xbf16>, vector<16x32xbf16> -> vector<32x32xbf16>
    %c0_7 = arith.constant 0 : index
    %c0_8 = arith.constant 0 : index
    %c0_9 = arith.constant 0 : index
    %7 = vector.load %arg3[%c0_7, %c0_8, %c0_9] : memref<2x32x128xbf16, #tpu.memory_space<vmem>>, vector<1x32x128xbf16>
    %8 = vector.shape_cast %7 : vector<1x32x128xbf16> to vector<32x128xbf16>
    %cst = arith.constant dense<0.000000e+00> : vector<32x128xf32>
    %9 = tpu.matmul %6, %8, %cst {dimension_numbers = #tpu.dot_dimension_numbers<[1], [0], [0], [1], [0, 0, 1, 1], [], []>} : vector<32x32xbf16>, vector<32x128xbf16>, vector<32x128xf32> -> vector<32x128xf32>
    %10 = vector.extract_strided_slice %9 {offsets = [0, 0], sizes = [16, 32], strides = [1, 1]} : vector<32x128xf32> to vector<16x32xf32>
    %11 = vector.extract_strided_slice %9 {offsets = [0, 32], sizes = [16, 32], strides = [1, 1]} : vector<32x128xf32> to vector<16x32xf32>
    %12 = vector.extract_strided_slice %9 {offsets = [0, 64], sizes = [16, 32], strides = [1, 1]} : vector<32x128xf32> to vector<16x32xf32>
    %13 = vector.extract_strided_slice %9 {offsets = [16, 96], sizes = [16, 32], strides = [1, 1]} : vector<32x128xf32> to vector<16x32xf32>
    %c0_10 = arith.constant 0 : index
    %c0_11 = arith.constant 0 : index
    %c0_12 = arith.constant 0 : index
    %14 = vector.load %arg4[%c0_10, %c0_11, %c0_12] : memref<2x1x32xf32, #tpu.memory_space<vmem>>, vector<1x1x32xf32>
    %15 = vector.shape_cast %14 : vector<1x1x32xf32> to vector<1x32xf32>
    %16 = vector.broadcast %15 : vector<1x32xf32> to vector<16x32xf32>
    %17 = arith.addf %10, %16 : vector<16x32xf32>
    %cst_13 = arith.constant 0.353553385 : f32
    %18 = vector.broadcast %cst_13 : f32 to vector<16x32xf32>
    %19 = arith.mulf %17, %18 : vector<16x32xf32>
    %20 = vector.shape_cast %19 : vector<16x32xf32> to vector<2x8x32xf32>
    %21 = arith.truncf %20 : vector<2x8x32xf32> to vector<2x8x32xbf16>
    %c0_14 = arith.constant 0 : index
    %c0_15 = arith.constant 0 : index
    %c0_16 = arith.constant 0 : index
    %22 = vector.load %arg5[%c0_14, %c0_15, %c0_16] : memref<2x1x32xf32, #tpu.memory_space<vmem>>, vector<1x1x32xf32>
    %23 = vector.shape_cast %22 : vector<1x1x32xf32> to vector<1x32xf32>
    %24 = vector.broadcast %23 : vector<1x32xf32> to vector<16x32xf32>
    %25 = arith.addf %10, %24 : vector<16x32xf32>
    %cst_17 = arith.constant 0.353553385 : f32
    %26 = vector.broadcast %cst_17 : f32 to vector<16x32xf32>
    %27 = arith.mulf %25, %26 : vector<16x32xf32>
    %28 = arith.truncf %27 : vector<16x32xf32> to vector<16x32xbf16>
    %29 = vector.shape_cast %11 : vector<16x32xf32> to vector<2x8x32xf32>
    %30 = arith.truncf %29 : vector<2x8x32xf32> to vector<2x8x32xbf16>
    %31 = vector.shape_cast %12 : vector<16x32xf32> to vector<2x8x32xf32>
    %32 = arith.truncf %31 : vector<2x8x32xf32> to vector<2x8x32xbf16>
    %33 = vector.extract_strided_slice %21 {offsets = [0, 0, 0], sizes = [2, 8, 8], strides = [1, 1, 1]} : vector<2x8x32xbf16> to vector<2x8x8xbf16>
    %34 = vector.extract_strided_slice %30 {offsets = [0, 0, 0], sizes = [2, 8, 8], strides = [1, 1, 1]} : vector<2x8x32xbf16> to vector<2x8x8xbf16>
    "tpu.trace_start"() <{level = 10 : i32, message = "bid,bjd->bij"}> : () -> ()
    %cst_18 = arith.constant dense<0.000000e+00> : vector<2x8x8xf32>
    %35 = tpu.matmul %33, %34, %cst_18 {dimension_numbers = #tpu.dot_dimension_numbers<[2], [2], [1], [1], [0, 0, 0, 1, 1, 1], [0], [0]>} : vector<2x8x8xbf16>, vector<2x8x8xbf16>, vector<2x8x8xf32> -> vector<2x8x8xf32>
    "tpu.trace_stop"() : () -> ()
    %36 = vector.extract_strided_slice %13 {offsets = [0, 0], sizes = [16, 8], strides = [1, 1]} : vector<16x32xf32> to vector<16x8xf32>
    %37 = tpu.transpose %36, [1, 0] : vector<16x8xf32> -> vector<8x16xf32>
    %38 = arith.truncf %37 : vector<8x16xf32> to vector<8x16xbf16>
    %39 = vector.extract_strided_slice %28 {offsets = [0, 0], sizes = [16, 8], strides = [1, 1]} : vector<16x32xbf16> to vector<16x8xbf16>
    %cst_19 = arith.constant dense<0.000000e+00> : vector<16x16xf32>
    %40 = tpu.matmul %39, %38, %cst_19 {dimension_numbers = #tpu.dot_dimension_numbers<[1], [0], [0], [1], [0, 0, 1, 1], [], []>} : vector<16x8xbf16>, vector<8x16xbf16>, vector<16x16xf32> -> vector<16x16xf32>
    %41 = vector.shape_cast %40 : vector<16x16xf32> to vector<2x8x16xf32>
    %42 = vector.extract_strided_slice %21 {offsets = [0, 0, 8], sizes = [2, 8, 8], strides = [1, 1, 1]} : vector<2x8x32xbf16> to vector<2x8x8xbf16>
    %43 = vector.extract_strided_slice %30 {offsets = [0, 0, 8], sizes = [2, 8, 8], strides = [1, 1, 1]} : vector<2x8x32xbf16> to vector<2x8x8xbf16>
    "tpu.trace_start"() <{level = 10 : i32, message = "bid,bjd->bij"}> : () -> ()
    %cst_20 = arith.constant dense<0.000000e+00> : vector<2x8x8xf32>
    %44 = tpu.matmul %42, %43, %cst_20 {dimension_numbers = #tpu.dot_dimension_numbers<[2], [2], [1], [1], [0, 0, 0, 1, 1, 1], [0], [0]>} : vector<2x8x8xbf16>, vector<2x8x8xbf16>, vector<2x8x8xf32> -> vector<2x8x8xf32>
    "tpu.trace_stop"() : () -> ()
    %45 = vector.extract_strided_slice %13 {offsets = [0, 8], sizes = [16, 8], strides = [1, 1]} : vector<16x32xf32> to vector<16x8xf32>
    %46 = tpu.transpose %45, [1, 0] : vector<16x8xf32> -> vector<8x16xf32>
    %47 = arith.truncf %46 : vector<8x16xf32> to vector<8x16xbf16>
    %48 = vector.extract_strided_slice %28 {offsets = [0, 8], sizes = [16, 8], strides = [1, 1]} : vector<16x32xbf16> to vector<16x8xbf16>
    %cst_21 = arith.constant dense<0.000000e+00> : vector<16x16xf32>
    %49 = tpu.matmul %48, %47, %cst_21 {dimension_numbers = #tpu.dot_dimension_numbers<[1], [0], [0], [1], [0, 0, 1, 1], [], []>} : vector<16x8xbf16>, vector<8x16xbf16>, vector<16x16xf32> -> vector<16x16xf32>
    %50 = vector.shape_cast %49 : vector<16x16xf32> to vector<2x8x16xf32>
    %51 = vector.extract_strided_slice %21 {offsets = [0, 0, 16], sizes = [2, 8, 8], strides = [1, 1, 1]} : vector<2x8x32xbf16> to vector<2x8x8xbf16>
    %52 = vector.extract_strided_slice %30 {offsets = [0, 0, 16], sizes = [2, 8, 8], strides = [1, 1, 1]} : vector<2x8x32xbf16> to vector<2x8x8xbf16>
    "tpu.trace_start"() <{level = 10 : i32, message = "bid,bjd->bij"}> : () -> ()
    %cst_22 = arith.constant dense<0.000000e+00> : vector<2x8x8xf32>
    %53 = tpu.matmul %51, %52, %cst_22 {dimension_numbers = #tpu.dot_dimension_numbers<[2], [2], [1], [1], [0, 0, 0, 1, 1, 1], [0], [0]>} : vector<2x8x8xbf16>, vector<2x8x8xbf16>, vector<2x8x8xf32> -> vector<2x8x8xf32>
    "tpu.trace_stop"() : () -> ()
    %54 = vector.extract_strided_slice %13 {offsets = [0, 16], sizes = [16, 8], strides = [1, 1]} : vector<16x32xf32> to vector<16x8xf32>
    %55 = tpu.transpose %54, [1, 0] : vector<16x8xf32> -> vector<8x16xf32>
    %56 = arith.truncf %55 : vector<8x16xf32> to vector<8x16xbf16>
    %57 = vector.extract_strided_slice %28 {offsets = [0, 16], sizes = [16, 8], strides = [1, 1]} : vector<16x32xbf16> to vector<16x8xbf16>
    %cst_23 = arith.constant dense<0.000000e+00> : vector<16x16xf32>
    %58 = tpu.matmul %57, %56, %cst_23 {dimension_numbers = #tpu.dot_dimension_numbers<[1], [0], [0], [1], [0, 0, 1, 1], [], []>} : vector<16x8xbf16>, vector<8x16xbf16>, vector<16x16xf32> -> vector<16x16xf32>
    %59 = vector.shape_cast %58 : vector<16x16xf32> to vector<2x8x16xf32>
    %60 = vector.extract_strided_slice %21 {offsets = [0, 0, 24], sizes = [2, 8, 8], strides = [1, 1, 1]} : vector<2x8x32xbf16> to vector<2x8x8xbf16>
    %61 = vector.extract_strided_slice %30 {offsets = [0, 0, 24], sizes = [2, 8, 8], strides = [1, 1, 1]} : vector<2x8x32xbf16> to vector<2x8x8xbf16>
    "tpu.trace_start"() <{level = 10 : i32, message = "bid,bjd->bij"}> : () -> ()
    %cst_24 = arith.constant dense<0.000000e+00> : vector<2x8x8xf32>
    %62 = tpu.matmul %60, %61, %cst_24 {dimension_numbers = #tpu.dot_dimension_numbers<[2], [2], [1], [1], [0, 0, 0, 1, 1, 1], [0], [0]>} : vector<2x8x8xbf16>, vector<2x8x8xbf16>, vector<2x8x8xf32> -> vector<2x8x8xf32>
    "tpu.trace_stop"() : () -> ()
    %63 = vector.extract_strided_slice %13 {offsets = [0, 24], sizes = [16, 8], strides = [1, 1]} : vector<16x32xf32> to vector<16x8xf32>
    %64 = tpu.transpose %63, [1, 0] : vector<16x8xf32> -> vector<8x16xf32>
    %65 = arith.truncf %64 : vector<8x16xf32> to vector<8x16xbf16>
    %66 = vector.extract_strided_slice %28 {offsets = [0, 24], sizes = [16, 8], strides = [1, 1]} : vector<16x32xbf16> to vector<16x8xbf16>
    %cst_25 = arith.constant dense<0.000000e+00> : vector<16x16xf32>
    %67 = tpu.matmul %66, %65, %cst_25 {dimension_numbers = #tpu.dot_dimension_numbers<[1], [0], [0], [1], [0, 0, 1, 1], [], []>} : vector<16x8xbf16>, vector<8x16xbf16>, vector<16x16xf32> -> vector<16x16xf32>
    %68 = vector.shape_cast %67 : vector<16x16xf32> to vector<2x8x16xf32>
    %69 = tpu.concatenate %35, %44, %53, %62 in 0 : vector<2x8x8xf32>, vector<2x8x8xf32>, vector<2x8x8xf32>, vector<2x8x8xf32> -> vector<8x8x8xf32>
    %70 = tpu.concatenate %41, %50, %59, %68 in 0 : vector<2x8x16xf32>, vector<2x8x16xf32>, vector<2x8x16xf32>, vector<2x8x16xf32> -> vector<8x8x16xf32>
    %71 = vector.extract_strided_slice %70 {offsets = [0, 0, 8], sizes = [8, 1, 8], strides = [1, 1, 1]} : vector<8x8x16xf32> to vector<8x1x8xf32>
    %72 = vector.extract_strided_slice %70 {offsets = [0, 1, 7], sizes = [8, 1, 8], strides = [1, 1, 1]} : vector<8x8x16xf32> to vector<8x1x8xf32>
    %73 = vector.extract_strided_slice %70 {offsets = [0, 2, 6], sizes = [8, 1, 8], strides = [1, 1, 1]} : vector<8x8x16xf32> to vector<8x1x8xf32>
    %74 = vector.extract_strided_slice %70 {offsets = [0, 3, 5], sizes = [8, 1, 8], strides = [1, 1, 1]} : vector<8x8x16xf32> to vector<8x1x8xf32>
    %75 = vector.extract_strided_slice %70 {offsets = [0, 4, 4], sizes = [8, 1, 8], strides = [1, 1, 1]} : vector<8x8x16xf32> to vector<8x1x8xf32>
    %76 = vector.extract_strided_slice %70 {offsets = [0, 5, 3], sizes = [8, 1, 8], strides = [1, 1, 1]} : vector<8x8x16xf32> to vector<8x1x8xf32>
    %77 = vector.extract_strided_slice %70 {offsets = [0, 6, 2], sizes = [8, 1, 8], strides = [1, 1, 1]} : vector<8x8x16xf32> to vector<8x1x8xf32>
    %78 = vector.extract_strided_slice %70 {offsets = [0, 7, 1], sizes = [8, 1, 8], strides = [1, 1, 1]} : vector<8x8x16xf32> to vector<8x1x8xf32>
    %79 = tpu.concatenate %71, %72, %73, %74, %75, %76, %77, %78 in 1 : vector<8x1x8xf32>, vector<8x1x8xf32>, vector<8x1x8xf32>, vector<8x1x8xf32>, vector<8x1x8xf32>, vector<8x1x8xf32>, vector<8x1x8xf32>, vector<8x1x8xf32> -> vector<8x8x8xf32>
    %80 = arith.addf %69, %79 : vector<8x8x8xf32>
    %81 = arith.addf %80, %4 : vector<8x8x8xf32>
    %cst_26 = arith.constant dense<0xFF800000> : vector<8x8xf32>
    %82 = vector.multi_reduction <maximumf>, %81, %cst_26 [2] : vector<8x8x8xf32> to vector<8x8xf32>
    %83 = vector.shape_cast %82 : vector<8x8xf32> to vector<8x8x1xf32>
    %84 = vector.broadcast %83 : vector<8x8x1xf32> to vector<8x8x8xf32>
    %85 = arith.subf %81, %84 : vector<8x8x8xf32>
    %86 = math.exp %85 : vector<8x8x8xf32>
    %cst_27 = arith.constant dense<0.000000e+00> : vector<8x8xf32>
    %87 = vector.multi_reduction <add>, %86, %cst_27 [2] : vector<8x8x8xf32> to vector<8x8xf32>
    %88 = vector.shape_cast %87 : vector<8x8xf32> to vector<8x8x1xf32>
    %89 = tpu.reciprocal %88 {approx = true} : vector<8x8x1xf32> -> vector<8x8x1xf32>
    %90 = vector.broadcast %89 : vector<8x8x1xf32> to vector<8x8x8xf32>
    %91 = arith.mulf %86, %90 : vector<8x8x8xf32>
    %92 = arith.truncf %91 : vector<8x8x8xf32> to vector<8x8x8xbf16>
    %93 = vector.extract_strided_slice %92 {offsets = [0, 0, 0], sizes = [2, 8, 8], strides = [1, 1, 1]} : vector<8x8x8xbf16> to vector<2x8x8xbf16>
    %94 = vector.extract_strided_slice %32 {offsets = [0, 0, 0], sizes = [2, 8, 8], strides = [1, 1, 1]} : vector<2x8x32xbf16> to vector<2x8x8xbf16>
    "tpu.trace_start"() <{level = 10 : i32, message = "bij,bjd->bid"}> : () -> ()
    %cst_28 = arith.constant dense<0.000000e+00> : vector<2x8x8xf32>
    %95 = tpu.matmul %93, %94, %cst_28 {dimension_numbers = #tpu.dot_dimension_numbers<[2], [1], [1], [2], [0, 0, 0, 1, 1, 2], [0], [0]>} : vector<2x8x8xbf16>, vector<2x8x8xbf16>, vector<2x8x8xf32> -> vector<2x8x8xf32>
    "tpu.trace_stop"() : () -> ()
    %96 = vector.extract_strided_slice %92 {offsets = [2, 0, 0], sizes = [2, 8, 8], strides = [1, 1, 1]} : vector<8x8x8xbf16> to vector<2x8x8xbf16>
    %97 = vector.extract_strided_slice %32 {offsets = [0, 0, 8], sizes = [2, 8, 8], strides = [1, 1, 1]} : vector<2x8x32xbf16> to vector<2x8x8xbf16>
    "tpu.trace_start"() <{level = 10 : i32, message = "bij,bjd->bid"}> : () -> ()
    %cst_29 = arith.constant dense<0.000000e+00> : vector<2x8x8xf32>
    %98 = tpu.matmul %96, %97, %cst_29 {dimension_numbers = #tpu.dot_dimension_numbers<[2], [1], [1], [2], [0, 0, 0, 1, 1, 2], [0], [0]>} : vector<2x8x8xbf16>, vector<2x8x8xbf16>, vector<2x8x8xf32> -> vector<2x8x8xf32>
    "tpu.trace_stop"() : () -> ()
    %99 = vector.extract_strided_slice %92 {offsets = [4, 0, 0], sizes = [2, 8, 8], strides = [1, 1, 1]} : vector<8x8x8xbf16> to vector<2x8x8xbf16>
    %100 = vector.extract_strided_slice %32 {offsets = [0, 0, 16], sizes = [2, 8, 8], strides = [1, 1, 1]} : vector<2x8x32xbf16> to vector<2x8x8xbf16>
    "tpu.trace_start"() <{level = 10 : i32, message = "bij,bjd->bid"}> : () -> ()
    %cst_30 = arith.constant dense<0.000000e+00> : vector<2x8x8xf32>
    %101 = tpu.matmul %99, %100, %cst_30 {dimension_numbers = #tpu.dot_dimension_numbers<[2], [1], [1], [2], [0, 0, 0, 1, 1, 2], [0], [0]>} : vector<2x8x8xbf16>, vector<2x8x8xbf16>, vector<2x8x8xf32> -> vector<2x8x8xf32>
    "tpu.trace_stop"() : () -> ()
    %102 = vector.extract_strided_slice %92 {offsets = [6, 0, 0], sizes = [2, 8, 8], strides = [1, 1, 1]} : vector<8x8x8xbf16> to vector<2x8x8xbf16>
    %103 = vector.extract_strided_slice %32 {offsets = [0, 0, 24], sizes = [2, 8, 8], strides = [1, 1, 1]} : vector<2x8x32xbf16> to vector<2x8x8xbf16>
    "tpu.trace_start"() <{level = 10 : i32, message = "bij,bjd->bid"}> : () -> ()
    %cst_31 = arith.constant dense<0.000000e+00> : vector<2x8x8xf32>
    %104 = tpu.matmul %102, %103, %cst_31 {dimension_numbers = #tpu.dot_dimension_numbers<[2], [1], [1], [2], [0, 0, 0, 1, 1, 2], [0], [0]>} : vector<2x8x8xbf16>, vector<2x8x8xbf16>, vector<2x8x8xf32> -> vector<2x8x8xf32>
    "tpu.trace_stop"() : () -> ()
    %105 = tpu.concatenate %95, %98, %101, %104 in 2 : vector<2x8x8xf32>, vector<2x8x8xf32>, vector<2x8x8xf32>, vector<2x8x8xf32> -> vector<2x8x32xf32>
    %106 = vector.shape_cast %105 : vector<2x8x32xf32> to vector<16x32xf32>
    %107 = arith.truncf %106 : vector<16x32xf32> to vector<16x32xbf16>
    %c0_32 = arith.constant 0 : index
    %c0_33 = arith.constant 0 : index
    %c0_34 = arith.constant 0 : index
    %108 = vector.load %arg6[%c0_32, %c0_33, %c0_34] : memref<2x32x32xbf16, #tpu.memory_space<vmem>>, vector<1x32x32xbf16>
    %109 = vector.shape_cast %108 : vector<1x32x32xbf16> to vector<32x32xbf16>
    %cst_35 = arith.constant dense<0.000000e+00> : vector<16x32xf32>
    %110 = tpu.matmul %107, %109, %cst_35 {dimension_numbers = #tpu.dot_dimension_numbers<[1], [0], [0], [1], [0, 0, 1, 1], [], []>} : vector<16x32xbf16>, vector<32x32xbf16>, vector<16x32xf32> -> vector<16x32xf32>
    %111 = arith.addf %110, %1 : vector<16x32xf32>
    %c0_36 = arith.constant 0 : index
    %c0_37 = arith.constant 0 : index
    %c0_38 = arith.constant 0 : index
    %112 = vector.load %arg7[%c0_36, %c0_37, %c0_38] : memref<2x1x32xf32, #tpu.memory_space<vmem>>, vector<1x1x32xf32>
    %113 = vector.shape_cast %112 : vector<1x1x32xf32> to vector<1x32xf32>
    %c0_39 = arith.constant 0 : index
    %c0_40 = arith.constant 0 : index
    %c0_41 = arith.constant 0 : index
    %114 = vector.load %arg8[%c0_39, %c0_40, %c0_41] : memref<2x1x32xf32, #tpu.memory_space<vmem>>, vector<1x1x32xf32>
    %115 = vector.shape_cast %114 : vector<1x1x32xf32> to vector<1x32xf32>
    %cst_42 = arith.constant dense<0.000000e+00> : vector<16xf32>
    %116 = vector.multi_reduction <add>, %111, %cst_42 [1] : vector<16x32xf32> to vector<16xf32>
    %117 = vector.shape_cast %116 : vector<16xf32> to vector<16x1xf32>
    %cst_43 = arith.constant 3.200000e+01 : f32
    %118 = vector.broadcast %cst_43 : f32 to vector<16x1xf32>
    %119 = arith.divf %117, %118 : vector<16x1xf32>
    %120 = vector.broadcast %119 : vector<16x1xf32> to vector<16x32xf32>
    %121 = arith.subf %111, %120 : vector<16x32xf32>
    %122 = arith.mulf %121, %121 : vector<16x32xf32>
    %cst_44 = arith.constant dense<0.000000e+00> : vector<16xf32>
    %123 = vector.multi_reduction <add>, %122, %cst_44 [1] : vector<16x32xf32> to vector<16xf32>
    %124 = vector.shape_cast %123 : vector<16xf32> to vector<16x1xf32>
    %cst_45 = arith.constant 3.200000e+01 : f32
    %125 = vector.broadcast %cst_45 : f32 to vector<16x1xf32>
    %126 = arith.divf %124, %125 : vector<16x1xf32>
    %127 = vector.broadcast %119 : vector<16x1xf32> to vector<16x32xf32>
    %128 = arith.subf %111, %127 : vector<16x32xf32>
    %cst_46 = arith.constant 9.99999996E-13 : f32
    %129 = vector.broadcast %cst_46 : f32 to vector<16x1xf32>
    %130 = arith.addf %126, %129 : vector<16x1xf32>
    %131 = math.rsqrt %130 : vector<16x1xf32>
    %132 = vector.broadcast %131 : vector<16x1xf32> to vector<16x32xf32>
    %133 = arith.mulf %128, %132 : vector<16x32xf32>
    %134 = vector.broadcast %113 : vector<1x32xf32> to vector<16x32xf32>
    %135 = arith.mulf %133, %134 : vector<16x32xf32>
    %136 = vector.broadcast %115 : vector<1x32xf32> to vector<16x32xf32>
    %137 = arith.addf %135, %136 : vector<16x32xf32>
    %138 = arith.truncf %137 : vector<16x32xf32> to vector<16x32xbf16>
    %c0_47 = arith.constant 0 : index
    %c0_48 = arith.constant 0 : index
    %c0_49 = arith.constant 0 : index
    %139 = vector.load %arg9[%c0_47, %c0_48, %c0_49] : memref<2x32x64xbf16, #tpu.memory_space<vmem>>, vector<1x32x64xbf16>
    %140 = vector.shape_cast %139 : vector<1x32x64xbf16> to vector<32x64xbf16>
    %cst_50 = arith.constant dense<0.000000e+00> : vector<16x64xf32>
    %141 = tpu.matmul %138, %140, %cst_50 {dimension_numbers = #tpu.dot_dimension_numbers<[1], [0], [0], [1], [0, 0, 1, 1], [], []>} : vector<16x32xbf16>, vector<32x64xbf16>, vector<16x64xf32> -> vector<16x64xf32>
    %c0_51 = arith.constant 0 : index
    %c0_52 = arith.constant 0 : index
    %c0_53 = arith.constant 0 : index
    %142 = vector.load %arg10[%c0_51, %c0_52, %c0_53] : memref<2x1x64xf32, #tpu.memory_space<vmem>>, vector<1x1x64xf32>
    %143 = vector.shape_cast %142 : vector<1x1x64xf32> to vector<1x64xf32>
    %144 = vector.broadcast %143 : vector<1x64xf32> to vector<16x64xf32>
    %145 = arith.addf %141, %144 : vector<16x64xf32>
    %146 = arith.mulf %145, %145 : vector<16x64xf32>
    %147 = arith.mulf %145, %146 : vector<16x64xf32>
    %cst_54 = arith.constant 4.471500e-02 : f32
    %148 = vector.broadcast %cst_54 : f32 to vector<16x64xf32>
    %149 = arith.mulf %148, %147 : vector<16x64xf32>
    %150 = arith.addf %145, %149 : vector<16x64xf32>
    %cst_55 = arith.constant 0.797884583 : f32
    %151 = vector.broadcast %cst_55 : f32 to vector<16x64xf32>
    %152 = arith.mulf %151, %150 : vector<16x64xf32>
    %153 = math.tanh %152 : vector<16x64xf32>
    %cst_56 = arith.constant 1.000000e+00 : f32
    %154 = vector.broadcast %cst_56 : f32 to vector<16x64xf32>
    %155 = arith.addf %154, %153 : vector<16x64xf32>
    %cst_57 = arith.constant 5.000000e-01 : f32
    %156 = vector.broadcast %cst_57 : f32 to vector<16x64xf32>
    %157 = arith.mulf %156, %155 : vector<16x64xf32>
    %158 = arith.mulf %145, %157 : vector<16x64xf32>
    %159 = arith.truncf %158 : vector<16x64xf32> to vector<16x64xbf16>
    %c0_58 = arith.constant 0 : index
    %c0_59 = arith.constant 0 : index
    %c0_60 = arith.constant 0 : index
    %160 = vector.load %arg11[%c0_58, %c0_59, %c0_60] : memref<2x64x32xbf16, #tpu.memory_space<vmem>>, vector<1x64x32xbf16>
    %161 = vector.shape_cast %160 : vector<1x64x32xbf16> to vector<64x32xbf16>
    %cst_61 = arith.constant dense<0.000000e+00> : vector<16x32xf32>
    %162 = tpu.matmul %159, %161, %cst_61 {dimension_numbers = #tpu.dot_dimension_numbers<[1], [0], [0], [1], [0, 0, 1, 1], [], []>} : vector<16x64xbf16>, vector<64x32xbf16>, vector<16x32xf32> -> vector<16x32xf32>
    %c0_62 = arith.constant 0 : index
    %c0_63 = arith.constant 0 : index
    %c0_64 = arith.constant 0 : index
    %163 = vector.load %arg12[%c0_62, %c0_63, %c0_64] : memref<2x1x32xf32, #tpu.memory_space<vmem>>, vector<1x1x32xf32>
    %164 = vector.shape_cast %163 : vector<1x1x32xf32> to vector<1x32xf32>
    %165 = vector.broadcast %164 : vector<1x32xf32> to vector<16x32xf32>
    %166 = arith.addf %162, %165 : vector<16x32xf32>
    %167 = arith.addf %166, %137 : vector<16x32xf32>
    %c0_65 = arith.constant 0 : index
    %c0_66 = arith.constant 0 : index
    %c0_67 = arith.constant 0 : index
    %168 = vector.load %arg13[%c0_65, %c0_66, %c0_67] : memref<2x1x32xf32, #tpu.memory_space<vmem>>, vector<1x1x32xf32>
    %169 = vector.shape_cast %168 : vector<1x1x32xf32> to vector<1x32xf32>
    %c0_68 = arith.constant 0 : index
    %c0_69 = arith.constant 0 : index
    %c0_70 = arith.constant 0 : index
    %170 = vector.load %arg14[%c0_68, %c0_69, %c0_70] : memref<2x1x32xf32, #tpu.memory_space<vmem>>, vector<1x1x32xf32>
    %171 = vector.shape_cast %170 : vector<1x1x32xf32> to vector<1x32xf32>
    %cst_71 = arith.constant dense<0.000000e+00> : vector<16xf32>
    %172 = vector.multi_reduction <add>, %167, %cst_71 [1] : vector<16x32xf32> to vector<16xf32>
    %173 = vector.shape_cast %172 : vector<16xf32> to vector<16x1xf32>
    %cst_72 = arith.constant 3.200000e+01 : f32
    %174 = vector.broadcast %cst_72 : f32 to vector<16x1xf32>
    %175 = arith.divf %173, %174 : vector<16x1xf32>
    %176 = vector.broadcast %175 : vector<16x1xf32> to vector<16x32xf32>
    %177 = arith.subf %167, %176 : vector<16x32xf32>
    %178 = arith.mulf %177, %177 : vector<16x32xf32>
    %cst_73 = arith.constant dense<0.000000e+00> : vector<16xf32>
    %179 = vector.multi_reduction <add>, %178, %cst_73 [1] : vector<16x32xf32> to vector<16xf32>
    %180 = vector.shape_cast %179 : vector<16xf32> to vector<16x1xf32>
    %cst_74 = arith.constant 3.200000e+01 : f32
    %181 = vector.broadcast %cst_74 : f32 to vector<16x1xf32>
    %182 = arith.divf %180, %181 : vector<16x1xf32>
    %183 = vector.broadcast %175 : vector<16x1xf32> to vector<16x32xf32>
    %184 = arith.subf %167, %183 : vector<16x32xf32>
    %cst_75 = arith.constant 9.99999996E-13 : f32
    %185 = vector.broadcast %cst_75 : f32 to vector<16x1xf32>
    %186 = arith.addf %182, %185 : vector<16x1xf32>
    %187 = math.rsqrt %186 : vector<16x1xf32>
    %188 = vector.broadcast %187 : vector<16x1xf32> to vector<16x32xf32>
    %189 = arith.mulf %184, %188 : vector<16x32xf32>
    %190 = vector.broadcast %169 : vector<1x32xf32> to vector<16x32xf32>
    %191 = arith.mulf %189, %190 : vector<16x32xf32>
    %192 = vector.broadcast %171 : vector<1x32xf32> to vector<16x32xf32>
    %193 = arith.addf %191, %192 : vector<16x32xf32>
    %194 = arith.truncf %193 : vector<16x32xf32> to vector<16x32xbf16>
    %195 = tpu.concatenate %194, %2 in 0 : vector<16x32xbf16>, vector<16x32xbf16> -> vector<32x32xbf16>
    %c1 = arith.constant 1 : index
    %c0_76 = arith.constant 0 : index
    %c0_77 = arith.constant 0 : index
    %196 = vector.load %arg3[%c1, %c0_76, %c0_77] : memref<2x32x128xbf16, #tpu.memory_space<vmem>>, vector<1x32x128xbf16>
    %197 = vector.shape_cast %196 : vector<1x32x128xbf16> to vector<32x128xbf16>
    %cst_78 = arith.constant dense<0.000000e+00> : vector<32x128xf32>
    %198 = tpu.matmul %195, %197, %cst_78 {dimension_numbers = #tpu.dot_dimension_numbers<[1], [0], [0], [1], [0, 0, 1, 1], [], []>} : vector<32x32xbf16>, vector<32x128xbf16>, vector<32x128xf32> -> vector<32x128xf32>
    %199 = vector.extract_strided_slice %198 {offsets = [0, 0], sizes = [16, 32], strides = [1, 1]} : vector<32x128xf32> to vector<16x32xf32>
    %200 = vector.extract_strided_slice %198 {offsets = [0, 32], sizes = [16, 32], strides = [1, 1]} : vector<32x128xf32> to vector<16x32xf32>
    %201 = vector.extract_strided_slice %198 {offsets = [0, 64], sizes = [16, 32], strides = [1, 1]} : vector<32x128xf32> to vector<16x32xf32>
    %202 = vector.extract_strided_slice %198 {offsets = [16, 96], sizes = [16, 32], strides = [1, 1]} : vector<32x128xf32> to vector<16x32xf32>
    %c1_79 = arith.constant 1 : index
    %c0_80 = arith.constant 0 : index
    %c0_81 = arith.constant 0 : index
    %203 = vector.load %arg4[%c1_79, %c0_80, %c0_81] : memref<2x1x32xf32, #tpu.memory_space<vmem>>, vector<1x1x32xf32>
    %204 = vector.shape_cast %203 : vector<1x1x32xf32> to vector<1x32xf32>
    %205 = vector.broadcast %204 : vector<1x32xf32> to vector<16x32xf32>
    %206 = arith.addf %199, %205 : vector<16x32xf32>
    %cst_82 = arith.constant 0.353553385 : f32
    %207 = vector.broadcast %cst_82 : f32 to vector<16x32xf32>
    %208 = arith.mulf %206, %207 : vector<16x32xf32>
    %209 = vector.shape_cast %208 : vector<16x32xf32> to vector<2x8x32xf32>
    %210 = arith.truncf %209 : vector<2x8x32xf32> to vector<2x8x32xbf16>
    %c1_83 = arith.constant 1 : index
    %c0_84 = arith.constant 0 : index
    %c0_85 = arith.constant 0 : index
    %211 = vector.load %arg5[%c1_83, %c0_84, %c0_85] : memref<2x1x32xf32, #tpu.memory_space<vmem>>, vector<1x1x32xf32>
    %212 = vector.shape_cast %211 : vector<1x1x32xf32> to vector<1x32xf32>
    %213 = vector.broadcast %212 : vector<1x32xf32> to vector<16x32xf32>
    %214 = arith.addf %199, %213 : vector<16x32xf32>
    %cst_86 = arith.constant 0.353553385 : f32
    %215 = vector.broadcast %cst_86 : f32 to vector<16x32xf32>
    %216 = arith.mulf %214, %215 : vector<16x32xf32>
    %217 = arith.truncf %216 : vector<16x32xf32> to vector<16x32xbf16>
    %218 = vector.shape_cast %200 : vector<16x32xf32> to vector<2x8x32xf32>
    %219 = arith.truncf %218 : vector<2x8x32xf32> to vector<2x8x32xbf16>
    %220 = vector.shape_cast %201 : vector<16x32xf32> to vector<2x8x32xf32>
    %221 = arith.truncf %220 : vector<2x8x32xf32> to vector<2x8x32xbf16>
    %222 = vector.extract_strided_slice %210 {offsets = [0, 0, 0], sizes = [2, 8, 8], strides = [1, 1, 1]} : vector<2x8x32xbf16> to vector<2x8x8xbf16>
    %223 = vector.extract_strided_slice %219 {offsets = [0, 0, 0], sizes = [2, 8, 8], strides = [1, 1, 1]} : vector<2x8x32xbf16> to vector<2x8x8xbf16>
    "tpu.trace_start"() <{level = 10 : i32, message = "bid,bjd->bij"}> : () -> ()
    %cst_87 = arith.constant dense<0.000000e+00> : vector<2x8x8xf32>
    %224 = tpu.matmul %222, %223, %cst_87 {dimension_numbers = #tpu.dot_dimension_numbers<[2], [2], [1], [1], [0, 0, 0, 1, 1, 1], [0], [0]>} : vector<2x8x8xbf16>, vector<2x8x8xbf16>, vector<2x8x8xf32> -> vector<2x8x8xf32>
    "tpu.trace_stop"() : () -> ()
    %225 = vector.extract_strided_slice %202 {offsets = [0, 0], sizes = [16, 8], strides = [1, 1]} : vector<16x32xf32> to vector<16x8xf32>
    %226 = tpu.transpose %225, [1, 0] : vector<16x8xf32> -> vector<8x16xf32>
    %227 = arith.truncf %226 : vector<8x16xf32> to vector<8x16xbf16>
    %228 = vector.extract_strided_slice %217 {offsets = [0, 0], sizes = [16, 8], strides = [1, 1]} : vector<16x32xbf16> to vector<16x8xbf16>
    %cst_88 = arith.constant dense<0.000000e+00> : vector<16x16xf32>
    %229 = tpu.matmul %228, %227, %cst_88 {dimension_numbers = #tpu.dot_dimension_numbers<[1], [0], [0], [1], [0, 0, 1, 1], [], []>} : vector<16x8xbf16>, vector<8x16xbf16>, vector<16x16xf32> -> vector<16x16xf32>
    %230 = vector.shape_cast %229 : vector<16x16xf32> to vector<2x8x16xf32>
    %231 = vector.extract_strided_slice %210 {offsets = [0, 0, 8], sizes = [2, 8, 8], strides = [1, 1, 1]} : vector<2x8x32xbf16> to vector<2x8x8xbf16>
    %232 = vector.extract_strided_slice %219 {offsets = [0, 0, 8], sizes = [2, 8, 8], strides = [1, 1, 1]} : vector<2x8x32xbf16> to vector<2x8x8xbf16>
    "tpu.trace_start"() <{level = 10 : i32, message = "bid,bjd->bij"}> : () -> ()
    %cst_89 = arith.constant dense<0.000000e+00> : vector<2x8x8xf32>
    %233 = tpu.matmul %231, %232, %cst_89 {dimension_numbers = #tpu.dot_dimension_numbers<[2], [2], [1], [1], [0, 0, 0, 1, 1, 1], [0], [0]>} : vector<2x8x8xbf16>, vector<2x8x8xbf16>, vector<2x8x8xf32> -> vector<2x8x8xf32>
    "tpu.trace_stop"() : () -> ()
    %234 = vector.extract_strided_slice %202 {offsets = [0, 8], sizes = [16, 8], strides = [1, 1]} : vector<16x32xf32> to vector<16x8xf32>
    %235 = tpu.transpose %234, [1, 0] : vector<16x8xf32> -> vector<8x16xf32>
    %236 = arith.truncf %235 : vector<8x16xf32> to vector<8x16xbf16>
    %237 = vector.extract_strided_slice %217 {offsets = [0, 8], sizes = [16, 8], strides = [1, 1]} : vector<16x32xbf16> to vector<16x8xbf16>
    %cst_90 = arith.constant dense<0.000000e+00> : vector<16x16xf32>
    %238 = tpu.matmul %237, %236, %cst_90 {dimension_numbers = #tpu.dot_dimension_numbers<[1], [0], [0], [1], [0, 0, 1, 1], [], []>} : vector<16x8xbf16>, vector<8x16xbf16>, vector<16x16xf32> -> vector<16x16xf32>
    %239 = vector.shape_cast %238 : vector<16x16xf32> to vector<2x8x16xf32>
    %240 = vector.extract_strided_slice %210 {offsets = [0, 0, 16], sizes = [2, 8, 8], strides = [1, 1, 1]} : vector<2x8x32xbf16> to vector<2x8x8xbf16>
    %241 = vector.extract_strided_slice %219 {offsets = [0, 0, 16], sizes = [2, 8, 8], strides = [1, 1, 1]} : vector<2x8x32xbf16> to vector<2x8x8xbf16>
    "tpu.trace_start"() <{level = 10 : i32, message = "bid,bjd->bij"}> : () -> ()
    %cst_91 = arith.constant dense<0.000000e+00> : vector<2x8x8xf32>
    %242 = tpu.matmul %240, %241, %cst_91 {dimension_numbers = #tpu.dot_dimension_numbers<[2], [2], [1], [1], [0, 0, 0, 1, 1, 1], [0], [0]>} : vector<2x8x8xbf16>, vector<2x8x8xbf16>, vector<2x8x8xf32> -> vector<2x8x8xf32>
    "tpu.trace_stop"() : () -> ()
    %243 = vector.extract_strided_slice %202 {offsets = [0, 16], sizes = [16, 8], strides = [1, 1]} : vector<16x32xf32> to vector<16x8xf32>
    %244 = tpu.transpose %243, [1, 0] : vector<16x8xf32> -> vector<8x16xf32>
    %245 = arith.truncf %244 : vector<8x16xf32> to vector<8x16xbf16>
    %246 = vector.extract_strided_slice %217 {offsets = [0, 16], sizes = [16, 8], strides = [1, 1]} : vector<16x32xbf16> to vector<16x8xbf16>
    %cst_92 = arith.constant dense<0.000000e+00> : vector<16x16xf32>
    %247 = tpu.matmul %246, %245, %cst_92 {dimension_numbers = #tpu.dot_dimension_numbers<[1], [0], [0], [1], [0, 0, 1, 1], [], []>} : vector<16x8xbf16>, vector<8x16xbf16>, vector<16x16xf32> -> vector<16x16xf32>
    %248 = vector.shape_cast %247 : vector<16x16xf32> to vector<2x8x16xf32>
    %249 = vector.extract_strided_slice %210 {offsets = [0, 0, 24], sizes = [2, 8, 8], strides = [1, 1, 1]} : vector<2x8x32xbf16> to vector<2x8x8xbf16>
    %250 = vector.extract_strided_slice %219 {offsets = [0, 0, 24], sizes = [2, 8, 8], strides = [1, 1, 1]} : vector<2x8x32xbf16> to vector<2x8x8xbf16>
    "tpu.trace_start"() <{level = 10 : i32, message = "bid,bjd->bij"}> : () -> ()
    %cst_93 = arith.constant dense<0.000000e+00> : vector<2x8x8xf32>
    %251 = tpu.matmul %249, %250, %cst_93 {dimension_numbers = #tpu.dot_dimension_numbers<[2], [2], [1], [1], [0, 0, 0, 1, 1, 1], [0], [0]>} : vector<2x8x8xbf16>, vector<2x8x8xbf16>, vector<2x8x8xf32> -> vector<2x8x8xf32>
    "tpu.trace_stop"() : () -> ()
    %252 = vector.extract_strided_slice %202 {offsets = [0, 24], sizes = [16, 8], strides = [1, 1]} : vector<16x32xf32> to vector<16x8xf32>
    %253 = tpu.transpose %252, [1, 0] : vector<16x8xf32> -> vector<8x16xf32>
    %254 = arith.truncf %253 : vector<8x16xf32> to vector<8x16xbf16>
    %255 = vector.extract_strided_slice %217 {offsets = [0, 24], sizes = [16, 8], strides = [1, 1]} : vector<16x32xbf16> to vector<16x8xbf16>
    %cst_94 = arith.constant dense<0.000000e+00> : vector<16x16xf32>
    %256 = tpu.matmul %255, %254, %cst_94 {dimension_numbers = #tpu.dot_dimension_numbers<[1], [0], [0], [1], [0, 0, 1, 1], [], []>} : vector<16x8xbf16>, vector<8x16xbf16>, vector<16x16xf32> -> vector<16x16xf32>
    %257 = vector.shape_cast %256 : vector<16x16xf32> to vector<2x8x16xf32>
    %258 = tpu.concatenate %224, %233, %242, %251 in 0 : vector<2x8x8xf32>, vector<2x8x8xf32>, vector<2x8x8xf32>, vector<2x8x8xf32> -> vector<8x8x8xf32>
    %259 = tpu.concatenate %230, %239, %248, %257 in 0 : vector<2x8x16xf32>, vector<2x8x16xf32>, vector<2x8x16xf32>, vector<2x8x16xf32> -> vector<8x8x16xf32>
    %260 = vector.extract_strided_slice %259 {offsets = [0, 0, 8], sizes = [8, 1, 8], strides = [1, 1, 1]} : vector<8x8x16xf32> to vector<8x1x8xf32>
    %261 = vector.extract_strided_slice %259 {offsets = [0, 1, 7], sizes = [8, 1, 8], strides = [1, 1, 1]} : vector<8x8x16xf32> to vector<8x1x8xf32>
    %262 = vector.extract_strided_slice %259 {offsets = [0, 2, 6], sizes = [8, 1, 8], strides = [1, 1, 1]} : vector<8x8x16xf32> to vector<8x1x8xf32>
    %263 = vector.extract_strided_slice %259 {offsets = [0, 3, 5], sizes = [8, 1, 8], strides = [1, 1, 1]} : vector<8x8x16xf32> to vector<8x1x8xf32>
    %264 = vector.extract_strided_slice %259 {offsets = [0, 4, 4], sizes = [8, 1, 8], strides = [1, 1, 1]} : vector<8x8x16xf32> to vector<8x1x8xf32>
    %265 = vector.extract_strided_slice %259 {offsets = [0, 5, 3], sizes = [8, 1, 8], strides = [1, 1, 1]} : vector<8x8x16xf32> to vector<8x1x8xf32>
    %266 = vector.extract_strided_slice %259 {offsets = [0, 6, 2], sizes = [8, 1, 8], strides = [1, 1, 1]} : vector<8x8x16xf32> to vector<8x1x8xf32>
    %267 = vector.extract_strided_slice %259 {offsets = [0, 7, 1], sizes = [8, 1, 8], strides = [1, 1, 1]} : vector<8x8x16xf32> to vector<8x1x8xf32>
    %268 = tpu.concatenate %260, %261, %262, %263, %264, %265, %266, %267 in 1 : vector<8x1x8xf32>, vector<8x1x8xf32>, vector<8x1x8xf32>, vector<8x1x8xf32>, vector<8x1x8xf32>, vector<8x1x8xf32>, vector<8x1x8xf32>, vector<8x1x8xf32> -> vector<8x8x8xf32>
    %269 = arith.addf %258, %268 : vector<8x8x8xf32>
    %270 = arith.addf %269, %4 : vector<8x8x8xf32>
    %cst_95 = arith.constant dense<0xFF800000> : vector<8x8xf32>
    %271 = vector.multi_reduction <maximumf>, %270, %cst_95 [2] : vector<8x8x8xf32> to vector<8x8xf32>
    %272 = vector.shape_cast %271 : vector<8x8xf32> to vector<8x8x1xf32>
    %273 = vector.broadcast %272 : vector<8x8x1xf32> to vector<8x8x8xf32>
    %274 = arith.subf %270, %273 : vector<8x8x8xf32>
    %275 = math.exp %274 : vector<8x8x8xf32>
    %cst_96 = arith.constant dense<0.000000e+00> : vector<8x8xf32>
    %276 = vector.multi_reduction <add>, %275, %cst_96 [2] : vector<8x8x8xf32> to vector<8x8xf32>
    %277 = vector.shape_cast %276 : vector<8x8xf32> to vector<8x8x1xf32>
    %278 = tpu.reciprocal %277 {approx = true} : vector<8x8x1xf32> -> vector<8x8x1xf32>
    %279 = vector.broadcast %278 : vector<8x8x1xf32> to vector<8x8x8xf32>
    %280 = arith.mulf %275, %279 : vector<8x8x8xf32>
    %281 = arith.truncf %280 : vector<8x8x8xf32> to vector<8x8x8xbf16>
    %282 = vector.extract_strided_slice %281 {offsets = [0, 0, 0], sizes = [2, 8, 8], strides = [1, 1, 1]} : vector<8x8x8xbf16> to vector<2x8x8xbf16>
    %283 = vector.extract_strided_slice %221 {offsets = [0, 0, 0], sizes = [2, 8, 8], strides = [1, 1, 1]} : vector<2x8x32xbf16> to vector<2x8x8xbf16>
    "tpu.trace_start"() <{level = 10 : i32, message = "bij,bjd->bid"}> : () -> ()
    %cst_97 = arith.constant dense<0.000000e+00> : vector<2x8x8xf32>
    %284 = tpu.matmul %282, %283, %cst_97 {dimension_numbers = #tpu.dot_dimension_numbers<[2], [1], [1], [2], [0, 0, 0, 1, 1, 2], [0], [0]>} : vector<2x8x8xbf16>, vector<2x8x8xbf16>, vector<2x8x8xf32> -> vector<2x8x8xf32>
    "tpu.trace_stop"() : () -> ()
    %285 = vector.extract_strided_slice %281 {offsets = [2, 0, 0], sizes = [2, 8, 8], strides = [1, 1, 1]} : vector<8x8x8xbf16> to vector<2x8x8xbf16>
    %286 = vector.extract_strided_slice %221 {offsets = [0, 0, 8], sizes = [2, 8, 8], strides = [1, 1, 1]} : vector<2x8x32xbf16> to vector<2x8x8xbf16>
    "tpu.trace_start"() <{level = 10 : i32, message = "bij,bjd->bid"}> : () -> ()
    %cst_98 = arith.constant dense<0.000000e+00> : vector<2x8x8xf32>
    %287 = tpu.matmul %285, %286, %cst_98 {dimension_numbers = #tpu.dot_dimension_numbers<[2], [1], [1], [2], [0, 0, 0, 1, 1, 2], [0], [0]>} : vector<2x8x8xbf16>, vector<2x8x8xbf16>, vector<2x8x8xf32> -> vector<2x8x8xf32>
    "tpu.trace_stop"() : () -> ()
    %288 = vector.extract_strided_slice %281 {offsets = [4, 0, 0], sizes = [2, 8, 8], strides = [1, 1, 1]} : vector<8x8x8xbf16> to vector<2x8x8xbf16>
    %289 = vector.extract_strided_slice %221 {offsets = [0, 0, 16], sizes = [2, 8, 8], strides = [1, 1, 1]} : vector<2x8x32xbf16> to vector<2x8x8xbf16>
    "tpu.trace_start"() <{level = 10 : i32, message = "bij,bjd->bid"}> : () -> ()
    %cst_99 = arith.constant dense<0.000000e+00> : vector<2x8x8xf32>
    %290 = tpu.matmul %288, %289, %cst_99 {dimension_numbers = #tpu.dot_dimension_numbers<[2], [1], [1], [2], [0, 0, 0, 1, 1, 2], [0], [0]>} : vector<2x8x8xbf16>, vector<2x8x8xbf16>, vector<2x8x8xf32> -> vector<2x8x8xf32>
    "tpu.trace_stop"() : () -> ()
    %291 = vector.extract_strided_slice %281 {offsets = [6, 0, 0], sizes = [2, 8, 8], strides = [1, 1, 1]} : vector<8x8x8xbf16> to vector<2x8x8xbf16>
    %292 = vector.extract_strided_slice %221 {offsets = [0, 0, 24], sizes = [2, 8, 8], strides = [1, 1, 1]} : vector<2x8x32xbf16> to vector<2x8x8xbf16>
    "tpu.trace_start"() <{level = 10 : i32, message = "bij,bjd->bid"}> : () -> ()
    %cst_100 = arith.constant dense<0.000000e+00> : vector<2x8x8xf32>
    %293 = tpu.matmul %291, %292, %cst_100 {dimension_numbers = #tpu.dot_dimension_numbers<[2], [1], [1], [2], [0, 0, 0, 1, 1, 2], [0], [0]>} : vector<2x8x8xbf16>, vector<2x8x8xbf16>, vector<2x8x8xf32> -> vector<2x8x8xf32>
    "tpu.trace_stop"() : () -> ()
    %294 = tpu.concatenate %284, %287, %290, %293 in 2 : vector<2x8x8xf32>, vector<2x8x8xf32>, vector<2x8x8xf32>, vector<2x8x8xf32> -> vector<2x8x32xf32>
    %295 = vector.shape_cast %294 : vector<2x8x32xf32> to vector<16x32xf32>
    %296 = arith.truncf %295 : vector<16x32xf32> to vector<16x32xbf16>
    %c1_101 = arith.constant 1 : index
    %c0_102 = arith.constant 0 : index
    %c0_103 = arith.constant 0 : index
    %297 = vector.load %arg6[%c1_101, %c0_102, %c0_103] : memref<2x32x32xbf16, #tpu.memory_space<vmem>>, vector<1x32x32xbf16>
    %298 = vector.shape_cast %297 : vector<1x32x32xbf16> to vector<32x32xbf16>
    %cst_104 = arith.constant dense<0.000000e+00> : vector<16x32xf32>
    %299 = tpu.matmul %296, %298, %cst_104 {dimension_numbers = #tpu.dot_dimension_numbers<[1], [0], [0], [1], [0, 0, 1, 1], [], []>} : vector<16x32xbf16>, vector<32x32xbf16>, vector<16x32xf32> -> vector<16x32xf32>
    %300 = arith.addf %299, %193 : vector<16x32xf32>
    %c1_105 = arith.constant 1 : index
    %c0_106 = arith.constant 0 : index
    %c0_107 = arith.constant 0 : index
    %301 = vector.load %arg7[%c1_105, %c0_106, %c0_107] : memref<2x1x32xf32, #tpu.memory_space<vmem>>, vector<1x1x32xf32>
    %302 = vector.shape_cast %301 : vector<1x1x32xf32> to vector<1x32xf32>
    %c1_108 = arith.constant 1 : index
    %c0_109 = arith.constant 0 : index
    %c0_110 = arith.constant 0 : index
    %303 = vector.load %arg8[%c1_108, %c0_109, %c0_110] : memref<2x1x32xf32, #tpu.memory_space<vmem>>, vector<1x1x32xf32>
    %304 = vector.shape_cast %303 : vector<1x1x32xf32> to vector<1x32xf32>
    %cst_111 = arith.constant dense<0.000000e+00> : vector<16xf32>
    %305 = vector.multi_reduction <add>, %300, %cst_111 [1] : vector<16x32xf32> to vector<16xf32>
    %306 = vector.shape_cast %305 : vector<16xf32> to vector<16x1xf32>
    %cst_112 = arith.constant 3.200000e+01 : f32
    %307 = vector.broadcast %cst_112 : f32 to vector<16x1xf32>
    %308 = arith.divf %306, %307 : vector<16x1xf32>
    %309 = vector.broadcast %308 : vector<16x1xf32> to vector<16x32xf32>
    %310 = arith.subf %300, %309 : vector<16x32xf32>
    %311 = arith.mulf %310, %310 : vector<16x32xf32>
    %cst_113 = arith.constant dense<0.000000e+00> : vector<16xf32>
    %312 = vector.multi_reduction <add>, %311, %cst_113 [1] : vector<16x32xf32> to vector<16xf32>
    %313 = vector.shape_cast %312 : vector<16xf32> to vector<16x1xf32>
    %cst_114 = arith.constant 3.200000e+01 : f32
    %314 = vector.broadcast %cst_114 : f32 to vector<16x1xf32>
    %315 = arith.divf %313, %314 : vector<16x1xf32>
    %316 = vector.broadcast %308 : vector<16x1xf32> to vector<16x32xf32>
    %317 = arith.subf %300, %316 : vector<16x32xf32>
    %cst_115 = arith.constant 9.99999996E-13 : f32
    %318 = vector.broadcast %cst_115 : f32 to vector<16x1xf32>
    %319 = arith.addf %315, %318 : vector<16x1xf32>
    %320 = math.rsqrt %319 : vector<16x1xf32>
    %321 = vector.broadcast %320 : vector<16x1xf32> to vector<16x32xf32>
    %322 = arith.mulf %317, %321 : vector<16x32xf32>
    %323 = vector.broadcast %302 : vector<1x32xf32> to vector<16x32xf32>
    %324 = arith.mulf %322, %323 : vector<16x32xf32>
    %325 = vector.broadcast %304 : vector<1x32xf32> to vector<16x32xf32>
    %326 = arith.addf %324, %325 : vector<16x32xf32>
    %327 = arith.truncf %326 : vector<16x32xf32> to vector<16x32xbf16>
    %c1_116 = arith.constant 1 : index
    %c0_117 = arith.constant 0 : index
    %c0_118 = arith.constant 0 : index
    %328 = vector.load %arg9[%c1_116, %c0_117, %c0_118] : memref<2x32x64xbf16, #tpu.memory_space<vmem>>, vector<1x32x64xbf16>
    %329 = vector.shape_cast %328 : vector<1x32x64xbf16> to vector<32x64xbf16>
    %cst_119 = arith.constant dense<0.000000e+00> : vector<16x64xf32>
    %330 = tpu.matmul %327, %329, %cst_119 {dimension_numbers = #tpu.dot_dimension_numbers<[1], [0], [0], [1], [0, 0, 1, 1], [], []>} : vector<16x32xbf16>, vector<32x64xbf16>, vector<16x64xf32> -> vector<16x64xf32>
    %c1_120 = arith.constant 1 : index
    %c0_121 = arith.constant 0 : index
    %c0_122 = arith.constant 0 : index
    %331 = vector.load %arg10[%c1_120, %c0_121, %c0_122] : memref<2x1x64xf32, #tpu.memory_space<vmem>>, vector<1x1x64xf32>
    %332 = vector.shape_cast %331 : vector<1x1x64xf32> to vector<1x64xf32>
    %333 = vector.broadcast %332 : vector<1x64xf32> to vector<16x64xf32>
    %334 = arith.addf %330, %333 : vector<16x64xf32>
    %335 = arith.mulf %334, %334 : vector<16x64xf32>
    %336 = arith.mulf %334, %335 : vector<16x64xf32>
    %cst_123 = arith.constant 4.471500e-02 : f32
    %337 = vector.broadcast %cst_123 : f32 to vector<16x64xf32>
    %338 = arith.mulf %337, %336 : vector<16x64xf32>
    %339 = arith.addf %334, %338 : vector<16x64xf32>
    %cst_124 = arith.constant 0.797884583 : f32
    %340 = vector.broadcast %cst_124 : f32 to vector<16x64xf32>
    %341 = arith.mulf %340, %339 : vector<16x64xf32>
    %342 = math.tanh %341 : vector<16x64xf32>
    %cst_125 = arith.constant 1.000000e+00 : f32
    %343 = vector.broadcast %cst_125 : f32 to vector<16x64xf32>
    %344 = arith.addf %343, %342 : vector<16x64xf32>
    %cst_126 = arith.constant 5.000000e-01 : f32
    %345 = vector.broadcast %cst_126 : f32 to vector<16x64xf32>
    %346 = arith.mulf %345, %344 : vector<16x64xf32>
    %347 = arith.mulf %334, %346 : vector<16x64xf32>
    %348 = arith.truncf %347 : vector<16x64xf32> to vector<16x64xbf16>
    %c1_127 = arith.constant 1 : index
    %c0_128 = arith.constant 0 : index
    %c0_129 = arith.constant 0 : index
    %349 = vector.load %arg11[%c1_127, %c0_128, %c0_129] : memref<2x64x32xbf16, #tpu.memory_space<vmem>>, vector<1x64x32xbf16>
    %350 = vector.shape_cast %349 : vector<1x64x32xbf16> to vector<64x32xbf16>
    %cst_130 = arith.constant dense<0.000000e+00> : vector<16x32xf32>
    %351 = tpu.matmul %348, %350, %cst_130 {dimension_numbers = #tpu.dot_dimension_numbers<[1], [0], [0], [1], [0, 0, 1, 1], [], []>} : vector<16x64xbf16>, vector<64x32xbf16>, vector<16x32xf32> -> vector<16x32xf32>
    %c1_131 = arith.constant 1 : index
    %c0_132 = arith.constant 0 : index
    %c0_133 = arith.constant 0 : index
    %352 = vector.load %arg12[%c1_131, %c0_132, %c0_133] : memref<2x1x32xf32, #tpu.memory_space<vmem>>, vector<1x1x32xf32>
    %353 = vector.shape_cast %352 : vector<1x1x32xf32> to vector<1x32xf32>
    %354 = vector.broadcast %353 : vector<1x32xf32> to vector<16x32xf32>
    %355 = arith.addf %351, %354 : vector<16x32xf32>
    %356 = arith.addf %355, %326 : vector<16x32xf32>
    %c1_134 = arith.constant 1 : index
    %c0_135 = arith.constant 0 : index
    %c0_136 = arith.constant 0 : index
    %357 = vector.load %arg13[%c1_134, %c0_135, %c0_136] : memref<2x1x32xf32, #tpu.memory_space<vmem>>, vector<1x1x32xf32>
    %358 = vector.shape_cast %357 : vector<1x1x32xf32> to vector<1x32xf32>
    %c1_137 = arith.constant 1 : index
    %c0_138 = arith.constant 0 : index
    %c0_139 = arith.constant 0 : index
    %359 = vector.load %arg14[%c1_137, %c0_138, %c0_139] : memref<2x1x32xf32, #tpu.memory_space<vmem>>, vector<1x1x32xf32>
    %360 = vector.shape_cast %359 : vector<1x1x32xf32> to vector<1x32xf32>
    %cst_140 = arith.constant dense<0.000000e+00> : vector<16xf32>
    %361 = vector.multi_reduction <add>, %356, %cst_140 [1] : vector<16x32xf32> to vector<16xf32>
    %362 = vector.shape_cast %361 : vector<16xf32> to vector<16x1xf32>
    %cst_141 = arith.constant 3.200000e+01 : f32
    %363 = vector.broadcast %cst_141 : f32 to vector<16x1xf32>
    %364 = arith.divf %362, %363 : vector<16x1xf32>
    %365 = vector.broadcast %364 : vector<16x1xf32> to vector<16x32xf32>
    %366 = arith.subf %356, %365 : vector<16x32xf32>
    %367 = arith.mulf %366, %366 : vector<16x32xf32>
    %cst_142 = arith.constant dense<0.000000e+00> : vector<16xf32>
    %368 = vector.multi_reduction <add>, %367, %cst_142 [1] : vector<16x32xf32> to vector<16xf32>
    %369 = vector.shape_cast %368 : vector<16xf32> to vector<16x1xf32>
    %cst_143 = arith.constant 3.200000e+01 : f32
    %370 = vector.broadcast %cst_143 : f32 to vector<16x1xf32>
    %371 = arith.divf %369, %370 : vector<16x1xf32>
    %372 = vector.broadcast %364 : vector<16x1xf32> to vector<16x32xf32>
    %373 = arith.subf %356, %372 : vector<16x32xf32>
    %cst_144 = arith.constant 9.99999996E-13 : f32
    %374 = vector.broadcast %cst_144 : f32 to vector<16x1xf32>
    %375 = arith.addf %371, %374 : vector<16x1xf32>
    %376 = math.rsqrt %375 : vector<16x1xf32>
    %377 = vector.broadcast %376 : vector<16x1xf32> to vector<16x32xf32>
    %378 = arith.mulf %373, %377 : vector<16x32xf32>
    %379 = vector.broadcast %358 : vector<1x32xf32> to vector<16x32xf32>
    %380 = arith.mulf %378, %379 : vector<16x32xf32>
    %381 = vector.broadcast %360 : vector<1x32xf32> to vector<16x32xf32>
    %382 = arith.addf %380, %381 : vector<16x32xf32>
    %383 = vector.extract_strided_slice %382 {offsets = [7, 0], sizes = [1, 32], strides = [1, 1]} : vector<16x32xf32> to vector<1x32xf32>
    %384 = vector.extract_strided_slice %382 {offsets = [15, 0], sizes = [1, 32], strides = [1, 1]} : vector<16x32xf32> to vector<1x32xf32>
    %385 = tpu.concatenate %383, %384 in 0 : vector<1x32xf32>, vector<1x32xf32> -> vector<2x32xf32>
    %386 = arith.truncf %385 : vector<2x32xf32> to vector<2x32xbf16>
    %c0_145 = arith.constant 0 : index
    %c0_146 = arith.constant 0 : index
    %387 = vector.load %arg15[%c0_145, %c0_146] : memref<32x32xbf16, #tpu.memory_space<vmem>>, vector<32x32xbf16>
    %cst_147 = arith.constant dense<0.000000e+00> : vector<2x32xf32>
    %388 = tpu.matmul %386, %387, %cst_147 {dimension_numbers = #tpu.dot_dimension_numbers<[1], [0], [0], [1], [0, 0, 1, 1], [], []>} : vector<2x32xbf16>, vector<32x32xbf16>, vector<2x32xf32> -> vector<2x32xf32>
    %c0_148 = arith.constant 0 : index
    %c0_149 = arith.constant 0 : index
    %389 = vector.load %arg16[%c0_148, %c0_149] : memref<1x32xf32, #tpu.memory_space<vmem>>, vector<1x32xf32>
    %390 = vector.broadcast %389 : vector<1x32xf32> to vector<2x32xf32>
    %391 = arith.addf %388, %390 : vector<2x32xf32>
    %392 = math.tanh %391 : vector<2x32xf32>
    %393 = arith.truncf %392 : vector<2x32xf32> to vector<2x32xbf16>
    %c0_150 = arith.constant 0 : index
    %c0_151 = arith.constant 0 : index
    %394 = vector.load %arg17[%c0_150, %c0_151] : memref<32x3xbf16, #tpu.memory_space<vmem>>, vector<32x3xbf16>
    %cst_152 = arith.constant dense<0.000000e+00> : vector<2x3xf32>
    %395 = tpu.matmul %393, %394, %cst_152 {dimension_numbers = #tpu.dot_dimension_numbers<[1], [0], [0], [1], [0, 0, 1, 1], [], []>} : vector<2x32xbf16>, vector<32x3xbf16>, vector<2x3xf32> -> vector<2x3xf32>
    %c0_153 = arith.constant 0 : index
    %c0_154 = arith.constant 0 : index
    %396 = vector.load %arg18[%c0_153, %c0_154] : memref<1x3xf32, #tpu.memory_space<vmem>>, vector<1x3xf32>
    %397 = vector.broadcast %396 : vector<1x3xf32> to vector<2x3xf32>
    %398 = arith.addf %395, %397 : vector<2x3xf32>
    %c0_155 = arith.constant 0 : index
    %c0_156 = arith.constant 0 : index
    %399 = vector.load %arg19[%c0_155, %c0_156] : memref<2x3xf32, #tpu.memory_space<vmem>>, vector<2x3xf32>
    tpu.vector_store %arg19[%c0_155, %c0_156], %398 {strides = array<i32>} : memref<2x3xf32, #tpu.memory_space<vmem>>, vector<2x3xf32>,
    return
  }
}

</mosaic_0001>

<llo_original>
// kernel: tpu_custom_call.1
$region0: #{tpu_custom_call.1}
  #allocation0 [shape = 'u32[]', space=smem, size = 0x4, offset = 0x4, fixed_abs, tag = 'smem constant byte address 0x4 - core index']
  #allocation1 [shape = 'u32[144,128]{1,0:T(1,128)}', space=vmem, size = 0x12000, scoped, tag = 'internal scratch']
  %s0 = inlined_call_operand.hbm [shape: f32[2,8,32], index: 0, kind: input, shape index: {}]
  %s1 = inlined_call_operand.hbm [shape: bf16[16,32], index: 1, kind: input, shape index: {}]
  %s2 = inlined_call_operand.hbm [shape: f32[2,8,8], index: 2, kind: input, shape index: {}]
  %s3 = inlined_call_operand.vmem [shape: bf16[2,32,128], index: 3, kind: input, shape index: {}]
  %s4 = inlined_call_operand.vmem [shape: f32[2,1,32], index: 4, kind: input, shape index: {}]
  %s5 = inlined_call_operand.vmem [shape: f32[2,1,32], index: 5, kind: input, shape index: {}]
  %s6 = inlined_call_operand.vmem [shape: bf16[2,32,32], index: 6, kind: input, shape index: {}]
  %s7 = inlined_call_operand.vmem [shape: f32[2,1,32], index: 7, kind: input, shape index: {}]
  %s8 = inlined_call_operand.hbm [shape: f32[2,1,32], index: 8, kind: input, shape index: {}]
  %s9 = inlined_call_operand.vmem [shape: bf16[2,32,64], index: 9, kind: input, shape index: {}]
  %s10 = inlined_call_operand.hbm [shape: f32[2,1,64], index: 10, kind: input, shape index: {}]
  %s11 = inlined_call_operand.vmem [shape: bf16[2,64,32], index: 11, kind: input, shape index: {}]
  %s12 = inlined_call_operand.hbm [shape: f32[2,1,32], index: 12, kind: input, shape index: {}]
  %s13 = inlined_call_operand.vmem [shape: f32[2,1,32], index: 13, kind: input, shape index: {}]
  %s14 = inlined_call_operand.vmem [shape: f32[2,1,32], index: 14, kind: input, shape index: {}]
  %s15 = inlined_call_operand.hbm [shape: bf16[32,32], index: 15, kind: input, shape index: {}]
  %s16 = inlined_call_operand.vmem [shape: f32[1,32], index: 16, kind: input, shape index: {}]
  %s17 = inlined_call_operand.vmem [shape: bf16[32,3], index: 17, kind: input, shape index: {}]
  %s18 = inlined_call_operand.vmem [shape: f32[1,3], index: 18, kind: input, shape index: {}]
  %s19 = inlined_call_operand.hbm [shape: f32[2,3], index: 19, kind: output, shape index: {}]
  %s20 = sld [smem:[#allocation0]]
  $region114: #{tpu_custom_call.1} parent=0
    _
  %s22 = ssub.s32 1, %s20
  %s23 = scalar_select 0, %s22, %s20
  $region1: #{tpu_custom_call.1} parent=0
    #allocation2 [shape = 'u8[8192]{0}', space=vmem, size = 0x2000, scoped, tag = 'input window, operand 0, single buffered']
    #allocation3 [shape = 's32[1]{0}', space=sflag, size = 0x4, scoped, tag = 'scoped memory for tpu_custom_call.1']
    #allocation4 [shape = 's32[1]{0}', space=sflag, size = 0x4, scoped, tag = 'scoped memory for tpu_custom_call.1']
    #allocation5 [shape = 'u8[4096]{0}', space=vmem, size = 0x1000, scoped, tag = 'input window, operand 1, single buffered']
    #allocation6 [shape = 's32[1]{0}', space=sflag, size = 0x4, scoped, tag = 'scoped memory for tpu_custom_call.1']
    #allocation7 [shape = 'u8[8192]{0}', space=vmem, size = 0x2000, scoped, tag = 'input window, operand 2, single buffered']
    #allocation8 [shape = 'u8[1024]{0}', space=vmem, size = 0x400, scoped, tag = 'input window, operand 8, single buffered']
    #allocation9 [shape = 's32[1]{0}', space=sflag, size = 0x4, scoped, tag = 'scoped memory for tpu_custom_call.1']
    #allocation10 [shape = 'u8[1024]{0}', space=vmem, size = 0x400, scoped, tag = 'input window, operand 10, single buffered']
    #allocation11 [shape = 'u8[1024]{0}', space=vmem, size = 0x400, scoped, tag = 'input window, operand 12, single buffered']
    #allocation12 [shape = 's32[1]{0}', space=sflag, size = 0x4, scoped, tag = 'scoped memory for tpu_custom_call.1']
    #allocation13 [shape = 'u8[8192]{0}', space=vmem, size = 0x2000, scoped, tag = 'input window, operand 15, single buffered']
    #allocation14 [shape = 'u8[1024]{0}', space=vmem, size = 0x400, scoped, tag = 'output window, operand 0, single buffered']
    %24 = vsyncpa [#allocation3], 0
    %25 = vsyncpa [#allocation6], 0
    %26 = vsyncpa [#allocation9], 0
    %27 = vsyncpa [#allocation12], 0
    %28 = vsyncpa [#allocation4], 0
    // Predicated region
    $region2: #{tpu_custom_call.1} parent=1 // pred_check
      _
    $region3: #{tpu_custom_call.1} parent=1 // pred_check_branch
      %30 = sbr.rel (0) target = $region5
    $region4: #{tpu_custom_call.1} parent=1 // pred_region
      %s32 = ssub.s32 256, 256
      %33 = vsyncadd [#allocation3], %s32
      %s34 = sshll.u32 [#allocation2], 4
      %s35 = int_to_ptr.vmem [resolvable:$true] %s34
      %40 = dma.hbm_to_vmem [thread:$0]  %s0, 256, %s35, [#allocation3], 128, 128, 8
    $region5: #{tpu_custom_call.1} parent=1 // pred_fallthru
      _
    // Predicated region
    $region6: #{tpu_custom_call.1} parent=1 // pred_check
      _
    $region7: #{tpu_custom_call.1} parent=1 // pred_check_branch
      %42 = sbr.rel (0) target = $region9
    $region8: #{tpu_custom_call.1} parent=1 // pred_region
      %s44 = ssub.s32 128, 128
      %45 = vsyncadd [#allocation6], %s44
      %s46 = sshll.u32 [#allocation5], 4
      %s47 = int_to_ptr.vmem [resolvable:$true] %s46
      %52 = dma.hbm_to_vmem [thread:$0]  %s1, 128, %s47, [#allocation6], 64, 64, 4
    $region9: #{tpu_custom_call.1} parent=1 // pred_fallthru
      _
    // Predicated region
    $region10: #{tpu_custom_call.1} parent=1 // pred_check
      _
    $region11: #{tpu_custom_call.1} parent=1 // pred_check_branch
      %54 = sbr.rel (0) target = $region13
    $region12: #{tpu_custom_call.1} parent=1 // pred_region
      %s56 = ssub.s32 256, 256
      %57 = vsyncadd [#allocation6], %s56
      %s58 = sshll.u32 [#allocation7], 4
      %s59 = int_to_ptr.vmem [resolvable:$true] %s58
      %64 = dma.hbm_to_vmem [thread:$0]  %s2, 256, %s59, [#allocation6], 128, 128, 8
    $region13: #{tpu_custom_call.1} parent=1 // pred_fallthru
      _
    // Predicated region
    $region14: #{tpu_custom_call.1} parent=1 // pred_check
      _
    $region15: #{tpu_custom_call.1} parent=1 // pred_check_branch
      %66 = sbr.rel (0) target = $region17
    $region16: #{tpu_custom_call.1} parent=1 // pred_region
      _
    $region17: #{tpu_custom_call.1} parent=1 // pred_fallthru
      _
    // Predicated region
    $region18: #{tpu_custom_call.1} parent=1 // pred_check
      _
    $region19: #{tpu_custom_call.1} parent=1 // pred_check_branch
      %68 = sbr.rel (0) target = $region21
    $region20: #{tpu_custom_call.1} parent=1 // pred_region
      _
    $region21: #{tpu_custom_call.1} parent=1 // pred_fallthru
      _
    // Predicated region
    $region22: #{tpu_custom_call.1} parent=1 // pred_check
      _
    $region23: #{tpu_custom_call.1} parent=1 // pred_check_branch
      %70 = sbr.rel (0) target = $region25
    $region24: #{tpu_custom_call.1} parent=1 // pred_region
      _
    $region25: #{tpu_custom_call.1} parent=1 // pred_fallthru
      _
    // Predicated region
    $region26: #{tpu_custom_call.1} parent=1 // pred_check
      _
    $region27: #{tpu_custom_call.1} parent=1 // pred_check_branch
      %72 = sbr.rel (0) target = $region29
    $region28: #{tpu_custom_call.1} parent=1 // pred_region
      _
    $region29: #{tpu_custom_call.1} parent=1 // pred_fallthru
      _
    // Predicated region
    $region30: #{tpu_custom_call.1} parent=1 // pred_check
      _
    $region31: #{tpu_custom_call.1} parent=1 // pred_check_branch
      %74 = sbr.rel (0) target = $region33
    $region32: #{tpu_custom_call.1} parent=1 // pred_region
      _
    $region33: #{tpu_custom_call.1} parent=1 // pred_fallthru
      _
    // Predicated region
    $region34: #{tpu_custom_call.1} parent=1 // pred_check
      _
    $region35: #{tpu_custom_call.1} parent=1 // pred_check_branch
      %76 = sbr.rel (0) target = $region37
    $region36: #{tpu_custom_call.1} parent=1 // pred_region
      %s78 = ssub.s32 32, 32
      %79 = vsyncadd [#allocation9], %s78
      %s80 = sshll.u32 [#allocation8], 4
      %s81 = int_to_ptr.vmem [resolvable:$true] %s80
      %86 = dma.hbm_to_vmem [thread:$0]  %s8, 32, %s81, [#allocation9], 16, 16, 1
    $region37: #{tpu_custom_call.1} parent=1 // pred_fallthru
      _
    // Predicated region
    $region38: #{tpu_custom_call.1} parent=1 // pred_check
      _
    $region39: #{tpu_custom_call.1} parent=1 // pred_check_branch
      %88 = sbr.rel (0) target = $region41
    $region40: #{tpu_custom_call.1} parent=1 // pred_region
      _
    $region41: #{tpu_custom_call.1} parent=1 // pred_fallthru
      _
    // Predicated region
    $region42: #{tpu_custom_call.1} parent=1 // pred_check
      _
    $region43: #{tpu_custom_call.1} parent=1 // pred_check_branch
      %90 = sbr.rel (0) target = $region45
    $region44: #{tpu_custom_call.1} parent=1 // pred_region
      %s92 = ssub.s32 32, 32
      %93 = vsyncadd [#allocation9], %s92
      %s94 = sshll.u32 [#allocation10], 4
      %s95 = int_to_ptr.vmem [resolvable:$true] %s94
      %100 = dma.hbm_to_vmem [thread:$0]  %s10, 32, %s95, [#allocation9], 16, 16, 1
    $region45: #{tpu_custom_call.1} parent=1 // pred_fallthru
      _
    // Predicated region
    $region46: #{tpu_custom_call.1} parent=1 // pred_check
      _
    $region47: #{tpu_custom_call.1} parent=1 // pred_check_branch
      %102 = sbr.rel (0) target = $region49
    $region48: #{tpu_custom_call.1} parent=1 // pred_region
      _
    $region49: #{tpu_custom_call.1} parent=1 // pred_fallthru
      _
    // Predicated region
    $region50: #{tpu_custom_call.1} parent=1 // pred_check
      _
    $region51: #{tpu_custom_call.1} parent=1 // pred_check_branch
      %104 = sbr.rel (0) target = $region53
    $region52: #{tpu_custom_call.1} parent=1 // pred_region
      %s106 = ssub.s32 32, 32
      %107 = vsyncadd [#allocation12], %s106
      %s108 = sshll.u32 [#allocation11], 4
      %s109 = int_to_ptr.vmem [resolvable:$true] %s108
      %114 = dma.hbm_to_vmem [thread:$0]  %s12, 32, %s109, [#allocation12], 16, 16, 1
    $region53: #{tpu_custom_call.1} parent=1 // pred_fallthru
      _
    // Predicated region
    $region54: #{tpu_custom_call.1} parent=1 // pred_check
      _
    $region55: #{tpu_custom_call.1} parent=1 // pred_check_branch
      %116 = sbr.rel (0) target = $region57
    $region56: #{tpu_custom_call.1} parent=1 // pred_region
      _
    $region57: #{tpu_custom_call.1} parent=1 // pred_fallthru
      _
    // Predicated region
    $region58: #{tpu_custom_call.1} parent=1 // pred_check
      _
    $region59: #{tpu_custom_call.1} parent=1 // pred_check_branch
      %118 = sbr.rel (0) target = $region61
    $region60: #{tpu_custom_call.1} parent=1 // pred_region
      _
    $region61: #{tpu_custom_call.1} parent=1 // pred_fallthru
      _
    // Predicated region
    $region62: #{tpu_custom_call.1} parent=1 // pred_check
      _
    $region63: #{tpu_custom_call.1} parent=1 // pred_check_branch
      %120 = sbr.rel (0) target = $region65
    $region64: #{tpu_custom_call.1} parent=1 // pred_region
      %s122 = ssub.s32 256, 256
      %123 = vsyncadd [#allocation12], %s122
      %s124 = sshll.u32 [#allocation13], 4
      %s125 = int_to_ptr.vmem [resolvable:$true] %s124
      %130 = dma.hbm_to_vmem [thread:$0]  %s15, 256, %s125, [#allocation12], 64, 64, 4
    $region65: #{tpu_custom_call.1} parent=1 // pred_fallthru
      _
    // Predicated region
    $region66: #{tpu_custom_call.1} parent=1 // pred_check
      _
    $region67: #{tpu_custom_call.1} parent=1 // pred_check_branch
      %132 = sbr.rel (0) target = $region69
    $region68: #{tpu_custom_call.1} parent=1 // pred_region
      _
    $region69: #{tpu_custom_call.1} parent=1 // pred_fallthru
      _
    // Predicated region
    $region70: #{tpu_custom_call.1} parent=1 // pred_check
      _
    $region71: #{tpu_custom_call.1} parent=1 // pred_check_branch
      %134 = sbr.rel (0) target = $region73
    $region72: #{tpu_custom_call.1} parent=1 // pred_region
      _
    $region73: #{tpu_custom_call.1} parent=1 // pred_fallthru
      _
    // Predicated region
    $region74: #{tpu_custom_call.1} parent=1 // pred_check
      _
    $region75: #{tpu_custom_call.1} parent=1 // pred_check_branch
      %136 = sbr.rel (0) target = $region77
    $region76: #{tpu_custom_call.1} parent=1 // pred_region
      _
    $region77: #{tpu_custom_call.1} parent=1 // pred_fallthru
      _
    // Predicated region
    $region78: #{tpu_custom_call.1} parent=1 // pred_check
      _
    $region79: #{tpu_custom_call.1} parent=1 // pred_check_branch
      %138 = sbr.rel (0) target = $region81
    $region80: #{tpu_custom_call.1} parent=1 // pred_region
      %139 = dma.done [#allocation3], 256
    $region81: #{tpu_custom_call.1} parent=1 // pred_fallthru
      _
    // Predicated region
    $region82: #{tpu_custom_call.1} parent=1 // pred_check
      _
    $region83: #{tpu_custom_call.1} parent=1 // pred_check_branch
      %141 = sbr.rel (0) target = $region85
    $region84: #{tpu_custom_call.1} parent=1 // pred_region
      %142 = dma.done [#allocation6], 128
    $region85: #{tpu_custom_call.1} parent=1 // pred_fallthru
      _
    // Predicated region
    $region86: #{tpu_custom_call.1} parent=1 // pred_check
      _
    $region87: #{tpu_custom_call.1} parent=1 // pred_check_branch
      %144 = sbr.rel (0) target = $region89
    $region88: #{tpu_custom_call.1} parent=1 // pred_region
      %145 = dma.done [#allocation6], 256
    $region89: #{tpu_custom_call.1} parent=1 // pred_fallthru
      _
    // Predicated region
    $region90: #{tpu_custom_call.1} parent=1 // pred_check
      _
    $region91: #{tpu_custom_call.1} parent=1 // pred_check_branch
      %147 = sbr.rel (0) target = $region93
    $region92: #{tpu_custom_call.1} parent=1 // pred_region
      %148 = dma.done [#allocation9], 32
    $region93: #{tpu_custom_call.1} parent=1 // pred_fallthru
      _
    // Predicated region
    $region94: #{tpu_custom_call.1} parent=1 // pred_check
      _
    $region95: #{tpu_custom_call.1} parent=1 // pred_check_branch
      %150 = sbr.rel (0) target = $region97
    $region96: #{tpu_custom_call.1} parent=1 // pred_region
      %151 = dma.done [#allocation9], 32
    $region97: #{tpu_custom_call.1} parent=1 // pred_fallthru
      _
    // Predicated region
    $region98: #{tpu_custom_call.1} parent=1 // pred_check
      _
    $region99: #{tpu_custom_call.1} parent=1 // pred_check_branch
      %153 = sbr.rel (0) target = $region101
    $region100: #{tpu_custom_call.1} parent=1 // pred_region
      %154 = dma.done [#allocation12], 32
    $region101: #{tpu_custom_call.1} parent=1 // pred_fallthru
      _
    // Predicated region
    $region102: #{tpu_custom_call.1} parent=1 // pred_check
      _
    $region103: #{tpu_custom_call.1} parent=1 // pred_check_branch
      %156 = sbr.rel (0) target = $region105
    $region104: #{tpu_custom_call.1} parent=1 // pred_region
      %157 = dma.done [#allocation12], 256
    $region105: #{tpu_custom_call.1} parent=1 // pred_fallthru
      _
    %v159 = vld [vmem:[#allocation2] sm:$0xff]
    %v160 = vld [vmem:[#allocation2 + $0x8] sm:$0xff]
    %v161 = vld [vmem:[#allocation5] sm:$0xf]
    %v162 = vld [vmem:[#allocation5 + $0x4] sm:$0xf]
    %v163 = vld [vmem:[#allocation7] sm:$0xff]
    %v164 = vld [vmem:[#allocation7 + $0x8] sm:$0xff]
    %v165 = vpack.c.bf16 %v160, %v159
    %v168 = vunpack.c.l.b16 %v161
    %v169 = vunpack.c.l.b16 %v162
    %v170 = vpack.c.b16 %v169, %v168
    %v171 = vld [vmem:[%s3] sm:$0xf]
    %v172 = vld [vmem:[%s3 + $0x4] sm:$0xf]
    %v173 = vld [vmem:[%s3 + $0x8] sm:$0xf]
    %v174 = vld [vmem:[%s3 + $0xc] sm:$0xf]
    %v179 = vunpack.c.l.b16 %v171
    %v180 = vunpack.c.l.b16 %v172
    %v181 = vunpack.c.l.b16 %v173
    %v182 = vunpack.c.l.b16 %v174
    %v183 = vpack.c.b16 %v180, %v179
    %v184 = vpack.c.b16 %v182, %v181
    %vm187 = vcmask 261120
    %v189 = vsel %vm187, %v165, 0
    %v192 = vsel %vm187, %v170, 0
    %194 = vmatprep.subr.bf16.mxu0 0
    %195 = vmatpush1.bf16.msra.mxu0 0
    %196 = vmatprep.subr.bf16.mxu0 0
    %197 = vmatpush1.bf16.msra.mxu0 0
    %198 = vmatprep.subr.bf16.mxu0 0
    %199 = vmatpush1.bf16.msra.mxu0 0
    %200 = vmatprep.subr.bf16.mxu0 0
    %201 = vmatpush1.bf16.msra.mxu0 0
    %202 = vmatprep.subr.bf16.mxu0 0
    %203 = vmatpush1.bf16.msra.mxu0 0
    %204 = vmatprep.subr.bf16.mxu0 0
    %205 = vmatpush1.bf16.msra.mxu0 0
    %206 = vmatprep.subr.bf16.mxu0 0
    %207 = vmatpush1.bf16.msra.mxu0 %v184
    %208 = vmatprep.subr.bf16.mxu0 0
    %209 = vmatpush1.bf16.msra.mxu0 %v183
    %210 = vmatprep.subr.bf16.mxu0 0
    %211 = vmatpush2.bf16.msra.mxu0 0
    %212 = vmatprep.subr.bf16.mxu0 0
    %213 = vmatpush2.bf16.msra.mxu0 0
    %214 = vmatprep.subr.bf16.mxu0 0
    %215 = vmatpush2.bf16.msra.mxu0 0
    %216 = vmatprep.subr.bf16.mxu0 0
    %217 = vmatpush2.bf16.msra.mxu0 0
    %218 = vmatprep.subr.bf16.mxu0 0
    %219 = vmatpush2.bf16.msra.mxu0 0
    %220 = vmatprep.subr.bf16.mxu0 0
    %221 = vmatpush2.bf16.msra.mxu0 0
    %222 = vmatprep.subr.bf16.mxu0 0
    %223 = vmatpush2.bf16.msra.mxu0 0
    %224 = vmatprep.subr.bf16.mxu0 0
    %225 = vmatpush2.bf16.msra.mxu0 0
    %226 = vmatprep.mubr.bf16.mxu0 0
    %227 = vmatmul.mubr.bf16.gmra.mxu0 %v189
    %v228 = vpop.f32.mrf.mxu0
    %v229 = vadd.f32 0.0, %v228
    %v230 = vpop.f32.mrf.mxu0
    %v231 = vpop.f32.mrf.mxu0
    %v232 = vadd.f32 0.0, %v231
    %v233 = vpop.f32.mrf.mxu0
    %234 = vmatprep.mubr.bf16.mxu0 0
    %235 = vmatmul.mubr.bf16.gmra.mxu0 %v192
    %v236 = vpop.f32.mrf.mxu0
    %v237 = vadd.f32 0.0, %v236
    %v238 = vpop.f32.mrf.mxu0
    %v239 = vpop.f32.mrf.mxu0
    %v240 = vadd.f32 0.0, %v239
    %v241 = vpop.f32.mrf.mxu0
    %242 = vdwg.mxu0
    %v243 = vld [vmem:[%s4] sm:$0x1]
    %v245 = vlaneseq
    %v246 = vshrl.u32 %v245, 7
    %v247 = vsub.s32 0, %v246
    %v248 = vrot.slane %v243, %v247
    %v250 = vadd.f32 %v229, %v248
    %v251 = vadd.f32 %v232, %v248
    %v252 = vmul.f32 %v250, 0.35355338
    %v253 = vmul.f32 %v251, 0.35355338
    %v254 = vpack.c.bf16 %v252, %v252
    %v255 = vpack.c.bf16 %v253, %v253
    %v256 = vld [vmem:[%s5] sm:$0x1]
    %v258 = vlaneseq
    %v259 = vshrl.u32 %v258, 7
    %v260 = vsub.s32 0, %v259
    %v261 = vrot.slane %v256, %v260
    %v263 = vadd.f32 %v229, %v261
    %v264 = vadd.f32 %v232, %v261
    %v265 = vmul.f32 %v263, 0.35355338
    %v266 = vmul.f32 %v264, 0.35355338
    %v267 = vpack.c.bf16 %v266, %v265
    %v268 = vpack.c.bf16 %v229, %v229
    %v269 = vpack.c.bf16 %v232, %v232
    %271 = vrot.lane.b32.xlu0 %v268, 96
    %v272 = vpop.permute.xlu0 %271
    %vm273 = vcmask 64512
    %v275 = vsel %vm273, %v254, 0
    %v278 = vsel %vm273, %v272, 0
    %280 = vmatprep.subr.bf16.mxu0 0
    %281 = vmatpush1.bf16.xpose.msra.mxu0 0
    %282 = vmatprep.subr.bf16.mxu0 0
    %283 = vmatpush1.bf16.xpose.msra.mxu0 0
    %284 = vmatprep.subr.bf16.mxu0 0
    %285 = vmatpush1.bf16.xpose.msra.mxu0 0
    %286 = vmatprep.subr.bf16.mxu0 0
    %287 = vmatpush1.bf16.xpose.msra.mxu0 0
    %288 = vmatprep.subr.bf16.mxu0 0
    %289 = vmatpush1.bf16.xpose.msra.mxu0 0
    %290 = vmatprep.subr.bf16.mxu0 0
    %291 = vmatpush1.bf16.xpose.msra.mxu0 0
    %292 = vmatprep.subr.bf16.mxu0 0
    %293 = vmatpush1.bf16.xpose.msra.mxu0 0
    %294 = vmatprep.subr.bf16.mxu0 0
    %295 = vmatpush1.bf16.xpose.msra.mxu0 %v278
    %296 = vmatprep.subr.bf16.mxu0 0
    %297 = vmatpush2.bf16.xpose.msra.mxu0 0
    %298 = vmatprep.subr.bf16.mxu0 0
    %299 = vmatpush2.bf16.xpose.msra.mxu0 0
    %300 = vmatprep.subr.bf16.mxu0 0
    %301 = vmatpush2.bf16.xpose.msra.mxu0 0
    %302 = vmatprep.subr.bf16.mxu0 0
    %303 = vmatpush2.bf16.xpose.msra.mxu0 0
    %304 = vmatprep.subr.bf16.mxu0 0
    %305 = vmatpush2.bf16.xpose.msra.mxu0 0
    %306 = vmatprep.subr.bf16.mxu0 0
    %307 = vmatpush2.bf16.xpose.msra.mxu0 0
    %308 = vmatprep.subr.bf16.mxu0 0
    %309 = vmatpush2.bf16.xpose.msra.mxu0 0
    %310 = vmatprep.subr.bf16.mxu0 0
    %311 = vmatpush2.bf16.xpose.msra.mxu0 0
    %312 = vmatprep.mubr.bf16.mxu0 0
    %313 = vmatmul.mubr.bf16.gmra.mxu0 %v275
    %v314 = vpop.f32.mrf.mxu0
    %v315 = vadd.f32 0.0, %v314
    %v316 = vpop.f32.mrf.mxu0
    %v317 = vpop.f32.mrf.mxu0
    %v318 = vpop.f32.mrf.mxu0
    %319 = vdwg.mxu0
    %321 = vrot.lane.b32.xlu0 %v269, 96
    %v322 = vpop.permute.xlu0 %321
    %v324 = vsel %vm273, %v255, 0
    %v327 = vsel %vm273, %v322, 0
    %329 = vmatprep.subr.bf16.mxu0 0
    %330 = vmatpush1.bf16.xpose.msra.mxu0 0
    %331 = vmatprep.subr.bf16.mxu0 0
    %332 = vmatpush1.bf16.xpose.msra.mxu0 0
    %333 = vmatprep.subr.bf16.mxu0 0
    %334 = vmatpush1.bf16.xpose.msra.mxu0 0
    %335 = vmatprep.subr.bf16.mxu0 0
    %336 = vmatpush1.bf16.xpose.msra.mxu0 0
    %337 = vmatprep.subr.bf16.mxu0 0
    %338 = vmatpush1.bf16.xpose.msra.mxu0 0
    %339 = vmatprep.subr.bf16.mxu0 0
    %340 = vmatpush1.bf16.xpose.msra.mxu0 0
    %341 = vmatprep.subr.bf16.mxu0 0
    %342 = vmatpush1.bf16.xpose.msra.mxu0 0
    %343 = vmatprep.subr.bf16.mxu0 0
    %344 = vmatpush1.bf16.xpose.msra.mxu0 %v327
    %345 = vmatprep.subr.bf16.mxu0 0
    %346 = vmatpush2.bf16.xpose.msra.mxu0 0
    %347 = vmatprep.subr.bf16.mxu0 0
    %348 = vmatpush2.bf16.xpose.msra.mxu0 0
    %349 = vmatprep.subr.bf16.mxu0 0
    %350 = vmatpush2.bf16.xpose.msra.mxu0 0
    %351 = vmatprep.subr.bf16.mxu0 0
    %352 = vmatpush2.bf16.xpose.msra.mxu0 0
    %353 = vmatprep.subr.bf16.mxu0 0
    %354 = vmatpush2.bf16.xpose.msra.mxu0 0
    %355 = vmatprep.subr.bf16.mxu0 0
    %356 = vmatpush2.bf16.xpose.msra.mxu0 0
    %357 = vmatprep.subr.bf16.mxu0 0
    %358 = vmatpush2.bf16.xpose.msra.mxu0 0
    %359 = vmatprep.subr.bf16.mxu0 0
    %360 = vmatpush2.bf16.xpose.msra.mxu0 0
    %361 = vmatprep.mubr.bf16.mxu0 0
    %362 = vmatmul.mubr.bf16.gmra.mxu0 %v324
    %v363 = vpop.f32.mrf.mxu0
    %v364 = vadd.f32 0.0, %v363
    %v365 = vpop.f32.mrf.mxu0
    %v366 = vpop.f32.mrf.mxu0
    %v367 = vpop.f32.mrf.mxu0
    %368 = vdwg.mxu0
    %371 = vrot.lane.b32.xlu0 %v237, 32
    %v372 = vpop.permute.xlu0 %371
    %373 = vrot.lane.b32.xlu0 %v240, 32
    %v374 = vpop.permute.xlu0 %373
    %377 = vxpose.xlu0.b32.start [1/16] %v372, 128
    %378 = vxpose.xlu0.b32.cont [2/16] %v374, 128
    %379 = vxpose.xlu0.b32.cont [3/16] 0.0, 128
    %380 = vxpose.xlu0.b32.cont [4/16] 0.0, 128
    %381 = vxpose.xlu0.b32.cont [5/16] 0.0, 128
    %382 = vxpose.xlu0.b32.cont [6/16] 0.0, 128
    %383 = vxpose.xlu0.b32.cont [7/16] 0.0, 128
    %384 = vxpose.xlu0.b32.cont [8/16] 0.0, 128
    %385 = vxpose.xlu0.b32.cont [9/16] 0.0, 128
    %386 = vxpose.xlu0.b32.cont [10/16] 0.0, 128
    %387 = vxpose.xlu0.b32.cont [11/16] 0.0, 128
    %388 = vxpose.xlu0.b32.cont [12/16] 0.0, 128
    %389 = vxpose.xlu0.b32.cont [13/16] 0.0, 128
    %390 = vxpose.xlu0.b32.cont [14/16] 0.0, 128
    %391 = vxpose.xlu0.b32.cont [15/16] 0.0, 128
    %392 = vxpose.xlu0.b32.end [16/16] 0.0, 128
    %v393 = vpop.trf.xlu0
    %v394 = vpop.trf.xlu0
    %v395 = vpop.trf.xlu0
    %v396 = vpop.trf.xlu0
    %v397 = vpop.trf.xlu0
    %v398 = vpop.trf.xlu0
    %v399 = vpop.trf.xlu0
    %v400 = vpop.trf.xlu0
    %v401 = vpop.trf.xlu0
    %v402 = vpop.trf.xlu0
    %v403 = vpop.trf.xlu0
    %v404 = vpop.trf.xlu0
    %v405 = vpop.trf.xlu0
    %v406 = vpop.trf.xlu0
    %v407 = vpop.trf.xlu0
    %v408 = vpop.trf.xlu0
    %v409 = vpack.c.bf16 %v393, %v393
    %v411 = vsel %vm273, %v267, 0
    %vm413 = vcmask 1043456
    %v415 = vsel %vm413, %v409, 0
    %417 = vmatprep.subr.bf16.mxu0 0
    %418 = vmatpush1.bf16.msra.mxu0 0
    %419 = vmatprep.subr.bf16.mxu0 0
    %420 = vmatpush1.bf16.msra.mxu0 0
    %421 = vmatprep.subr.bf16.mxu0 0
    %422 = vmatpush1.bf16.msra.mxu0 0
    %423 = vmatprep.subr.bf16.mxu0 0
    %424 = vmatpush1.bf16.msra.mxu0 0
    %425 = vmatprep.subr.bf16.mxu0 0
    %426 = vmatpush1.bf16.msra.mxu0 0
    %427 = vmatprep.subr.bf16.mxu0 0
    %428 = vmatpush1.bf16.msra.mxu0 0
    %429 = vmatprep.subr.bf16.mxu0 0
    %430 = vmatpush1.bf16.msra.mxu0 0
    %431 = vmatprep.subr.bf16.mxu0 0
    %432 = vmatpush1.bf16.msra.mxu0 %v415
    %433 = vmatprep.subr.bf16.mxu0 0
    %434 = vmatpush2.bf16.msra.mxu0 0
    %435 = vmatprep.subr.bf16.mxu0 0
    %436 = vmatpush2.bf16.msra.mxu0 0
    %437 = vmatprep.subr.bf16.mxu0 0
    %438 = vmatpush2.bf16.msra.mxu0 0
    %439 = vmatprep.subr.bf16.mxu0 0
    %440 = vmatpush2.bf16.msra.mxu0 0
    %441 = vmatprep.subr.bf16.mxu0 0
    %442 = vmatpush2.bf16.msra.mxu0 0
    %443 = vmatprep.subr.bf16.mxu0 0
    %444 = vmatpush2.bf16.msra.mxu0 0
    %445 = vmatprep.subr.bf16.mxu0 0
    %446 = vmatpush2.bf16.msra.mxu0 0
    %447 = vmatprep.subr.bf16.mxu0 0
    %448 = vmatpush2.bf16.msra.mxu0 0
    %449 = vmatprep.mubr.bf16.mxu0 0
    %450 = vmatmul.mubr.bf16.gmra.mxu0 %v411
    %v451 = vpop.f32.mrf.mxu0
    %v452 = vadd.f32 0.0, %v451
    %v453 = vpop.f32.mrf.mxu0
    %v454 = vpop.f32.mrf.mxu0
    %v455 = vadd.f32 0.0, %v454
    %v456 = vpop.f32.mrf.mxu0
    %457 = vdwg.mxu0
    %459 = vrot.lane.b32.xlu0 %v254, 120
    %v460 = vpop.permute.xlu0 %459
    %461 = vrot.lane.b32.xlu0 %v268, 88
    %v462 = vpop.permute.xlu0 %461
    %v464 = vsel %vm273, %v460, 0
    %v467 = vsel %vm273, %v462, 0
    %469 = vmatprep.subr.bf16.mxu0 0
    %470 = vmatpush1.bf16.xpose.msra.mxu0 0
    %471 = vmatprep.subr.bf16.mxu0 0
    %472 = vmatpush1.bf16.xpose.msra.mxu0 0
    %473 = vmatprep.subr.bf16.mxu0 0
    %474 = vmatpush1.bf16.xpose.msra.mxu0 0
    %475 = vmatprep.subr.bf16.mxu0 0
    %476 = vmatpush1.bf16.xpose.msra.mxu0 0
    %477 = vmatprep.subr.bf16.mxu0 0
    %478 = vmatpush1.bf16.xpose.msra.mxu0 0
    %479 = vmatprep.subr.bf16.mxu0 0
    %480 = vmatpush1.bf16.xpose.msra.mxu0 0
    %481 = vmatprep.subr.bf16.mxu0 0
    %482 = vmatpush1.bf16.xpose.msra.mxu0 0
    %483 = vmatprep.subr.bf16.mxu0 0
    %484 = vmatpush1.bf16.xpose.msra.mxu0 %v467
    %485 = vmatprep.subr.bf16.mxu0 0
    %486 = vmatpush2.bf16.xpose.msra.mxu0 0
    %487 = vmatprep.subr.bf16.mxu0 0
    %488 = vmatpush2.bf16.xpose.msra.mxu0 0
    %489 = vmatprep.subr.bf16.mxu0 0
    %490 = vmatpush2.bf16.xpose.msra.mxu0 0
    %491 = vmatprep.subr.bf16.mxu0 0
    %492 = vmatpush2.bf16.xpose.msra.mxu0 0
    %493 = vmatprep.subr.bf16.mxu0 0
    %494 = vmatpush2.bf16.xpose.msra.mxu0 0
    %495 = vmatprep.subr.bf16.mxu0 0
    %496 = vmatpush2.bf16.xpose.msra.mxu0 0
    %497 = vmatprep.subr.bf16.mxu0 0
    %498 = vmatpush2.bf16.xpose.msra.mxu0 0
    %499 = vmatprep.subr.bf16.mxu0 0
    %500 = vmatpush2.bf16.xpose.msra.mxu0 0
    %501 = vmatprep.mubr.bf16.mxu0 0
    %502 = vmatmul.mubr.bf16.gmra.mxu0 %v464
    %v503 = vpop.f32.mrf.mxu0
    %v504 = vadd.f32 0.0, %v503
    %v505 = vpop.f32.mrf.mxu0
    %v506 = vpop.f32.mrf.mxu0
    %v507 = vpop.f32.mrf.mxu0
    %508 = vdwg.mxu0
    %510 = vrot.lane.b32.xlu0 %v255, 120
    %v511 = vpop.permute.xlu0 %510
    %512 = vrot.lane.b32.xlu0 %v269, 88
    %v513 = vpop.permute.xlu0 %512
    %v515 = vsel %vm273, %v511, 0
    %v518 = vsel %vm273, %v513, 0
    %520 = vmatprep.subr.bf16.mxu0 0
    %521 = vmatpush1.bf16.xpose.msra.mxu0 0
    %522 = vmatprep.subr.bf16.mxu0 0
    %523 = vmatpush1.bf16.xpose.msra.mxu0 0
    %524 = vmatprep.subr.bf16.mxu0 0
    %525 = vmatpush1.bf16.xpose.msra.mxu0 0
    %526 = vmatprep.subr.bf16.mxu0 0
    %527 = vmatpush1.bf16.xpose.msra.mxu0 0
    %528 = vmatprep.subr.bf16.mxu0 0
    %529 = vmatpush1.bf16.xpose.msra.mxu0 0
    %530 = vmatprep.subr.bf16.mxu0 0
    %531 = vmatpush1.bf16.xpose.msra.mxu0 0
    %532 = vmatprep.subr.bf16.mxu0 0
    %533 = vmatpush1.bf16.xpose.msra.mxu0 0
    %534 = vmatprep.subr.bf16.mxu0 0
    %535 = vmatpush1.bf16.xpose.msra.mxu0 %v518
    %536 = vmatprep.subr.bf16.mxu0 0
    %537 = vmatpush2.bf16.xpose.msra.mxu0 0
    %538 = vmatprep.subr.bf16.mxu0 0
    %539 = vmatpush2.bf16.xpose.msra.mxu0 0
    %540 = vmatprep.subr.bf16.mxu0 0
    %541 = vmatpush2.bf16.xpose.msra.mxu0 0
    %542 = vmatprep.subr.bf16.mxu0 0
    %543 = vmatpush2.bf16.xpose.msra.mxu0 0
    %544 = vmatprep.subr.bf16.mxu0 0
    %545 = vmatpush2.bf16.xpose.msra.mxu0 0
    %546 = vmatprep.subr.bf16.mxu0 0
    %547 = vmatpush2.bf16.xpose.msra.mxu0 0
    %548 = vmatprep.subr.bf16.mxu0 0
    %549 = vmatpush2.bf16.xpose.msra.mxu0 0
    %550 = vmatprep.subr.bf16.mxu0 0
    %551 = vmatpush2.bf16.xpose.msra.mxu0 0
    %552 = vmatprep.mubr.bf16.mxu0 0
    %553 = vmatmul.mubr.bf16.gmra.mxu0 %v515
    %v554 = vpop.f32.mrf.mxu0
    %v555 = vadd.f32 0.0, %v554
    %v556 = vpop.f32.mrf.mxu0
    %v557 = vpop.f32.mrf.mxu0
    %v558 = vpop.f32.mrf.mxu0
    %559 = vdwg.mxu0
    %560 = vrot.lane.b32.xlu0 %v237, 24
    %v561 = vpop.permute.xlu0 %560
    %562 = vrot.lane.b32.xlu0 %v240, 24
    %v563 = vpop.permute.xlu0 %562
    %566 = vxpose.xlu0.b32.start [1/16] %v561, 128
    %567 = vxpose.xlu0.b32.cont [2/16] %v563, 128
    %568 = vxpose.xlu0.b32.cont [3/16] 0.0, 128
    %569 = vxpose.xlu0.b32.cont [4/16] 0.0, 128
    %570 = vxpose.xlu0.b32.cont [5/16] 0.0, 128
    %571 = vxpose.xlu0.b32.cont [6/16] 0.0, 128
    %572 = vxpose.xlu0.b32.cont [7/16] 0.0, 128
    %573 = vxpose.xlu0.b32.cont [8/16] 0.0, 128
    %574 = vxpose.xlu0.b32.cont [9/16] 0.0, 128
    %575 = vxpose.xlu0.b32.cont [10/16] 0.0, 128
    %576 = vxpose.xlu0.b32.cont [11/16] 0.0, 128
    %577 = vxpose.xlu0.b32.cont [12/16] 0.0, 128
    %578 = vxpose.xlu0.b32.cont [13/16] 0.0, 128
    %579 = vxpose.xlu0.b32.cont [14/16] 0.0, 128
    %580 = vxpose.xlu0.b32.cont [15/16] 0.0, 128
    %581 = vxpose.xlu0.b32.end [16/16] 0.0, 128
    %v582 = vpop.trf.xlu0
    %v583 = vpop.trf.xlu0
    %v584 = vpop.trf.xlu0
    %v585 = vpop.trf.xlu0
    %v586 = vpop.trf.xlu0
    %v587 = vpop.trf.xlu0
    %v588 = vpop.trf.xlu0
    %v589 = vpop.trf.xlu0
    %v590 = vpop.trf.xlu0
    %v591 = vpop.trf.xlu0
    %v592 = vpop.trf.xlu0
    %v593 = vpop.trf.xlu0
    %v594 = vpop.trf.xlu0
    %v595 = vpop.trf.xlu0
    %v596 = vpop.trf.xlu0
    %v597 = vpop.trf.xlu0
    %v598 = vpack.c.bf16 %v582, %v582
    %600 = vrot.lane.b32.xlu0 %v267, 120
    %v601 = vpop.permute.xlu0 %600
    %v603 = vsel %vm273, %v601, 0
    %v606 = vsel %vm413, %v598, 0
    %608 = vmatprep.subr.bf16.mxu0 0
    %609 = vmatpush1.bf16.msra.mxu0 0
    %610 = vmatprep.subr.bf16.mxu0 0
    %611 = vmatpush1.bf16.msra.mxu0 0
    %612 = vmatprep.subr.bf16.mxu0 0
    %613 = vmatpush1.bf16.msra.mxu0 0
    %614 = vmatprep.subr.bf16.mxu0 0
    %615 = vmatpush1.bf16.msra.mxu0 0
    %616 = vmatprep.subr.bf16.mxu0 0
    %617 = vmatpush1.bf16.msra.mxu0 0
    %618 = vmatprep.subr.bf16.mxu0 0
    %619 = vmatpush1.bf16.msra.mxu0 0
    %620 = vmatprep.subr.bf16.mxu0 0
    %621 = vmatpush1.bf16.msra.mxu0 0
    %622 = vmatprep.subr.bf16.mxu0 0
    %623 = vmatpush1.bf16.msra.mxu0 %v606
    %624 = vmatprep.subr.bf16.mxu0 0
    %625 = vmatpush2.bf16.msra.mxu0 0
    %626 = vmatprep.subr.bf16.mxu0 0
    %627 = vmatpush2.bf16.msra.mxu0 0
    %628 = vmatprep.subr.bf16.mxu0 0
    %629 = vmatpush2.bf16.msra.mxu0 0
    %630 = vmatprep.subr.bf16.mxu0 0
    %631 = vmatpush2.bf16.msra.mxu0 0
    %632 = vmatprep.subr.bf16.mxu0 0
    %633 = vmatpush2.bf16.msra.mxu0 0
    %634 = vmatprep.subr.bf16.mxu0 0
    %635 = vmatpush2.bf16.msra.mxu0 0
    %636 = vmatprep.subr.bf16.mxu0 0
    %637 = vmatpush2.bf16.msra.mxu0 0
    %638 = vmatprep.subr.bf16.mxu0 0
    %639 = vmatpush2.bf16.msra.mxu0 0
    %640 = vmatprep.mubr.bf16.mxu0 0
    %641 = vmatmul.mubr.bf16.gmra.mxu0 %v603
    %v642 = vpop.f32.mrf.mxu0
    %v643 = vadd.f32 0.0, %v642
    %v644 = vpop.f32.mrf.mxu0
    %v645 = vpop.f32.mrf.mxu0
    %v646 = vadd.f32 0.0, %v645
    %v647 = vpop.f32.mrf.mxu0
    %648 = vdwg.mxu0
    %649 = vrot.lane.b32.xlu0 %v254, 112
    %v650 = vpop.permute.xlu0 %649
    %651 = vrot.lane.b32.xlu0 %v268, 80
    %v652 = vpop.permute.xlu0 %651
    %v654 = vsel %vm273, %v650, 0
    %v657 = vsel %vm273, %v652, 0
    %659 = vmatprep.subr.bf16.mxu0 0
    %660 = vmatpush1.bf16.xpose.msra.mxu0 0
    %661 = vmatprep.subr.bf16.mxu0 0
    %662 = vmatpush1.bf16.xpose.msra.mxu0 0
    %663 = vmatprep.subr.bf16.mxu0 0
    %664 = vmatpush1.bf16.xpose.msra.mxu0 0
    %665 = vmatprep.subr.bf16.mxu0 0
    %666 = vmatpush1.bf16.xpose.msra.mxu0 0
    %667 = vmatprep.subr.bf16.mxu0 0
    %668 = vmatpush1.bf16.xpose.msra.mxu0 0
    %669 = vmatprep.subr.bf16.mxu0 0
    %670 = vmatpush1.bf16.xpose.msra.mxu0 0
    %671 = vmatprep.subr.bf16.mxu0 0
    %672 = vmatpush1.bf16.xpose.msra.mxu0 0
    %673 = vmatprep.subr.bf16.mxu0 0
    %674 = vmatpush1.bf16.xpose.msra.mxu0 %v657
    %675 = vmatprep.subr.bf16.mxu0 0
    %676 = vmatpush2.bf16.xpose.msra.mxu0 0
    %677 = vmatprep.subr.bf16.mxu0 0
    %678 = vmatpush2.bf16.xpose.msra.mxu0 0
    %679 = vmatprep.subr.bf16.mxu0 0
    %680 = vmatpush2.bf16.xpose.msra.mxu0 0
    %681 = vmatprep.subr.bf16.mxu0 0
    %682 = vmatpush2.bf16.xpose.msra.mxu0 0
    %683 = vmatprep.subr.bf16.mxu0 0
    %684 = vmatpush2.bf16.xpose.msra.mxu0 0
    %685 = vmatprep.subr.bf16.mxu0 0
    %686 = vmatpush2.bf16.xpose.msra.mxu0 0
    %687 = vmatprep.subr.bf16.mxu0 0
    %688 = vmatpush2.bf16.xpose.msra.mxu0 0
    %689 = vmatprep.subr.bf16.mxu0 0
    %690 = vmatpush2.bf16.xpose.msra.mxu0 0
    %691 = vmatprep.mubr.bf16.mxu0 0
    %692 = vmatmul.mubr.bf16.gmra.mxu0 %v654
    %v693 = vpop.f32.mrf.mxu0
    %v694 = vadd.f32 0.0, %v693
    %v695 = vpop.f32.mrf.mxu0
    %v696 = vpop.f32.mrf.mxu0
    %v697 = vpop.f32.mrf.mxu0
    %698 = vdwg.mxu0
    %699 = vrot.lane.b32.xlu0 %v255, 112
    %v700 = vpop.permute.xlu0 %699
    %701 = vrot.lane.b32.xlu0 %v269, 80
    %v702 = vpop.permute.xlu0 %701
    %v704 = vsel %vm273, %v700, 0
    %v707 = vsel %vm273, %v702, 0
    %709 = vmatprep.subr.bf16.mxu0 0
    %710 = vmatpush1.bf16.xpose.msra.mxu0 0
    %711 = vmatprep.subr.bf16.mxu0 0
    %712 = vmatpush1.bf16.xpose.msra.mxu0 0
    %713 = vmatprep.subr.bf16.mxu0 0
    %714 = vmatpush1.bf16.xpose.msra.mxu0 0
    %715 = vmatprep.subr.bf16.mxu0 0
    %716 = vmatpush1.bf16.xpose.msra.mxu0 0
    %717 = vmatprep.subr.bf16.mxu0 0
    %718 = vmatpush1.bf16.xpose.msra.mxu0 0
    %719 = vmatprep.subr.bf16.mxu0 0
    %720 = vmatpush1.bf16.xpose.msra.mxu0 0
    %721 = vmatprep.subr.bf16.mxu0 0
    %722 = vmatpush1.bf16.xpose.msra.mxu0 0
    %723 = vmatprep.subr.bf16.mxu0 0
    %724 = vmatpush1.bf16.xpose.msra.mxu0 %v707
    %725 = vmatprep.subr.bf16.mxu0 0
    %726 = vmatpush2.bf16.xpose.msra.mxu0 0
    %727 = vmatprep.subr.bf16.mxu0 0
    %728 = vmatpush2.bf16.xpose.msra.mxu0 0
    %729 = vmatprep.subr.bf16.mxu0 0
    %730 = vmatpush2.bf16.xpose.msra.mxu0 0
    %731 = vmatprep.subr.bf16.mxu0 0
    %732 = vmatpush2.bf16.xpose.msra.mxu0 0
    %733 = vmatprep.subr.bf16.mxu0 0
    %734 = vmatpush2.bf16.xpose.msra.mxu0 0
    %735 = vmatprep.subr.bf16.mxu0 0
    %736 = vmatpush2.bf16.xpose.msra.mxu0 0
    %737 = vmatprep.subr.bf16.mxu0 0
    %738 = vmatpush2.bf16.xpose.msra.mxu0 0
    %739 = vmatprep.subr.bf16.mxu0 0
    %740 = vmatpush2.bf16.xpose.msra.mxu0 0
    %741 = vmatprep.mubr.bf16.mxu0 0
    %742 = vmatmul.mubr.bf16.gmra.mxu0 %v704
    %v743 = vpop.f32.mrf.mxu0
    %v744 = vadd.f32 0.0, %v743
    %v745 = vpop.f32.mrf.mxu0
    %v746 = vpop.f32.mrf.mxu0
    %v747 = vpop.f32.mrf.mxu0
    %748 = vdwg.mxu0
    %749 = vrot.lane.b32.xlu0 %v237, 16
    %v750 = vpop.permute.xlu0 %749
    %751 = vrot.lane.b32.xlu0 %v240, 16
    %v752 = vpop.permute.xlu0 %751
    %755 = vxpose.xlu0.b32.start [1/16] %v750, 128
    %756 = vxpose.xlu0.b32.cont [2/16] %v752, 128
    %757 = vxpose.xlu0.b32.cont [3/16] 0.0, 128
    %758 = vxpose.xlu0.b32.cont [4/16] 0.0, 128
    %759 = vxpose.xlu0.b32.cont [5/16] 0.0, 128
    %760 = vxpose.xlu0.b32.cont [6/16] 0.0, 128
    %761 = vxpose.xlu0.b32.cont [7/16] 0.0, 128
    %762 = vxpose.xlu0.b32.cont [8/16] 0.0, 128
    %763 = vxpose.xlu0.b32.cont [9/16] 0.0, 128
    %764 = vxpose.xlu0.b32.cont [10/16] 0.0, 128
    %765 = vxpose.xlu0.b32.cont [11/16] 0.0, 128
    %766 = vxpose.xlu0.b32.cont [12/16] 0.0, 128
    %767 = vxpose.xlu0.b32.cont [13/16] 0.0, 128
    %768 = vxpose.xlu0.b32.cont [14/16] 0.0, 128
    %769 = vxpose.xlu0.b32.cont [15/16] 0.0, 128
    %770 = vxpose.xlu0.b32.end [16/16] 0.0, 128
    %v771 = vpop.trf.xlu0
    %v772 = vpop.trf.xlu0
    %v773 = vpop.trf.xlu0
    %v774 = vpop.trf.xlu0
    %v775 = vpop.trf.xlu0
    %v776 = vpop.trf.xlu0
    %v777 = vpop.trf.xlu0
    %v778 = vpop.trf.xlu0
    %v779 = vpop.trf.xlu0
    %v780 = vpop.trf.xlu0
    %v781 = vpop.trf.xlu0
    %v782 = vpop.trf.xlu0
    %v783 = vpop.trf.xlu0
    %v784 = vpop.trf.xlu0
    %v785 = vpop.trf.xlu0
    %v786 = vpop.trf.xlu0
    %v787 = vpack.c.bf16 %v771, %v771
    %788 = vrot.lane.b32.xlu0 %v267, 112
    %v789 = vpop.permute.xlu0 %788
    %v791 = vsel %vm273, %v789, 0
    %v794 = vsel %vm413, %v787, 0
    %796 = vmatprep.subr.bf16.mxu0 0
    %797 = vmatpush1.bf16.msra.mxu0 0
    %798 = vmatprep.subr.bf16.mxu0 0
    %799 = vmatpush1.bf16.msra.mxu0 0
    %800 = vmatprep.subr.bf16.mxu0 0
    %801 = vmatpush1.bf16.msra.mxu0 0
    %802 = vmatprep.subr.bf16.mxu0 0
    %803 = vmatpush1.bf16.msra.mxu0 0
    %804 = vmatprep.subr.bf16.mxu0 0
    %805 = vmatpush1.bf16.msra.mxu0 0
    %806 = vmatprep.subr.bf16.mxu0 0
    %807 = vmatpush1.bf16.msra.mxu0 0
    %808 = vmatprep.subr.bf16.mxu0 0
    %809 = vmatpush1.bf16.msra.mxu0 0
    %810 = vmatprep.subr.bf16.mxu0 0
    %811 = vmatpush1.bf16.msra.mxu0 %v794
    %812 = vmatprep.subr.bf16.mxu0 0
    %813 = vmatpush2.bf16.msra.mxu0 0
    %814 = vmatprep.subr.bf16.mxu0 0
    %815 = vmatpush2.bf16.msra.mxu0 0
    %816 = vmatprep.subr.bf16.mxu0 0
    %817 = vmatpush2.bf16.msra.mxu0 0
    %818 = vmatprep.subr.bf16.mxu0 0
    %819 = vmatpush2.bf16.msra.mxu0 0
    %820 = vmatprep.subr.bf16.mxu0 0
    %821 = vmatpush2.bf16.msra.mxu0 0
    %822 = vmatprep.subr.bf16.mxu0 0
    %823 = vmatpush2.bf16.msra.mxu0 0
    %824 = vmatprep.subr.bf16.mxu0 0
    %825 = vmatpush2.bf16.msra.mxu0 0
    %826 = vmatprep.subr.bf16.mxu0 0
    %827 = vmatpush2.bf16.msra.mxu0 0
    %828 = vmatprep.mubr.bf16.mxu0 0
    %829 = vmatmul.mubr.bf16.gmra.mxu0 %v791
    %v830 = vpop.f32.mrf.mxu0
    %v831 = vadd.f32 0.0, %v830
    %v832 = vpop.f32.mrf.mxu0
    %v833 = vpop.f32.mrf.mxu0
    %v834 = vadd.f32 0.0, %v833
    %v835 = vpop.f32.mrf.mxu0
    %836 = vdwg.mxu0
    %837 = vrot.lane.b32.xlu0 %v254, 104
    %v838 = vpop.permute.xlu0 %837
    %839 = vrot.lane.b32.xlu0 %v268, 72
    %v840 = vpop.permute.xlu0 %839
    %v842 = vsel %vm273, %v838, 0
    %v845 = vsel %vm273, %v840, 0
    %847 = vmatprep.subr.bf16.mxu0 0
    %848 = vmatpush1.bf16.xpose.msra.mxu0 0
    %849 = vmatprep.subr.bf16.mxu0 0
    %850 = vmatpush1.bf16.xpose.msra.mxu0 0
    %851 = vmatprep.subr.bf16.mxu0 0
    %852 = vmatpush1.bf16.xpose.msra.mxu0 0
    %853 = vmatprep.subr.bf16.mxu0 0
    %854 = vmatpush1.bf16.xpose.msra.mxu0 0
    %855 = vmatprep.subr.bf16.mxu0 0
    %856 = vmatpush1.bf16.xpose.msra.mxu0 0
    %857 = vmatprep.subr.bf16.mxu0 0
    %858 = vmatpush1.bf16.xpose.msra.mxu0 0
    %859 = vmatprep.subr.bf16.mxu0 0
    %860 = vmatpush1.bf16.xpose.msra.mxu0 0
    %861 = vmatprep.subr.bf16.mxu0 0
    %862 = vmatpush1.bf16.xpose.msra.mxu0 %v845
    %863 = vmatprep.subr.bf16.mxu0 0
    %864 = vmatpush2.bf16.xpose.msra.mxu0 0
    %865 = vmatprep.subr.bf16.mxu0 0
    %866 = vmatpush2.bf16.xpose.msra.mxu0 0
    %867 = vmatprep.subr.bf16.mxu0 0
    %868 = vmatpush2.bf16.xpose.msra.mxu0 0
    %869 = vmatprep.subr.bf16.mxu0 0
    %870 = vmatpush2.bf16.xpose.msra.mxu0 0
    %871 = vmatprep.subr.bf16.mxu0 0
    %872 = vmatpush2.bf16.xpose.msra.mxu0 0
    %873 = vmatprep.subr.bf16.mxu0 0
    %874 = vmatpush2.bf16.xpose.msra.mxu0 0
    %875 = vmatprep.subr.bf16.mxu0 0
    %876 = vmatpush2.bf16.xpose.msra.mxu0 0
    %877 = vmatprep.subr.bf16.mxu0 0
    %878 = vmatpush2.bf16.xpose.msra.mxu0 0
    %879 = vmatprep.mubr.bf16.mxu0 0
    %880 = vmatmul.mubr.bf16.gmra.mxu0 %v842
    %v881 = vpop.f32.mrf.mxu0
    %v882 = vadd.f32 0.0, %v881
    %v883 = vpop.f32.mrf.mxu0
    %v884 = vpop.f32.mrf.mxu0
    %v885 = vpop.f32.mrf.mxu0
    %886 = vdwg.mxu0
    %887 = vrot.lane.b32.xlu0 %v255, 104
    %v888 = vpop.permute.xlu0 %887
    %889 = vrot.lane.b32.xlu0 %v269, 72
    %v890 = vpop.permute.xlu0 %889
    %v892 = vsel %vm273, %v888, 0
    %v895 = vsel %vm273, %v890, 0
    %897 = vmatprep.subr.bf16.mxu0 0
    %898 = vmatpush1.bf16.xpose.msra.mxu0 0
    %899 = vmatprep.subr.bf16.mxu0 0
    %900 = vmatpush1.bf16.xpose.msra.mxu0 0
    %901 = vmatprep.subr.bf16.mxu0 0
    %902 = vmatpush1.bf16.xpose.msra.mxu0 0
    %903 = vmatprep.subr.bf16.mxu0 0
    %904 = vmatpush1.bf16.xpose.msra.mxu0 0
    %905 = vmatprep.subr.bf16.mxu0 0
    %906 = vmatpush1.bf16.xpose.msra.mxu0 0
    %907 = vmatprep.subr.bf16.mxu0 0
    %908 = vmatpush1.bf16.xpose.msra.mxu0 0
    %909 = vmatprep.subr.bf16.mxu0 0
    %910 = vmatpush1.bf16.xpose.msra.mxu0 0
    %911 = vmatprep.subr.bf16.mxu0 0
    %912 = vmatpush1.bf16.xpose.msra.mxu0 %v895
    %913 = vmatprep.subr.bf16.mxu0 0
    %914 = vmatpush2.bf16.xpose.msra.mxu0 0
    %915 = vmatprep.subr.bf16.mxu0 0
    %916 = vmatpush2.bf16.xpose.msra.mxu0 0
    %917 = vmatprep.subr.bf16.mxu0 0
    %918 = vmatpush2.bf16.xpose.msra.mxu0 0
    %919 = vmatprep.subr.bf16.mxu0 0
    %920 = vmatpush2.bf16.xpose.msra.mxu0 0
    %921 = vmatprep.subr.bf16.mxu0 0
    %922 = vmatpush2.bf16.xpose.msra.mxu0 0
    %923 = vmatprep.subr.bf16.mxu0 0
    %924 = vmatpush2.bf16.xpose.msra.mxu0 0
    %925 = vmatprep.subr.bf16.mxu0 0
    %926 = vmatpush2.bf16.xpose.msra.mxu0 0
    %927 = vmatprep.subr.bf16.mxu0 0
    %928 = vmatpush2.bf16.xpose.msra.mxu0 0
    %929 = vmatprep.mubr.bf16.mxu0 0
    %930 = vmatmul.mubr.bf16.gmra.mxu0 %v892
    %v931 = vpop.f32.mrf.mxu0
    %v932 = vadd.f32 0.0, %v931
    %v933 = vpop.f32.mrf.mxu0
    %v934 = vpop.f32.mrf.mxu0
    %v935 = vpop.f32.mrf.mxu0
    %936 = vdwg.mxu0
    %937 = vrot.lane.b32.xlu0 %v237, 8
    %v938 = vpop.permute.xlu0 %937
    %939 = vrot.lane.b32.xlu0 %v240, 8
    %v940 = vpop.permute.xlu0 %939
    %943 = vxpose.xlu0.b32.start [1/16] %v938, 128
    %944 = vxpose.xlu0.b32.cont [2/16] %v940, 128
    %945 = vxpose.xlu0.b32.cont [3/16] 0.0, 128
    %946 = vxpose.xlu0.b32.cont [4/16] 0.0, 128
    %947 = vxpose.xlu0.b32.cont [5/16] 0.0, 128
    %948 = vxpose.xlu0.b32.cont [6/16] 0.0, 128
    %949 = vxpose.xlu0.b32.cont [7/16] 0.0, 128
    %950 = vxpose.xlu0.b32.cont [8/16] 0.0, 128
    %951 = vxpose.xlu0.b32.cont [9/16] 0.0, 128
    %952 = vxpose.xlu0.b32.cont [10/16] 0.0, 128
    %953 = vxpose.xlu0.b32.cont [11/16] 0.0, 128
    %954 = vxpose.xlu0.b32.cont [12/16] 0.0, 128
    %955 = vxpose.xlu0.b32.cont [13/16] 0.0, 128
    %956 = vxpose.xlu0.b32.cont [14/16] 0.0, 128
    %957 = vxpose.xlu0.b32.cont [15/16] 0.0, 128
    %958 = vxpose.xlu0.b32.end [16/16] 0.0, 128
    %v959 = vpop.trf.xlu0
    %v960 = vpop.trf.xlu0
    %v961 = vpop.trf.xlu0
    %v962 = vpop.trf.xlu0
    %v963 = vpop.trf.xlu0
    %v964 = vpop.trf.xlu0
    %v965 = vpop.trf.xlu0
    %v966 = vpop.trf.xlu0
    %v967 = vpop.trf.xlu0
    %v968 = vpop.trf.xlu0
    %v969 = vpop.trf.xlu0
    %v970 = vpop.trf.xlu0
    %v971 = vpop.trf.xlu0
    %v972 = vpop.trf.xlu0
    %v973 = vpop.trf.xlu0
    %v974 = vpop.trf.xlu0
    %v975 = vpack.c.bf16 %v959, %v959
    %976 = vrot.lane.b32.xlu0 %v267, 104
    %v977 = vpop.permute.xlu0 %976
    %v979 = vsel %vm273, %v977, 0
    %v982 = vsel %vm413, %v975, 0
    %984 = vmatprep.subr.bf16.mxu0 0
    %985 = vmatpush1.bf16.msra.mxu0 0
    %986 = vmatprep.subr.bf16.mxu0 0
    %987 = vmatpush1.bf16.msra.mxu0 0
    %988 = vmatprep.subr.bf16.mxu0 0
    %989 = vmatpush1.bf16.msra.mxu0 0
    %990 = vmatprep.subr.bf16.mxu0 0
    %991 = vmatpush1.bf16.msra.mxu0 0
    %992 = vmatprep.subr.bf16.mxu0 0
    %993 = vmatpush1.bf16.msra.mxu0 0
    %994 = vmatprep.subr.bf16.mxu0 0
    %995 = vmatpush1.bf16.msra.mxu0 0
    %996 = vmatprep.subr.bf16.mxu0 0
    %997 = vmatpush1.bf16.msra.mxu0 0
    %998 = vmatprep.subr.bf16.mxu0 0
    %999 = vmatpush1.bf16.msra.mxu0 %v982
    %1000 = vmatprep.subr.bf16.mxu0 0
    %1001 = vmatpush2.bf16.msra.mxu0 0
    %1002 = vmatprep.subr.bf16.mxu0 0
    %1003 = vmatpush2.bf16.msra.mxu0 0
    %1004 = vmatprep.subr.bf16.mxu0 0
    %1005 = vmatpush2.bf16.msra.mxu0 0
    %1006 = vmatprep.subr.bf16.mxu0 0
    %1007 = vmatpush2.bf16.msra.mxu0 0
    %1008 = vmatprep.subr.bf16.mxu0 0
    %1009 = vmatpush2.bf16.msra.mxu0 0
    %1010 = vmatprep.subr.bf16.mxu0 0
    %1011 = vmatpush2.bf16.msra.mxu0 0
    %1012 = vmatprep.subr.bf16.mxu0 0
    %1013 = vmatpush2.bf16.msra.mxu0 0
    %1014 = vmatprep.subr.bf16.mxu0 0
    %1015 = vmatpush2.bf16.msra.mxu0 0
    %1016 = vmatprep.mubr.bf16.mxu0 0
    %1017 = vmatmul.mubr.bf16.gmra.mxu0 %v979
    %v1018 = vpop.f32.mrf.mxu0
    %v1019 = vadd.f32 0.0, %v1018
    %v1020 = vpop.f32.mrf.mxu0
    %v1021 = vpop.f32.mrf.mxu0
    %v1022 = vadd.f32 0.0, %v1021
    %v1023 = vpop.f32.mrf.mxu0
    %1024 = vdwg.mxu0
    %1033 = vrot.lane.b32.xlu0 %v452, 1
    %v1034 = vpop.permute.xlu0 %1033
    %1035 = vrot.lane.b32.xlu0 %v455, 1
    %v1036 = vpop.permute.xlu0 %1035
    %1037 = vrot.lane.b32.xlu0 %v643, 1
    %v1038 = vpop.permute.xlu0 %1037
    %1039 = vrot.lane.b32.xlu0 %v646, 1
    %v1040 = vpop.permute.xlu0 %1039
    %1041 = vrot.lane.b32.xlu0 %v831, 1
    %v1042 = vpop.permute.xlu0 %1041
    %1043 = vrot.lane.b32.xlu0 %v834, 1
    %v1044 = vpop.permute.xlu0 %1043
    %1045 = vrot.lane.b32.xlu0 %v1019, 1
    %v1046 = vpop.permute.xlu0 %1045
    %1047 = vrot.lane.b32.xlu0 %v1022, 1
    %v1048 = vpop.permute.xlu0 %1047
    %1057 = vrot.lane.b32.xlu0 %v452, 2
    %v1058 = vpop.permute.xlu0 %1057
    %1059 = vrot.lane.b32.xlu0 %v455, 2
    %v1060 = vpop.permute.xlu0 %1059
    %1061 = vrot.lane.b32.xlu0 %v643, 2
    %v1062 = vpop.permute.xlu0 %1061
    %1063 = vrot.lane.b32.xlu0 %v646, 2
    %v1064 = vpop.permute.xlu0 %1063
    %1065 = vrot.lane.b32.xlu0 %v831, 2
    %v1066 = vpop.permute.xlu0 %1065
    %1067 = vrot.lane.b32.xlu0 %v834, 2
    %v1068 = vpop.permute.xlu0 %1067
    %1069 = vrot.lane.b32.xlu0 %v1019, 2
    %v1070 = vpop.permute.xlu0 %1069
    %1071 = vrot.lane.b32.xlu0 %v1022, 2
    %v1072 = vpop.permute.xlu0 %1071
    %1081 = vrot.lane.b32.xlu0 %v452, 3
    %v1082 = vpop.permute.xlu0 %1081
    %1083 = vrot.lane.b32.xlu0 %v455, 3
    %v1084 = vpop.permute.xlu0 %1083
    %1085 = vrot.lane.b32.xlu0 %v643, 3
    %v1086 = vpop.permute.xlu0 %1085
    %1087 = vrot.lane.b32.xlu0 %v646, 3
    %v1088 = vpop.permute.xlu0 %1087
    %1089 = vrot.lane.b32.xlu0 %v831, 3
    %v1090 = vpop.permute.xlu0 %1089
    %1091 = vrot.lane.b32.xlu0 %v834, 3
    %v1092 = vpop.permute.xlu0 %1091
    %1093 = vrot.lane.b32.xlu0 %v1019, 3
    %v1094 = vpop.permute.xlu0 %1093
    %1095 = vrot.lane.b32.xlu0 %v1022, 3
    %v1096 = vpop.permute.xlu0 %1095
    %1105 = vrot.lane.b32.xlu0 %v452, 4
    %v1106 = vpop.permute.xlu0 %1105
    %1107 = vrot.lane.b32.xlu0 %v455, 4
    %v1108 = vpop.permute.xlu0 %1107
    %1109 = vrot.lane.b32.xlu0 %v643, 4
    %v1110 = vpop.permute.xlu0 %1109
    %1111 = vrot.lane.b32.xlu0 %v646, 4
    %v1112 = vpop.permute.xlu0 %1111
    %1113 = vrot.lane.b32.xlu0 %v831, 4
    %v1114 = vpop.permute.xlu0 %1113
    %1115 = vrot.lane.b32.xlu0 %v834, 4
    %v1116 = vpop.permute.xlu0 %1115
    %1117 = vrot.lane.b32.xlu0 %v1019, 4
    %v1118 = vpop.permute.xlu0 %1117
    %1119 = vrot.lane.b32.xlu0 %v1022, 4
    %v1120 = vpop.permute.xlu0 %1119
    %1129 = vrot.lane.b32.xlu0 %v452, 5
    %v1130 = vpop.permute.xlu0 %1129
    %1131 = vrot.lane.b32.xlu0 %v455, 5
    %v1132 = vpop.permute.xlu0 %1131
    %1133 = vrot.lane.b32.xlu0 %v643, 5
    %v1134 = vpop.permute.xlu0 %1133
    %1135 = vrot.lane.b32.xlu0 %v646, 5
    %v1136 = vpop.permute.xlu0 %1135
    %1137 = vrot.lane.b32.xlu0 %v831, 5
    %v1138 = vpop.permute.xlu0 %1137
    %1139 = vrot.lane.b32.xlu0 %v834, 5
    %v1140 = vpop.permute.xlu0 %1139
    %1141 = vrot.lane.b32.xlu0 %v1019, 5
    %v1142 = vpop.permute.xlu0 %1141
    %1143 = vrot.lane.b32.xlu0 %v1022, 5
    %v1144 = vpop.permute.xlu0 %1143
    %1153 = vrot.lane.b32.xlu0 %v452, 6
    %v1154 = vpop.permute.xlu0 %1153
    %1155 = vrot.lane.b32.xlu0 %v455, 6
    %v1156 = vpop.permute.xlu0 %1155
    %1157 = vrot.lane.b32.xlu0 %v643, 6
    %v1158 = vpop.permute.xlu0 %1157
    %1159 = vrot.lane.b32.xlu0 %v646, 6
    %v1160 = vpop.permute.xlu0 %1159
    %1161 = vrot.lane.b32.xlu0 %v831, 6
    %v1162 = vpop.permute.xlu0 %1161
    %1163 = vrot.lane.b32.xlu0 %v834, 6
    %v1164 = vpop.permute.xlu0 %1163
    %1165 = vrot.lane.b32.xlu0 %v1019, 6
    %v1166 = vpop.permute.xlu0 %1165
    %1167 = vrot.lane.b32.xlu0 %v1022, 6
    %v1168 = vpop.permute.xlu0 %1167
    %1177 = vrot.lane.b32.xlu0 %v452, 7
    %v1178 = vpop.permute.xlu0 %1177
    %1179 = vrot.lane.b32.xlu0 %v455, 7
    %v1180 = vpop.permute.xlu0 %1179
    %1181 = vrot.lane.b32.xlu0 %v643, 7
    %v1182 = vpop.permute.xlu0 %1181
    %1183 = vrot.lane.b32.xlu0 %v646, 7
    %v1184 = vpop.permute.xlu0 %1183
    %1185 = vrot.lane.b32.xlu0 %v831, 7
    %v1186 = vpop.permute.xlu0 %1185
    %1187 = vrot.lane.b32.xlu0 %v834, 7
    %v1188 = vpop.permute.xlu0 %1187
    %1189 = vrot.lane.b32.xlu0 %v1019, 7
    %v1190 = vpop.permute.xlu0 %1189
    %1191 = vrot.lane.b32.xlu0 %v1022, 7
    %v1192 = vpop.permute.xlu0 %1191
    %vm1201 = vcmask 1040384
    %v1202 = vsel %vm1201, %v452, %v1034
    %v1203 = vsel %vm1201, %v455, %v1036
    %v1204 = vsel %vm1201, %v643, %v1038
    %v1205 = vsel %vm1201, %v646, %v1040
    %v1206 = vsel %vm1201, %v831, %v1042
    %v1207 = vsel %vm1201, %v834, %v1044
    %v1208 = vsel %vm1201, %v1019, %v1046
    %v1209 = vsel %vm1201, %v1022, %v1048
    %vm1210 = vcmask 1041408
    %v1211 = vsel %vm1210, %v1202, %v1058
    %v1212 = vsel %vm1210, %v1203, %v1060
    %v1213 = vsel %vm1210, %v1204, %v1062
    %v1214 = vsel %vm1210, %v1205, %v1064
    %v1215 = vsel %vm1210, %v1206, %v1066
    %v1216 = vsel %vm1210, %v1207, %v1068
    %v1217 = vsel %vm1210, %v1208, %v1070
    %v1218 = vsel %vm1210, %v1209, %v1072
    %vm1219 = vcmask 1042432
    %v1220 = vsel %vm1219, %v1211, %v1082
    %v1221 = vsel %vm1219, %v1212, %v1084
    %v1222 = vsel %vm1219, %v1213, %v1086
    %v1223 = vsel %vm1219, %v1214, %v1088
    %v1224 = vsel %vm1219, %v1215, %v1090
    %v1225 = vsel %vm1219, %v1216, %v1092
    %v1226 = vsel %vm1219, %v1217, %v1094
    %v1227 = vsel %vm1219, %v1218, %v1096
    %v1228 = vsel %vm413, %v1220, %v1106
    %v1229 = vsel %vm413, %v1221, %v1108
    %v1230 = vsel %vm413, %v1222, %v1110
    %v1231 = vsel %vm413, %v1223, %v1112
    %v1232 = vsel %vm413, %v1224, %v1114
    %v1233 = vsel %vm413, %v1225, %v1116
    %v1234 = vsel %vm413, %v1226, %v1118
    %v1235 = vsel %vm413, %v1227, %v1120
    %vm1236 = vcmask 1044480
    %v1237 = vsel %vm1236, %v1228, %v1130
    %v1238 = vsel %vm1236, %v1229, %v1132
    %v1239 = vsel %vm1236, %v1230, %v1134
    %v1240 = vsel %vm1236, %v1231, %v1136
    %v1241 = vsel %vm1236, %v1232, %v1138
    %v1242 = vsel %vm1236, %v1233, %v1140
    %v1243 = vsel %vm1236, %v1234, %v1142
    %v1244 = vsel %vm1236, %v1235, %v1144
    %vm1245 = vcmask 1045504
    %v1246 = vsel %vm1245, %v1237, %v1154
    %v1247 = vsel %vm1245, %v1238, %v1156
    %v1248 = vsel %vm1245, %v1239, %v1158
    %v1249 = vsel %vm1245, %v1240, %v1160
    %v1250 = vsel %vm1245, %v1241, %v1162
    %v1251 = vsel %vm1245, %v1242, %v1164
    %v1252 = vsel %vm1245, %v1243, %v1166
    %v1253 = vsel %vm1245, %v1244, %v1168
    %vm1254 = vcmask 1046528
    %v1255 = vsel %vm1254, %v1246, %v1178
    %v1256 = vsel %vm1254, %v1247, %v1180
    %v1257 = vsel %vm1254, %v1248, %v1182
    %v1258 = vsel %vm1254, %v1249, %v1184
    %v1259 = vsel %vm1254, %v1250, %v1186
    %v1260 = vsel %vm1254, %v1251, %v1188
    %v1261 = vsel %vm1254, %v1252, %v1190
    %v1262 = vsel %vm1254, %v1253, %v1192
    %1271 = vrot.lane.b32.xlu0 %v1255, 120
    %v1272 = vpop.permute.xlu0 %1271
    %1273 = vrot.lane.b32.xlu0 %v1256, 120
    %v1274 = vpop.permute.xlu0 %1273
    %1275 = vrot.lane.b32.xlu0 %v1257, 120
    %v1276 = vpop.permute.xlu0 %1275
    %1277 = vrot.lane.b32.xlu0 %v1258, 120
    %v1278 = vpop.permute.xlu0 %1277
    %1279 = vrot.lane.b32.xlu0 %v1259, 120
    %v1280 = vpop.permute.xlu0 %1279
    %1281 = vrot.lane.b32.xlu0 %v1260, 120
    %v1282 = vpop.permute.xlu0 %1281
    %1283 = vrot.lane.b32.xlu0 %v1261, 120
    %v1284 = vpop.permute.xlu0 %1283
    %1285 = vrot.lane.b32.xlu0 %v1262, 120
    %v1286 = vpop.permute.xlu0 %1285
    %v1295 = vadd.f32 %v315, %v1272
    %v1296 = vadd.f32 %v364, %v1274
    %v1297 = vadd.f32 %v504, %v1276
    %v1298 = vadd.f32 %v555, %v1278
    %v1299 = vadd.f32 %v694, %v1280
    %v1300 = vadd.f32 %v744, %v1282
    %v1301 = vadd.f32 %v882, %v1284
    %v1302 = vadd.f32 %v932, %v1286
    %v1303 = vadd.f32 %v1295, %v163
    %v1304 = vadd.f32 %v1296, %v164
    %v1305 = vadd.f32 %v1297, %v163
    %v1306 = vadd.f32 %v1298, %v164
    %v1307 = vadd.f32 %v1299, %v163
    %v1308 = vadd.f32 %v1300, %v164
    %v1309 = vadd.f32 %v1301, %v163
    %v1310 = vadd.f32 %v1302, %v164
    %v1311 = vsel %vm273, %v1303, -inf
    %1312 = vmax.xlane.f32.xlu0 %v1311
    %v1313 = vpop.xlane.xlu0 %1312
    %v1314 = vsel %vm273, %v1304, -inf
    %1315 = vmax.xlane.f32.xlu0 %v1314
    %v1316 = vpop.xlane.xlu0 %1315
    %v1317 = vsel %vm273, %v1305, -inf
    %1318 = vmax.xlane.f32.xlu0 %v1317
    %v1319 = vpop.xlane.xlu0 %1318
    %v1320 = vsel %vm273, %v1306, -inf
    %1321 = vmax.xlane.f32.xlu0 %v1320
    %v1322 = vpop.xlane.xlu0 %1321
    %v1323 = vsel %vm273, %v1307, -inf
    %1324 = vmax.xlane.f32.xlu0 %v1323
    %v1325 = vpop.xlane.xlu0 %1324
    %v1326 = vsel %vm273, %v1308, -inf
    %1327 = vmax.xlane.f32.xlu0 %v1326
    %v1328 = vpop.xlane.xlu0 %1327
    %v1329 = vsel %vm273, %v1309, -inf
    %1330 = vmax.xlane.f32.xlu0 %v1329
    %v1331 = vpop.xlane.xlu0 %1330
    %v1332 = vsel %vm273, %v1310, -inf
    %1333 = vmax.xlane.f32.xlu0 %v1332
    %v1334 = vpop.xlane.xlu0 %1333
    %v1335 = vsub.f32 %v1303, %v1313
    %v1336 = vsub.f32 %v1304, %v1316
    %v1337 = vsub.f32 %v1305, %v1319
    %v1338 = vsub.f32 %v1306, %v1322
    %v1339 = vsub.f32 %v1307, %v1325
    %v1340 = vsub.f32 %v1308, %v1328
    %v1341 = vsub.f32 %v1309, %v1331
    %v1342 = vsub.f32 %v1310, %v1334
    %v1343 = vmul.f32 %v1335, 1.442695
    %v1344 = vpow.pop %v1343
    %v1345 = vmul.f32 %v1336, 1.442695
    %v1346 = vpow.pop %v1345
    %v1347 = vmul.f32 %v1337, 1.442695
    %v1348 = vpow.pop %v1347
    %v1349 = vmul.f32 %v1338, 1.442695
    %v1350 = vpow.pop %v1349
    %v1351 = vmul.f32 %v1339, 1.442695
    %v1352 = vpow.pop %v1351
    %v1353 = vmul.f32 %v1340, 1.442695
    %v1354 = vpow.pop %v1353
    %v1355 = vmul.f32 %v1341, 1.442695
    %v1356 = vpow.pop %v1355
    %v1357 = vmul.f32 %v1342, 1.442695
    %v1358 = vpow.pop %v1357
    %v1359 = vsel %vm273, %v1344, 0.0
    %1360 = vadd.xlane.f32.xlu0 %v1359
    %v1361 = vpop.xlane.xlu0 %1360
    %v1362 = vsel %vm273, %v1346, 0.0
    %1363 = vadd.xlane.f32.xlu0 %v1362
    %v1364 = vpop.xlane.xlu0 %1363
    %v1365 = vsel %vm273, %v1348, 0.0
    %1366 = vadd.xlane.f32.xlu0 %v1365
    %v1367 = vpop.xlane.xlu0 %1366
    %v1368 = vsel %vm273, %v1350, 0.0
    %1369 = vadd.xlane.f32.xlu0 %v1368
    %v1370 = vpop.xlane.xlu0 %1369
    %v1371 = vsel %vm273, %v1352, 0.0
    %1372 = vadd.xlane.f32.xlu0 %v1371
    %v1373 = vpop.xlane.xlu0 %1372
    %v1374 = vsel %vm273, %v1354, 0.0
    %1375 = vadd.xlane.f32.xlu0 %v1374
    %v1376 = vpop.xlane.xlu0 %1375
    %v1377 = vsel %vm273, %v1356, 0.0
    %1378 = vadd.xlane.f32.xlu0 %v1377
    %v1379 = vpop.xlane.xlu0 %1378
    %v1380 = vsel %vm273, %v1358, 0.0
    %1381 = vadd.xlane.f32.xlu0 %v1380
    %v1382 = vpop.xlane.xlu0 %1381
    %v1383 = vrcp.pop %v1361
    %v1384 = vrcp.pop %v1364
    %v1385 = vrcp.pop %v1367
    %v1386 = vrcp.pop %v1370
    %v1387 = vrcp.pop %v1373
    %v1388 = vrcp.pop %v1376
    %v1389 = vrcp.pop %v1379
    %v1390 = vrcp.pop %v1382
    %v1391 = vmul.f32 %v1344, %v1383
    %v1392 = vmul.f32 %v1346, %v1384
    %v1393 = vmul.f32 %v1348, %v1385
    %v1394 = vmul.f32 %v1350, %v1386
    %v1395 = vmul.f32 %v1352, %v1387
    %v1396 = vmul.f32 %v1354, %v1388
    %v1397 = vmul.f32 %v1356, %v1389
    %v1398 = vmul.f32 %v1358, %v1390
    %v1399 = vpack.c.bf16 %v1391, %v1391
    %v1400 = vpack.c.bf16 %v1392, %v1392
    %v1401 = vpack.c.bf16 %v1393, %v1393
    %v1402 = vpack.c.bf16 %v1394, %v1394
    %v1403 = vpack.c.bf16 %v1395, %v1395
    %v1404 = vpack.c.bf16 %v1396, %v1396
    %v1405 = vpack.c.bf16 %v1397, %v1397
    %v1406 = vpack.c.bf16 %v1398, %v1398
    %1407 = vrot.lane.b32.xlu0 %v268, 64
    %v1408 = vpop.permute.xlu0 %1407
    %v1410 = vsel %vm273, %v1399, 0
    %v1413 = vsel %vm413, %v1408, 0
    %1415 = vmatprep.subr.bf16.mxu0 0
    %1416 = vmatpush1.bf16.msra.mxu0 0
    %1417 = vmatprep.subr.bf16.mxu0 0
    %1418 = vmatpush1.bf16.msra.mxu0 0
    %1419 = vmatprep.subr.bf16.mxu0 0
    %1420 = vmatpush1.bf16.msra.mxu0 0
    %1421 = vmatprep.subr.bf16.mxu0 0
    %1422 = vmatpush1.bf16.msra.mxu0 0
    %1423 = vmatprep.subr.bf16.mxu0 0
    %1424 = vmatpush1.bf16.msra.mxu0 0
    %1425 = vmatprep.subr.bf16.mxu0 0
    %1426 = vmatpush1.bf16.msra.mxu0 0
    %1427 = vmatprep.subr.bf16.mxu0 0
    %1428 = vmatpush1.bf16.msra.mxu0 0
    %1429 = vmatprep.subr.bf16.mxu0 0
    %1430 = vmatpush1.bf16.msra.mxu0 %v1413
    %1431 = vmatprep.subr.bf16.mxu0 0
    %1432 = vmatpush2.bf16.msra.mxu0 0
    %1433 = vmatprep.subr.bf16.mxu0 0
    %1434 = vmatpush2.bf16.msra.mxu0 0
    %1435 = vmatprep.subr.bf16.mxu0 0
    %1436 = vmatpush2.bf16.msra.mxu0 0
    %1437 = vmatprep.subr.bf16.mxu0 0
    %1438 = vmatpush2.bf16.msra.mxu0 0
    %1439 = vmatprep.subr.bf16.mxu0 0
    %1440 = vmatpush2.bf16.msra.mxu0 0
    %1441 = vmatprep.subr.bf16.mxu0 0
    %1442 = vmatpush2.bf16.msra.mxu0 0
    %1443 = vmatprep.subr.bf16.mxu0 0
    %1444 = vmatpush2.bf16.msra.mxu0 0
    %1445 = vmatprep.subr.bf16.mxu0 0
    %1446 = vmatpush2.bf16.msra.mxu0 0
    %1447 = vmatprep.mubr.bf16.mxu0 0
    %1448 = vmatmul.mubr.bf16.gmra.mxu0 %v1410
    %v1449 = vpop.f32.mrf.mxu0
    %v1450 = vadd.f32 0.0, %v1449
    %v1451 = vpop.f32.mrf.mxu0
    %v1452 = vpop.f32.mrf.mxu0
    %v1453 = vpop.f32.mrf.mxu0
    %1454 = vdwg.mxu0
    %1455 = vrot.lane.b32.xlu0 %v269, 64
    %v1456 = vpop.permute.xlu0 %1455
    %v1458 = vsel %vm273, %v1400, 0
    %v1461 = vsel %vm413, %v1456, 0
    %1463 = vmatprep.subr.bf16.mxu0 0
    %1464 = vmatpush1.bf16.msra.mxu0 0
    %1465 = vmatprep.subr.bf16.mxu0 0
    %1466 = vmatpush1.bf16.msra.mxu0 0
    %1467 = vmatprep.subr.bf16.mxu0 0
    %1468 = vmatpush1.bf16.msra.mxu0 0
    %1469 = vmatprep.subr.bf16.mxu0 0
    %1470 = vmatpush1.bf16.msra.mxu0 0
    %1471 = vmatprep.subr.bf16.mxu0 0
    %1472 = vmatpush1.bf16.msra.mxu0 0
    %1473 = vmatprep.subr.bf16.mxu0 0
    %1474 = vmatpush1.bf16.msra.mxu0 0
    %1475 = vmatprep.subr.bf16.mxu0 0
    %1476 = vmatpush1.bf16.msra.mxu0 0
    %1477 = vmatprep.subr.bf16.mxu0 0
    %1478 = vmatpush1.bf16.msra.mxu0 %v1461
    %1479 = vmatprep.subr.bf16.mxu0 0
    %1480 = vmatpush2.bf16.msra.mxu0 0
    %1481 = vmatprep.subr.bf16.mxu0 0
    %1482 = vmatpush2.bf16.msra.mxu0 0
    %1483 = vmatprep.subr.bf16.mxu0 0
    %1484 = vmatpush2.bf16.msra.mxu0 0
    %1485 = vmatprep.subr.bf16.mxu0 0
    %1486 = vmatpush2.bf16.msra.mxu0 0
    %1487 = vmatprep.subr.bf16.mxu0 0
    %1488 = vmatpush2.bf16.msra.mxu0 0
    %1489 = vmatprep.subr.bf16.mxu0 0
    %1490 = vmatpush2.bf16.msra.mxu0 0
    %1491 = vmatprep.subr.bf16.mxu0 0
    %1492 = vmatpush2.bf16.msra.mxu0 0
    %1493 = vmatprep.subr.bf16.mxu0 0
    %1494 = vmatpush2.bf16.msra.mxu0 0
    %1495 = vmatprep.mubr.bf16.mxu0 0
    %1496 = vmatmul.mubr.bf16.gmra.mxu0 %v1458
    %v1497 = vpop.f32.mrf.mxu0
    %v1498 = vadd.f32 0.0, %v1497
    %v1499 = vpop.f32.mrf.mxu0
    %v1500 = vpop.f32.mrf.mxu0
    %v1501 = vpop.f32.mrf.mxu0
    %1502 = vdwg.mxu0
    %1503 = vrot.lane.b32.xlu0 %v268, 56
    %v1504 = vpop.permute.xlu0 %1503
    %v1506 = vsel %vm273, %v1401, 0
    %v1509 = vsel %vm413, %v1504, 0
    %1511 = vmatprep.subr.bf16.mxu0 0
    %1512 = vmatpush1.bf16.msra.mxu0 0
    %1513 = vmatprep.subr.bf16.mxu0 0
    %1514 = vmatpush1.bf16.msra.mxu0 0
    %1515 = vmatprep.subr.bf16.mxu0 0
    %1516 = vmatpush1.bf16.msra.mxu0 0
    %1517 = vmatprep.subr.bf16.mxu0 0
    %1518 = vmatpush1.bf16.msra.mxu0 0
    %1519 = vmatprep.subr.bf16.mxu0 0
    %1520 = vmatpush1.bf16.msra.mxu0 0
    %1521 = vmatprep.subr.bf16.mxu0 0
    %1522 = vmatpush1.bf16.msra.mxu0 0
    %1523 = vmatprep.subr.bf16.mxu0 0
    %1524 = vmatpush1.bf16.msra.mxu0 0
    %1525 = vmatprep.subr.bf16.mxu0 0
    %1526 = vmatpush1.bf16.msra.mxu0 %v1509
    %1527 = vmatprep.subr.bf16.mxu0 0
    %1528 = vmatpush2.bf16.msra.mxu0 0
    %1529 = vmatprep.subr.bf16.mxu0 0
    %1530 = vmatpush2.bf16.msra.mxu0 0
    %1531 = vmatprep.subr.bf16.mxu0 0
    %1532 = vmatpush2.bf16.msra.mxu0 0
    %1533 = vmatprep.subr.bf16.mxu0 0
    %1534 = vmatpush2.bf16.msra.mxu0 0
    %1535 = vmatprep.subr.bf16.mxu0 0
    %1536 = vmatpush2.bf16.msra.mxu0 0
    %1537 = vmatprep.subr.bf16.mxu0 0
    %1538 = vmatpush2.bf16.msra.mxu0 0
    %1539 = vmatprep.subr.bf16.mxu0 0
    %1540 = vmatpush2.bf16.msra.mxu0 0
    %1541 = vmatprep.subr.bf16.mxu0 0
    %1542 = vmatpush2.bf16.msra.mxu0 0
    %1543 = vmatprep.mubr.bf16.mxu0 0
    %1544 = vmatmul.mubr.bf16.gmra.mxu0 %v1506
    %v1545 = vpop.f32.mrf.mxu0
    %v1546 = vadd.f32 0.0, %v1545
    %v1547 = vpop.f32.mrf.mxu0
    %v1548 = vpop.f32.mrf.mxu0
    %v1549 = vpop.f32.mrf.mxu0
    %1550 = vdwg.mxu0
    %1551 = vrot.lane.b32.xlu0 %v269, 56
    %v1552 = vpop.permute.xlu0 %1551
    %v1554 = vsel %vm273, %v1402, 0
    %v1557 = vsel %vm413, %v1552, 0
    %1559 = vmatprep.subr.bf16.mxu0 0
    %1560 = vmatpush1.bf16.msra.mxu0 0
    %1561 = vmatprep.subr.bf16.mxu0 0
    %1562 = vmatpush1.bf16.msra.mxu0 0
    %1563 = vmatprep.subr.bf16.mxu0 0
    %1564 = vmatpush1.bf16.msra.mxu0 0
    %1565 = vmatprep.subr.bf16.mxu0 0
    %1566 = vmatpush1.bf16.msra.mxu0 0
    %1567 = vmatprep.subr.bf16.mxu0 0
    %1568 = vmatpush1.bf16.msra.mxu0 0
    %1569 = vmatprep.subr.bf16.mxu0 0
    %1570 = vmatpush1.bf16.msra.mxu0 0
    %1571 = vmatprep.subr.bf16.mxu0 0
    %1572 = vmatpush1.bf16.msra.mxu0 0
    %1573 = vmatprep.subr.bf16.mxu0 0
    %1574 = vmatpush1.bf16.msra.mxu0 %v1557
    %1575 = vmatprep.subr.bf16.mxu0 0
    %1576 = vmatpush2.bf16.msra.mxu0 0
    %1577 = vmatprep.subr.bf16.mxu0 0
    %1578 = vmatpush2.bf16.msra.mxu0 0
    %1579 = vmatprep.subr.bf16.mxu0 0
    %1580 = vmatpush2.bf16.msra.mxu0 0
    %1581 = vmatprep.subr.bf16.mxu0 0
    %1582 = vmatpush2.bf16.msra.mxu0 0
    %1583 = vmatprep.subr.bf16.mxu0 0
    %1584 = vmatpush2.bf16.msra.mxu0 0
    %1585 = vmatprep.subr.bf16.mxu0 0
    %1586 = vmatpush2.bf16.msra.mxu0 0
    %1587 = vmatprep.subr.bf16.mxu0 0
    %1588 = vmatpush2.bf16.msra.mxu0 0
    %1589 = vmatprep.subr.bf16.mxu0 0
    %1590 = vmatpush2.bf16.msra.mxu0 0
    %1591 = vmatprep.mubr.bf16.mxu0 0
    %1592 = vmatmul.mubr.bf16.gmra.mxu0 %v1554
    %v1593 = vpop.f32.mrf.mxu0
    %v1594 = vadd.f32 0.0, %v1593
    %v1595 = vpop.f32.mrf.mxu0
    %v1596 = vpop.f32.mrf.mxu0
    %v1597 = vpop.f32.mrf.mxu0
    %1598 = vdwg.mxu0
    %1599 = vrot.lane.b32.xlu0 %v268, 48
    %v1600 = vpop.permute.xlu0 %1599
    %v1602 = vsel %vm273, %v1403, 0
    %v1605 = vsel %vm413, %v1600, 0
    %1607 = vmatprep.subr.bf16.mxu0 0
    %1608 = vmatpush1.bf16.msra.mxu0 0
    %1609 = vmatprep.subr.bf16.mxu0 0
    %1610 = vmatpush1.bf16.msra.mxu0 0
    %1611 = vmatprep.subr.bf16.mxu0 0
    %1612 = vmatpush1.bf16.msra.mxu0 0
    %1613 = vmatprep.subr.bf16.mxu0 0
    %1614 = vmatpush1.bf16.msra.mxu0 0
    %1615 = vmatprep.subr.bf16.mxu0 0
    %1616 = vmatpush1.bf16.msra.mxu0 0
    %1617 = vmatprep.subr.bf16.mxu0 0
    %1618 = vmatpush1.bf16.msra.mxu0 0
    %1619 = vmatprep.subr.bf16.mxu0 0
    %1620 = vmatpush1.bf16.msra.mxu0 0
    %1621 = vmatprep.subr.bf16.mxu0 0
    %1622 = vmatpush1.bf16.msra.mxu0 %v1605
    %1623 = vmatprep.subr.bf16.mxu0 0
    %1624 = vmatpush2.bf16.msra.mxu0 0
    %1625 = vmatprep.subr.bf16.mxu0 0
    %1626 = vmatpush2.bf16.msra.mxu0 0
    %1627 = vmatprep.subr.bf16.mxu0 0
    %1628 = vmatpush2.bf16.msra.mxu0 0
    %1629 = vmatprep.subr.bf16.mxu0 0
    %1630 = vmatpush2.bf16.msra.mxu0 0
    %1631 = vmatprep.subr.bf16.mxu0 0
    %1632 = vmatpush2.bf16.msra.mxu0 0
    %1633 = vmatprep.subr.bf16.mxu0 0
    %1634 = vmatpush2.bf16.msra.mxu0 0
    %1635 = vmatprep.subr.bf16.mxu0 0
    %1636 = vmatpush2.bf16.msra.mxu0 0
    %1637 = vmatprep.subr.bf16.mxu0 0
    %1638 = vmatpush2.bf16.msra.mxu0 0
    %1639 = vmatprep.mubr.bf16.mxu0 0
    %1640 = vmatmul.mubr.bf16.gmra.mxu0 %v1602
    %v1641 = vpop.f32.mrf.mxu0
    %v1642 = vadd.f32 0.0, %v1641
    %v1643 = vpop.f32.mrf.mxu0
    %v1644 = vpop.f32.mrf.mxu0
    %v1645 = vpop.f32.mrf.mxu0
    %1646 = vdwg.mxu0
    %1647 = vrot.lane.b32.xlu0 %v269, 48
    %v1648 = vpop.permute.xlu0 %1647
    %v1650 = vsel %vm273, %v1404, 0
    %v1653 = vsel %vm413, %v1648, 0
    %1655 = vmatprep.subr.bf16.mxu0 0
    %1656 = vmatpush1.bf16.msra.mxu0 0
    %1657 = vmatprep.subr.bf16.mxu0 0
    %1658 = vmatpush1.bf16.msra.mxu0 0
    %1659 = vmatprep.subr.bf16.mxu0 0
    %1660 = vmatpush1.bf16.msra.mxu0 0
    %1661 = vmatprep.subr.bf16.mxu0 0
    %1662 = vmatpush1.bf16.msra.mxu0 0
    %1663 = vmatprep.subr.bf16.mxu0 0
    %1664 = vmatpush1.bf16.msra.mxu0 0
    %1665 = vmatprep.subr.bf16.mxu0 0
    %1666 = vmatpush1.bf16.msra.mxu0 0
    %1667 = vmatprep.subr.bf16.mxu0 0
    %1668 = vmatpush1.bf16.msra.mxu0 0
    %1669 = vmatprep.subr.bf16.mxu0 0
    %1670 = vmatpush1.bf16.msra.mxu0 %v1653
    %1671 = vmatprep.subr.bf16.mxu0 0
    %1672 = vmatpush2.bf16.msra.mxu0 0
    %1673 = vmatprep.subr.bf16.mxu0 0
    %1674 = vmatpush2.bf16.msra.mxu0 0
    %1675 = vmatprep.subr.bf16.mxu0 0
    %1676 = vmatpush2.bf16.msra.mxu0 0
    %1677 = vmatprep.subr.bf16.mxu0 0
    %1678 = vmatpush2.bf16.msra.mxu0 0
    %1679 = vmatprep.subr.bf16.mxu0 0
    %1680 = vmatpush2.bf16.msra.mxu0 0
    %1681 = vmatprep.subr.bf16.mxu0 0
    %1682 = vmatpush2.bf16.msra.mxu0 0
    %1683 = vmatprep.subr.bf16.mxu0 0
    %1684 = vmatpush2.bf16.msra.mxu0 0
    %1685 = vmatprep.subr.bf16.mxu0 0
    %1686 = vmatpush2.bf16.msra.mxu0 0
    %1687 = vmatprep.mubr.bf16.mxu0 0
    %1688 = vmatmul.mubr.bf16.gmra.mxu0 %v1650
    %v1689 = vpop.f32.mrf.mxu0
    %v1690 = vadd.f32 0.0, %v1689
    %v1691 = vpop.f32.mrf.mxu0
    %v1692 = vpop.f32.mrf.mxu0
    %v1693 = vpop.f32.mrf.mxu0
    %1694 = vdwg.mxu0
    %1695 = vrot.lane.b32.xlu0 %v268, 40
    %v1696 = vpop.permute.xlu0 %1695
    %v1698 = vsel %vm273, %v1405, 0
    %v1701 = vsel %vm413, %v1696, 0
    %1703 = vmatprep.subr.bf16.mxu0 0
    %1704 = vmatpush1.bf16.msra.mxu0 0
    %1705 = vmatprep.subr.bf16.mxu0 0
    %1706 = vmatpush1.bf16.msra.mxu0 0
    %1707 = vmatprep.subr.bf16.mxu0 0
    %1708 = vmatpush1.bf16.msra.mxu0 0
    %1709 = vmatprep.subr.bf16.mxu0 0
    %1710 = vmatpush1.bf16.msra.mxu0 0
    %1711 = vmatprep.subr.bf16.mxu0 0
    %1712 = vmatpush1.bf16.msra.mxu0 0
    %1713 = vmatprep.subr.bf16.mxu0 0
    %1714 = vmatpush1.bf16.msra.mxu0 0
    %1715 = vmatprep.subr.bf16.mxu0 0
    %1716 = vmatpush1.bf16.msra.mxu0 0
    %1717 = vmatprep.subr.bf16.mxu0 0
    %1718 = vmatpush1.bf16.msra.mxu0 %v1701
    %1719 = vmatprep.subr.bf16.mxu0 0
    %1720 = vmatpush2.bf16.msra.mxu0 0
    %1721 = vmatprep.subr.bf16.mxu0 0
    %1722 = vmatpush2.bf16.msra.mxu0 0
    %1723 = vmatprep.subr.bf16.mxu0 0
    %1724 = vmatpush2.bf16.msra.mxu0 0
    %1725 = vmatprep.subr.bf16.mxu0 0
    %1726 = vmatpush2.bf16.msra.mxu0 0
    %1727 = vmatprep.subr.bf16.mxu0 0
    %1728 = vmatpush2.bf16.msra.mxu0 0
    %1729 = vmatprep.subr.bf16.mxu0 0
    %1730 = vmatpush2.bf16.msra.mxu0 0
    %1731 = vmatprep.subr.bf16.mxu0 0
    %1732 = vmatpush2.bf16.msra.mxu0 0
    %1733 = vmatprep.subr.bf16.mxu0 0
    %1734 = vmatpush2.bf16.msra.mxu0 0
    %1735 = vmatprep.mubr.bf16.mxu0 0
    %1736 = vmatmul.mubr.bf16.gmra.mxu0 %v1698
    %v1737 = vpop.f32.mrf.mxu0
    %v1738 = vadd.f32 0.0, %v1737
    %v1739 = vpop.f32.mrf.mxu0
    %v1740 = vpop.f32.mrf.mxu0
    %v1741 = vpop.f32.mrf.mxu0
    %1742 = vdwg.mxu0
    %1743 = vrot.lane.b32.xlu0 %v269, 40
    %v1744 = vpop.permute.xlu0 %1743
    %v1746 = vsel %vm273, %v1406, 0
    %v1749 = vsel %vm413, %v1744, 0
    %1751 = vmatprep.subr.bf16.mxu0 0
    %1752 = vmatpush1.bf16.msra.mxu0 0
    %1753 = vmatprep.subr.bf16.mxu0 0
    %1754 = vmatpush1.bf16.msra.mxu0 0
    %1755 = vmatprep.subr.bf16.mxu0 0
    %1756 = vmatpush1.bf16.msra.mxu0 0
    %1757 = vmatprep.subr.bf16.mxu0 0
    %1758 = vmatpush1.bf16.msra.mxu0 0
    %1759 = vmatprep.subr.bf16.mxu0 0
    %1760 = vmatpush1.bf16.msra.mxu0 0
    %1761 = vmatprep.subr.bf16.mxu0 0
    %1762 = vmatpush1.bf16.msra.mxu0 0
    %1763 = vmatprep.subr.bf16.mxu0 0
    %1764 = vmatpush1.bf16.msra.mxu0 0
    %1765 = vmatprep.subr.bf16.mxu0 0
    %1766 = vmatpush1.bf16.msra.mxu0 %v1749
    %1767 = vmatprep.subr.bf16.mxu0 0
    %1768 = vmatpush2.bf16.msra.mxu0 0
    %1769 = vmatprep.subr.bf16.mxu0 0
    %1770 = vmatpush2.bf16.msra.mxu0 0
    %1771 = vmatprep.subr.bf16.mxu0 0
    %1772 = vmatpush2.bf16.msra.mxu0 0
    %1773 = vmatprep.subr.bf16.mxu0 0
    %1774 = vmatpush2.bf16.msra.mxu0 0
    %1775 = vmatprep.subr.bf16.mxu0 0
    %1776 = vmatpush2.bf16.msra.mxu0 0
    %1777 = vmatprep.subr.bf16.mxu0 0
    %1778 = vmatpush2.bf16.msra.mxu0 0
    %1779 = vmatprep.subr.bf16.mxu0 0
    %1780 = vmatpush2.bf16.msra.mxu0 0
    %1781 = vmatprep.subr.bf16.mxu0 0
    %1782 = vmatpush2.bf16.msra.mxu0 0
    %1783 = vmatprep.mubr.bf16.mxu0 0
    %1784 = vmatmul.mubr.bf16.gmra.mxu0 %v1746
    %v1785 = vpop.f32.mrf.mxu0
    %v1786 = vadd.f32 0.0, %v1785
    %v1787 = vpop.f32.mrf.mxu0
    %v1788 = vpop.f32.mrf.mxu0
    %v1789 = vpop.f32.mrf.mxu0
    %1790 = vdwg.mxu0
    %1793 = vrot.lane.b32.xlu0 %v1546, 8
    %v1794 = vpop.permute.xlu0 %1793
    %1795 = vrot.lane.b32.xlu0 %v1594, 8
    %v1796 = vpop.permute.xlu0 %1795
    %1801 = vrot.lane.b32.xlu0 %v1642, 16
    %v1802 = vpop.permute.xlu0 %1801
    %1803 = vrot.lane.b32.xlu0 %v1690, 16
    %v1804 = vpop.permute.xlu0 %1803
    %1809 = vrot.lane.b32.xlu0 %v1738, 24
    %v1810 = vpop.permute.xlu0 %1809
    %1811 = vrot.lane.b32.xlu0 %v1786, 24
    %v1812 = vpop.permute.xlu0 %1811
    %v1815 = vsel %vm273, %v1450, %v1794
    %v1816 = vsel %vm273, %v1498, %v1796
    %vm1817 = vcmask 130048
    %v1818 = vsel %vm1817, %v1815, %v1802
    %v1819 = vsel %vm1817, %v1816, %v1804
    %vm1820 = vcmask 195584
    %v1821 = vsel %vm1820, %v1818, %v1810
    %v1822 = vsel %vm1820, %v1819, %v1812
    %v1823 = vpack.c.bf16 %v1822, %v1821
    %v1824 = vld [vmem:[%s6] sm:$0xf]
    %v1825 = vld [vmem:[%s6 + $0x4] sm:$0xf]
    %v1826 = vld [vmem:[%s6 + $0x8] sm:$0xf]
    %v1827 = vld [vmem:[%s6 + $0xc] sm:$0xf]
    %v1832 = vunpack.c.l.b16 %v1824
    %v1833 = vunpack.c.l.b16 %v1825
    %v1834 = vunpack.c.l.b16 %v1826
    %v1835 = vunpack.c.l.b16 %v1827
    %v1836 = vpack.c.b16 %v1833, %v1832
    %v1837 = vpack.c.b16 %v1835, %v1834
    %v1841 = vsel %vm187, %v1823, 0
    %1843 = vmatprep.subr.bf16.mxu0 0
    %1844 = vmatpush1.bf16.msra.mxu0 0
    %1845 = vmatprep.subr.bf16.mxu0 0
    %1846 = vmatpush1.bf16.msra.mxu0 0
    %1847 = vmatprep.subr.bf16.mxu0 0
    %1848 = vmatpush1.bf16.msra.mxu0 0
    %1849 = vmatprep.subr.bf16.mxu0 0
    %1850 = vmatpush1.bf16.msra.mxu0 0
    %1851 = vmatprep.subr.bf16.mxu0 0
    %1852 = vmatpush1.bf16.msra.mxu0 0
    %1853 = vmatprep.subr.bf16.mxu0 0
    %1854 = vmatpush1.bf16.msra.mxu0 0
    %1855 = vmatprep.subr.bf16.mxu0 0
    %1856 = vmatpush1.bf16.msra.mxu0 %v1837
    %1857 = vmatprep.subr.bf16.mxu0 0
    %1858 = vmatpush1.bf16.msra.mxu0 %v1836
    %1859 = vmatprep.subr.bf16.mxu0 0
    %1860 = vmatpush2.bf16.msra.mxu0 0
    %1861 = vmatprep.subr.bf16.mxu0 0
    %1862 = vmatpush2.bf16.msra.mxu0 0
    %1863 = vmatprep.subr.bf16.mxu0 0
    %1864 = vmatpush2.bf16.msra.mxu0 0
    %1865 = vmatprep.subr.bf16.mxu0 0
    %1866 = vmatpush2.bf16.msra.mxu0 0
    %1867 = vmatprep.subr.bf16.mxu0 0
    %1868 = vmatpush2.bf16.msra.mxu0 0
    %1869 = vmatprep.subr.bf16.mxu0 0
    %1870 = vmatpush2.bf16.msra.mxu0 0
    %1871 = vmatprep.subr.bf16.mxu0 0
    %1872 = vmatpush2.bf16.msra.mxu0 0
    %1873 = vmatprep.subr.bf16.mxu0 0
    %1874 = vmatpush2.bf16.msra.mxu0 0
    %1875 = vmatprep.mubr.bf16.mxu0 0
    %1876 = vmatmul.mubr.bf16.gmra.mxu0 %v1841
    %v1877 = vpop.f32.mrf.mxu0
    %v1878 = vadd.f32 %v159, %v1877
    %v1879 = vpop.f32.mrf.mxu0
    %v1880 = vpop.f32.mrf.mxu0
    %v1881 = vadd.f32 %v160, %v1880
    %v1882 = vpop.f32.mrf.mxu0
    %1883 = vdwg.mxu0
    %v1884 = vld [vmem:[%s7] sm:$0x1]
    %v1885 = vld [vmem:[#allocation8] sm:$0x1]
    %v1886 = vsel %vm187, %v1878, 0.0
    %1887 = vadd.xlane.f32.xlu0 %v1886
    %v1888 = vpop.xlane.xlu0 %1887
    %v1889 = vsel %vm187, %v1881, 0.0
    %1890 = vadd.xlane.f32.xlu0 %v1889
    %v1891 = vpop.xlane.xlu0 %1890
    %v1892 = vrcp.pop 32.0
    %v1893 = vmul.f32 %v1888, %v1892
    %v1894 = vmul.f32 %v1891, %v1892
    %v1895 = vsub.f32 %v1878, %v1893
    %v1896 = vsub.f32 %v1881, %v1894
    %v1897 = vmul.f32 %v1895, %v1895
    %v1898 = vmul.f32 %v1896, %v1896
    %v1899 = vsel %vm187, %v1897, 0.0
    %1900 = vadd.xlane.f32.xlu0 %v1899
    %v1901 = vpop.xlane.xlu0 %1900
    %v1902 = vsel %vm187, %v1898, 0.0
    %1903 = vadd.xlane.f32.xlu0 %v1902
    %v1904 = vpop.xlane.xlu0 %1903
    %v1905 = vmul.f32 %v1901, %v1892
    %v1906 = vmul.f32 %v1904, %v1892
    %v1907 = vadd.f32 %v1905, 1e-12
    %v1908 = vadd.f32 %v1906, 1e-12
    %v1909 = vrsqrt.pop %v1907
    %v1910 = vrsqrt.pop %v1908
    %v1911 = vmul.f32 %v1895, %v1909
    %v1912 = vmul.f32 %v1896, %v1910
    %v1914 = vlaneseq
    %v1915 = vshrl.u32 %v1914, 7
    %v1916 = vsub.s32 0, %v1915
    %v1917 = vrot.slane %v1884, %v1916
    %v1919 = vmul.f32 %v1911, %v1917
    %v1920 = vmul.f32 %v1912, %v1917
    %v1922 = vlaneseq
    %v1923 = vshrl.u32 %v1922, 7
    %v1924 = vsub.s32 0, %v1923
    %v1925 = vrot.slane %v1885, %v1924
    %v1927 = vadd.f32 %v1919, %v1925
    %v1928 = vadd.f32 %v1920, %v1925
    %v1929 = vpack.c.bf16 %v1928, %v1927
    %v1930 = vld [vmem:[%s9] sm:$0xf]
    %v1931 = vld [vmem:[%s9 + $0x4] sm:$0xf]
    %v1932 = vld [vmem:[%s9 + $0x8] sm:$0xf]
    %v1933 = vld [vmem:[%s9 + $0xc] sm:$0xf]
    %v1934 = vld [vmem:[#allocation10] sm:$0x1]
    %v1936 = vlaneseq
    %v1937 = vshrl.u32 %v1936, 7
    %v1938 = vsub.s32 0, %v1937
    %v1939 = vrot.slane %v1934, %v1938
    %v1945 = vunpack.c.l.b16 %v1930
    %v1946 = vunpack.c.l.b16 %v1931
    %v1947 = vunpack.c.l.b16 %v1932
    %v1948 = vunpack.c.l.b16 %v1933
    %v1949 = vpack.c.b16 %v1946, %v1945
    %v1950 = vpack.c.b16 %v1948, %v1947
    %v1954 = vsel %vm187, %v1929, 0
    %1956 = vmatprep.subr.bf16.mxu0 0
    %1957 = vmatpush1.bf16.msra.mxu0 0
    %1958 = vmatprep.subr.bf16.mxu0 0
    %1959 = vmatpush1.bf16.msra.mxu0 0
    %1960 = vmatprep.subr.bf16.mxu0 0
    %1961 = vmatpush1.bf16.msra.mxu0 0
    %1962 = vmatprep.subr.bf16.mxu0 0
    %1963 = vmatpush1.bf16.msra.mxu0 0
    %1964 = vmatprep.subr.bf16.mxu0 0
    %1965 = vmatpush1.bf16.msra.mxu0 0
    %1966 = vmatprep.subr.bf16.mxu0 0
    %1967 = vmatpush1.bf16.msra.mxu0 0
    %1968 = vmatprep.subr.bf16.mxu0 0
    %1969 = vmatpush1.bf16.msra.mxu0 %v1950
    %1970 = vmatprep.subr.bf16.mxu0 0
    %1971 = vmatpush1.bf16.msra.mxu0 %v1949
    %1972 = vmatprep.subr.bf16.mxu0 0
    %1973 = vmatpush2.bf16.msra.mxu0 0
    %1974 = vmatprep.subr.bf16.mxu0 0
    %1975 = vmatpush2.bf16.msra.mxu0 0
    %1976 = vmatprep.subr.bf16.mxu0 0
    %1977 = vmatpush2.bf16.msra.mxu0 0
    %1978 = vmatprep.subr.bf16.mxu0 0
    %1979 = vmatpush2.bf16.msra.mxu0 0
    %1980 = vmatprep.subr.bf16.mxu0 0
    %1981 = vmatpush2.bf16.msra.mxu0 0
    %1982 = vmatprep.subr.bf16.mxu0 0
    %1983 = vmatpush2.bf16.msra.mxu0 0
    %1984 = vmatprep.subr.bf16.mxu0 0
    %1985 = vmatpush2.bf16.msra.mxu0 0
    %1986 = vmatprep.subr.bf16.mxu0 0
    %1987 = vmatpush2.bf16.msra.mxu0 0
    %1988 = vmatprep.mubr.bf16.mxu0 0
    %1989 = vmatmul.mubr.bf16.gmra.mxu0 %v1954
    %v1990 = vpop.f32.mrf.mxu0
    %v1991 = vadd.f32 %v1939, %v1990
    %v1992 = vpop.f32.mrf.mxu0
    %v1993 = vpop.f32.mrf.mxu0
    %v1994 = vadd.f32 %v1939, %v1993
    %v1995 = vpop.f32.mrf.mxu0
    %1996 = vdwg.mxu0
    %v1997 = vmul.f32 %v1991, %v1991
    %v1998 = vmul.f32 %v1994, %v1994
    %v1999 = vmul.f32 %v1991, %v1997
    %v2000 = vmul.f32 %v1994, %v1998
    %v2001 = vmul.f32 %v1999, 0.044715
    %v2002 = vmul.f32 %v2000, 0.044715
    %v2003 = vadd.f32 %v1991, %v2001
    %v2004 = vadd.f32 %v1994, %v2002
    %v2005 = vmul.f32 %v2003, 0.7978846
    %v2006 = vmul.f32 %v2004, 0.7978846
    %v2007 = vtanh.pop %v2005
    %v2008 = vtanh.pop %v2006
    %v2009 = vadd.f32 %v2007, 1.0
    %v2010 = vadd.f32 %v2008, 1.0
    %v2011 = vmul.f32 %v2009, 0.5
    %v2012 = vmul.f32 %v2010, 0.5
    %v2013 = vmul.f32 %v1991, %v2011
    %v2014 = vmul.f32 %v1994, %v2012
    %v2015 = vpack.c.bf16 %v2014, %v2013
    %v2016 = vld [vmem:[%s11] sm:$0xf]
    %v2017 = vld [vmem:[%s11 + $0x4] sm:$0xf]
    %v2018 = vld [vmem:[%s11 + $0x8] sm:$0xf]
    %v2019 = vld [vmem:[%s11 + $0xc] sm:$0xf]
    %v2020 = vld [vmem:[%s11 + $0x10] sm:$0xf]
    %v2021 = vld [vmem:[%s11 + $0x14] sm:$0xf]
    %v2022 = vld [vmem:[%s11 + $0x18] sm:$0xf]
    %v2023 = vld [vmem:[%s11 + $0x1c] sm:$0xf]
    %v2024 = vld [vmem:[#allocation11] sm:$0x1]
    %v2026 = vlaneseq
    %v2027 = vshrl.u32 %v2026, 7
    %v2028 = vsub.s32 0, %v2027
    %v2029 = vrot.slane %v2024, %v2028
    %v2039 = vunpack.c.l.b16 %v2016
    %v2040 = vunpack.c.l.b16 %v2017
    %v2041 = vunpack.c.l.b16 %v2018
    %v2042 = vunpack.c.l.b16 %v2019
    %v2043 = vunpack.c.l.b16 %v2020
    %v2044 = vunpack.c.l.b16 %v2021
    %v2045 = vunpack.c.l.b16 %v2022
    %v2046 = vunpack.c.l.b16 %v2023
    %v2047 = vpack.c.b16 %v2040, %v2039
    %v2048 = vpack.c.b16 %v2042, %v2041
    %v2049 = vpack.c.b16 %v2044, %v2043
    %v2050 = vpack.c.b16 %v2046, %v2045
    %vm2055 = vcmask 523264
    %v2057 = vsel %vm2055, %v2015, 0
    %2059 = vmatprep.subr.bf16.mxu0 0
    %2060 = vmatpush1.bf16.msra.mxu0 0
    %2061 = vmatprep.subr.bf16.mxu0 0
    %2062 = vmatpush1.bf16.msra.mxu0 0
    %2063 = vmatprep.subr.bf16.mxu0 0
    %2064 = vmatpush1.bf16.msra.mxu0 0
    %2065 = vmatprep.subr.bf16.mxu0 0
    %2066 = vmatpush1.bf16.msra.mxu0 0
    %2067 = vmatprep.subr.bf16.mxu0 0
    %2068 = vmatpush1.bf16.msra.mxu0 %v2050
    %2069 = vmatprep.subr.bf16.mxu0 0
    %2070 = vmatpush1.bf16.msra.mxu0 %v2049
    %2071 = vmatprep.subr.bf16.mxu0 0
    %2072 = vmatpush1.bf16.msra.mxu0 %v2048
    %2073 = vmatprep.subr.bf16.mxu0 0
    %2074 = vmatpush1.bf16.msra.mxu0 %v2047
    %2075 = vmatprep.subr.bf16.mxu0 0
    %2076 = vmatpush2.bf16.msra.mxu0 0
    %2077 = vmatprep.subr.bf16.mxu0 0
    %2078 = vmatpush2.bf16.msra.mxu0 0
    %2079 = vmatprep.subr.bf16.mxu0 0
    %2080 = vmatpush2.bf16.msra.mxu0 0
    %2081 = vmatprep.subr.bf16.mxu0 0
    %2082 = vmatpush2.bf16.msra.mxu0 0
    %2083 = vmatprep.subr.bf16.mxu0 0
    %2084 = vmatpush2.bf16.msra.mxu0 0
    %2085 = vmatprep.subr.bf16.mxu0 0
    %2086 = vmatpush2.bf16.msra.mxu0 0
    %2087 = vmatprep.subr.bf16.mxu0 0
    %2088 = vmatpush2.bf16.msra.mxu0 0
    %2089 = vmatprep.subr.bf16.mxu0 0
    %2090 = vmatpush2.bf16.msra.mxu0 0
    %2091 = vmatprep.mubr.bf16.mxu0 0
    %2092 = vmatmul.mubr.bf16.gmra.mxu0 %v2057
    %v2093 = vpop.f32.mrf.mxu0
    %v2094 = vadd.f32 %v2029, %v2093
    %v2095 = vpop.f32.mrf.mxu0
    %v2096 = vpop.f32.mrf.mxu0
    %v2097 = vadd.f32 %v2029, %v2096
    %v2098 = vpop.f32.mrf.mxu0
    %2099 = vdwg.mxu0
    %v2100 = vadd.f32 %v2094, %v1927
    %v2101 = vadd.f32 %v2097, %v1928
    %v2102 = vld [vmem:[%s13] sm:$0x1]
    %v2103 = vld [vmem:[%s14] sm:$0x1]
    %v2104 = vsel %vm187, %v2100, 0.0
    %2105 = vadd.xlane.f32.xlu0 %v2104
    %v2106 = vpop.xlane.xlu0 %2105
    %v2107 = vsel %vm187, %v2101, 0.0
    %2108 = vadd.xlane.f32.xlu0 %v2107
    %v2109 = vpop.xlane.xlu0 %2108
    %v2110 = vmul.f32 %v2106, %v1892
    %v2111 = vmul.f32 %v2109, %v1892
    %v2112 = vsub.f32 %v2100, %v2110
    %v2113 = vsub.f32 %v2101, %v2111
    %v2114 = vmul.f32 %v2112, %v2112
    %v2115 = vmul.f32 %v2113, %v2113
    %v2116 = vsel %vm187, %v2114, 0.0
    %2117 = vadd.xlane.f32.xlu0 %v2116
    %v2118 = vpop.xlane.xlu0 %2117
    %v2119 = vsel %vm187, %v2115, 0.0
    %2120 = vadd.xlane.f32.xlu0 %v2119
    %v2121 = vpop.xlane.xlu0 %2120
    %v2122 = vmul.f32 %v2118, %v1892
    %v2123 = vmul.f32 %v2121, %v1892
    %v2124 = vadd.f32 %v2122, 1e-12
    %v2125 = vadd.f32 %v2123, 1e-12
    %v2126 = vrsqrt.pop %v2124
    %v2127 = vrsqrt.pop %v2125
    %v2128 = vmul.f32 %v2112, %v2126
    %v2129 = vmul.f32 %v2113, %v2127
    %v2131 = vlaneseq
    %v2132 = vshrl.u32 %v2131, 7
    %v2133 = vsub.s32 0, %v2132
    %v2134 = vrot.slane %v2102, %v2133
    %v2136 = vmul.f32 %v2128, %v2134
    %v2137 = vmul.f32 %v2129, %v2134
    %v2139 = vlaneseq
    %v2140 = vshrl.u32 %v2139, 7
    %v2141 = vsub.s32 0, %v2140
    %v2142 = vrot.slane %v2103, %v2141
    %v2144 = vadd.f32 %v2136, %v2142
    %v2145 = vadd.f32 %v2137, %v2142
    %v2146 = vpack.c.bf16 %v2145, %v2144
    %s2147 = scalar_lea.vmem %s3, 16
    %v2148 = vld [vmem:[%s2147] sm:$0xf]
    %v2149 = vld [vmem:[%s2147 + $0x4] sm:$0xf]
    %v2150 = vld [vmem:[%s2147 + $0x8] sm:$0xf]
    %v2151 = vld [vmem:[%s2147 + $0xc] sm:$0xf]
    %v2156 = vunpack.c.l.b16 %v2148
    %v2157 = vunpack.c.l.b16 %v2149
    %v2158 = vunpack.c.l.b16 %v2150
    %v2159 = vunpack.c.l.b16 %v2151
    %v2160 = vpack.c.b16 %v2157, %v2156
    %v2161 = vpack.c.b16 %v2159, %v2158
    %v2165 = vsel %vm187, %v2146, 0
    %2167 = vmatprep.subr.bf16.mxu0 0
    %2168 = vmatpush1.bf16.msra.mxu0 0
    %2169 = vmatprep.subr.bf16.mxu0 0
    %2170 = vmatpush1.bf16.msra.mxu0 0
    %2171 = vmatprep.subr.bf16.mxu0 0
    %2172 = vmatpush1.bf16.msra.mxu0 0
    %2173 = vmatprep.subr.bf16.mxu0 0
    %2174 = vmatpush1.bf16.msra.mxu0 0
    %2175 = vmatprep.subr.bf16.mxu0 0
    %2176 = vmatpush1.bf16.msra.mxu0 0
    %2177 = vmatprep.subr.bf16.mxu0 0
    %2178 = vmatpush1.bf16.msra.mxu0 0
    %2179 = vmatprep.subr.bf16.mxu0 0
    %2180 = vmatpush1.bf16.msra.mxu0 %v2161
    %2181 = vmatprep.subr.bf16.mxu0 0
    %2182 = vmatpush1.bf16.msra.mxu0 %v2160
    %2183 = vmatprep.subr.bf16.mxu0 0
    %2184 = vmatpush2.bf16.msra.mxu0 0
    %2185 = vmatprep.subr.bf16.mxu0 0
    %2186 = vmatpush2.bf16.msra.mxu0 0
    %2187 = vmatprep.subr.bf16.mxu0 0
    %2188 = vmatpush2.bf16.msra.mxu0 0
    %2189 = vmatprep.subr.bf16.mxu0 0
    %2190 = vmatpush2.bf16.msra.mxu0 0
    %2191 = vmatprep.subr.bf16.mxu0 0
    %2192 = vmatpush2.bf16.msra.mxu0 0
    %2193 = vmatprep.subr.bf16.mxu0 0
    %2194 = vmatpush2.bf16.msra.mxu0 0
    %2195 = vmatprep.subr.bf16.mxu0 0
    %2196 = vmatpush2.bf16.msra.mxu0 0
    %2197 = vmatprep.subr.bf16.mxu0 0
    %2198 = vmatpush2.bf16.msra.mxu0 0
    %2199 = vmatprep.mubr.bf16.mxu0 0
    %2200 = vmatmul.mubr.bf16.gmra.mxu0 %v2165
    %v2201 = vpop.f32.mrf.mxu0
    %v2202 = vadd.f32 0.0, %v2201
    %v2203 = vpop.f32.mrf.mxu0
    %v2204 = vpop.f32.mrf.mxu0
    %v2205 = vadd.f32 0.0, %v2204
    %v2206 = vpop.f32.mrf.mxu0
    %2207 = vmatprep.mubr.bf16.mxu0 0
    %2208 = vmatmul.mubr.bf16.gmra.mxu0 %v192
    %v2209 = vpop.f32.mrf.mxu0
    %v2210 = vadd.f32 0.0, %v2209
    %v2211 = vpop.f32.mrf.mxu0
    %v2212 = vpop.f32.mrf.mxu0
    %v2213 = vadd.f32 0.0, %v2212
    %v2214 = vpop.f32.mrf.mxu0
    %2215 = vdwg.mxu0
    %s2216 = scalar_lea.vmem %s4, 1
    %v2217 = vld [vmem:[%s2216] sm:$0x1]
    %v2219 = vlaneseq
    %v2220 = vshrl.u32 %v2219, 7
    %v2221 = vsub.s32 0, %v2220
    %v2222 = vrot.slane %v2217, %v2221
    %v2224 = vadd.f32 %v2202, %v2222
    %v2225 = vadd.f32 %v2205, %v2222
    %v2226 = vmul.f32 %v2224, 0.35355338
    %v2227 = vmul.f32 %v2225, 0.35355338
    %v2228 = vpack.c.bf16 %v2226, %v2226
    %v2229 = vpack.c.bf16 %v2227, %v2227
    %s2230 = scalar_lea.vmem %s5, 1
    %v2231 = vld [vmem:[%s2230] sm:$0x1]
    %v2233 = vlaneseq
    %v2234 = vshrl.u32 %v2233, 7
    %v2235 = vsub.s32 0, %v2234
    %v2236 = vrot.slane %v2231, %v2235
    %v2238 = vadd.f32 %v2202, %v2236
    %v2239 = vadd.f32 %v2205, %v2236
    %v2240 = vmul.f32 %v2238, 0.35355338
    %v2241 = vmul.f32 %v2239, 0.35355338
    %v2242 = vpack.c.bf16 %v2241, %v2240
    %v2243 = vpack.c.bf16 %v2202, %v2202
    %v2244 = vpack.c.bf16 %v2205, %v2205
    %2246 = vrot.lane.b32.xlu0 %v2243, 96
    %v2247 = vpop.permute.xlu0 %2246
    %v2249 = vsel %vm273, %v2228, 0
    %v2252 = vsel %vm273, %v2247, 0
    %2254 = vmatprep.subr.bf16.mxu0 0
    %2255 = vmatpush1.bf16.xpose.msra.mxu0 0
    %2256 = vmatprep.subr.bf16.mxu0 0
    %2257 = vmatpush1.bf16.xpose.msra.mxu0 0
    %2258 = vmatprep.subr.bf16.mxu0 0
    %2259 = vmatpush1.bf16.xpose.msra.mxu0 0
    %2260 = vmatprep.subr.bf16.mxu0 0
    %2261 = vmatpush1.bf16.xpose.msra.mxu0 0
    %2262 = vmatprep.subr.bf16.mxu0 0
    %2263 = vmatpush1.bf16.xpose.msra.mxu0 0
    %2264 = vmatprep.subr.bf16.mxu0 0
    %2265 = vmatpush1.bf16.xpose.msra.mxu0 0
    %2266 = vmatprep.subr.bf16.mxu0 0
    %2267 = vmatpush1.bf16.xpose.msra.mxu0 0
    %2268 = vmatprep.subr.bf16.mxu0 0
    %2269 = vmatpush1.bf16.xpose.msra.mxu0 %v2252
    %2270 = vmatprep.subr.bf16.mxu0 0
    %2271 = vmatpush2.bf16.xpose.msra.mxu0 0
    %2272 = vmatprep.subr.bf16.mxu0 0
    %2273 = vmatpush2.bf16.xpose.msra.mxu0 0
    %2274 = vmatprep.subr.bf16.mxu0 0
    %2275 = vmatpush2.bf16.xpose.msra.mxu0 0
    %2276 = vmatprep.subr.bf16.mxu0 0
    %2277 = vmatpush2.bf16.xpose.msra.mxu0 0
    %2278 = vmatprep.subr.bf16.mxu0 0
    %2279 = vmatpush2.bf16.xpose.msra.mxu0 0
    %2280 = vmatprep.subr.bf16.mxu0 0
    %2281 = vmatpush2.bf16.xpose.msra.mxu0 0
    %2282 = vmatprep.subr.bf16.mxu0 0
    %2283 = vmatpush2.bf16.xpose.msra.mxu0 0
    %2284 = vmatprep.subr.bf16.mxu0 0
    %2285 = vmatpush2.bf16.xpose.msra.mxu0 0
    %2286 = vmatprep.mubr.bf16.mxu0 0
    %2287 = vmatmul.mubr.bf16.gmra.mxu0 %v2249
    %v2288 = vpop.f32.mrf.mxu0
    %v2289 = vadd.f32 0.0, %v2288
    %v2290 = vpop.f32.mrf.mxu0
    %v2291 = vpop.f32.mrf.mxu0
    %v2292 = vpop.f32.mrf.mxu0
    %2293 = vdwg.mxu0
    %2295 = vrot.lane.b32.xlu0 %v2244, 96
    %v2296 = vpop.permute.xlu0 %2295
    %v2298 = vsel %vm273, %v2229, 0
    %v2301 = vsel %vm273, %v2296, 0
    %2303 = vmatprep.subr.bf16.mxu0 0
    %2304 = vmatpush1.bf16.xpose.msra.mxu0 0
    %2305 = vmatprep.subr.bf16.mxu0 0
    %2306 = vmatpush1.bf16.xpose.msra.mxu0 0
    %2307 = vmatprep.subr.bf16.mxu0 0
    %2308 = vmatpush1.bf16.xpose.msra.mxu0 0
    %2309 = vmatprep.subr.bf16.mxu0 0
    %2310 = vmatpush1.bf16.xpose.msra.mxu0 0
    %2311 = vmatprep.subr.bf16.mxu0 0
    %2312 = vmatpush1.bf16.xpose.msra.mxu0 0
    %2313 = vmatprep.subr.bf16.mxu0 0
    %2314 = vmatpush1.bf16.xpose.msra.mxu0 0
    %2315 = vmatprep.subr.bf16.mxu0 0
    %2316 = vmatpush1.bf16.xpose.msra.mxu0 0
    %2317 = vmatprep.subr.bf16.mxu0 0
    %2318 = vmatpush1.bf16.xpose.msra.mxu0 %v2301
    %2319 = vmatprep.subr.bf16.mxu0 0
    %2320 = vmatpush2.bf16.xpose.msra.mxu0 0
    %2321 = vmatprep.subr.bf16.mxu0 0
    %2322 = vmatpush2.bf16.xpose.msra.mxu0 0
    %2323 = vmatprep.subr.bf16.mxu0 0
    %2324 = vmatpush2.bf16.xpose.msra.mxu0 0
    %2325 = vmatprep.subr.bf16.mxu0 0
    %2326 = vmatpush2.bf16.xpose.msra.mxu0 0
    %2327 = vmatprep.subr.bf16.mxu0 0
    %2328 = vmatpush2.bf16.xpose.msra.mxu0 0
    %2329 = vmatprep.subr.bf16.mxu0 0
    %2330 = vmatpush2.bf16.xpose.msra.mxu0 0
    %2331 = vmatprep.subr.bf16.mxu0 0
    %2332 = vmatpush2.bf16.xpose.msra.mxu0 0
    %2333 = vmatprep.subr.bf16.mxu0 0
    %2334 = vmatpush2.bf16.xpose.msra.mxu0 0
    %2335 = vmatprep.mubr.bf16.mxu0 0
    %2336 = vmatmul.mubr.bf16.gmra.mxu0 %v2298
    %v2337 = vpop.f32.mrf.mxu0
    %v2338 = vadd.f32 0.0, %v2337
    %v2339 = vpop.f32.mrf.mxu0
    %v2340 = vpop.f32.mrf.mxu0
    %v2341 = vpop.f32.mrf.mxu0
    %2342 = vdwg.mxu0
    %2345 = vrot.lane.b32.xlu0 %v2210, 32
    %v2346 = vpop.permute.xlu0 %2345
    %2347 = vrot.lane.b32.xlu0 %v2213, 32
    %v2348 = vpop.permute.xlu0 %2347
    %2351 = vxpose.xlu0.b32.start [1/16] %v2346, 128
    %2352 = vxpose.xlu0.b32.cont [2/16] %v2348, 128
    %2353 = vxpose.xlu0.b32.cont [3/16] 0.0, 128
    %2354 = vxpose.xlu0.b32.cont [4/16] 0.0, 128
    %2355 = vxpose.xlu0.b32.cont [5/16] 0.0, 128
    %2356 = vxpose.xlu0.b32.cont [6/16] 0.0, 128
    %2357 = vxpose.xlu0.b32.cont [7/16] 0.0, 128
    %2358 = vxpose.xlu0.b32.cont [8/16] 0.0, 128
    %2359 = vxpose.xlu0.b32.cont [9/16] 0.0, 128
    %2360 = vxpose.xlu0.b32.cont [10/16] 0.0, 128
    %2361 = vxpose.xlu0.b32.cont [11/16] 0.0, 128
    %2362 = vxpose.xlu0.b32.cont [12/16] 0.0, 128
    %2363 = vxpose.xlu0.b32.cont [13/16] 0.0, 128
    %2364 = vxpose.xlu0.b32.cont [14/16] 0.0, 128
    %2365 = vxpose.xlu0.b32.cont [15/16] 0.0, 128
    %2366 = vxpose.xlu0.b32.end [16/16] 0.0, 128
    %v2367 = vpop.trf.xlu0
    %v2368 = vpop.trf.xlu0
    %v2369 = vpop.trf.xlu0
    %v2370 = vpop.trf.xlu0
    %v2371 = vpop.trf.xlu0
    %v2372 = vpop.trf.xlu0
    %v2373 = vpop.trf.xlu0
    %v2374 = vpop.trf.xlu0
    %v2375 = vpop.trf.xlu0
    %v2376 = vpop.trf.xlu0
    %v2377 = vpop.trf.xlu0
    %v2378 = vpop.trf.xlu0
    %v2379 = vpop.trf.xlu0
    %v2380 = vpop.trf.xlu0
    %v2381 = vpop.trf.xlu0
    %v2382 = vpop.trf.xlu0
    %v2383 = vpack.c.bf16 %v2367, %v2367
    %v2385 = vsel %vm273, %v2242, 0
    %v2388 = vsel %vm413, %v2383, 0
    %2390 = vmatprep.subr.bf16.mxu0 0
    %2391 = vmatpush1.bf16.msra.mxu0 0
    %2392 = vmatprep.subr.bf16.mxu0 0
    %2393 = vmatpush1.bf16.msra.mxu0 0
    %2394 = vmatprep.subr.bf16.mxu0 0
    %2395 = vmatpush1.bf16.msra.mxu0 0
    %2396 = vmatprep.subr.bf16.mxu0 0
    %2397 = vmatpush1.bf16.msra.mxu0 0
    %2398 = vmatprep.subr.bf16.mxu0 0
    %2399 = vmatpush1.bf16.msra.mxu0 0
    %2400 = vmatprep.subr.bf16.mxu0 0
    %2401 = vmatpush1.bf16.msra.mxu0 0
    %2402 = vmatprep.subr.bf16.mxu0 0
    %2403 = vmatpush1.bf16.msra.mxu0 0
    %2404 = vmatprep.subr.bf16.mxu0 0
    %2405 = vmatpush1.bf16.msra.mxu0 %v2388
    %2406 = vmatprep.subr.bf16.mxu0 0
    %2407 = vmatpush2.bf16.msra.mxu0 0
    %2408 = vmatprep.subr.bf16.mxu0 0
    %2409 = vmatpush2.bf16.msra.mxu0 0
    %2410 = vmatprep.subr.bf16.mxu0 0
    %2411 = vmatpush2.bf16.msra.mxu0 0
    %2412 = vmatprep.subr.bf16.mxu0 0
    %2413 = vmatpush2.bf16.msra.mxu0 0
    %2414 = vmatprep.subr.bf16.mxu0 0
    %2415 = vmatpush2.bf16.msra.mxu0 0
    %2416 = vmatprep.subr.bf16.mxu0 0
    %2417 = vmatpush2.bf16.msra.mxu0 0
    %2418 = vmatprep.subr.bf16.mxu0 0
    %2419 = vmatpush2.bf16.msra.mxu0 0
    %2420 = vmatprep.subr.bf16.mxu0 0
    %2421 = vmatpush2.bf16.msra.mxu0 0
    %2422 = vmatprep.mubr.bf16.mxu0 0
    %2423 = vmatmul.mubr.bf16.gmra.mxu0 %v2385
    %v2424 = vpop.f32.mrf.mxu0
    %v2425 = vadd.f32 0.0, %v2424
    %v2426 = vpop.f32.mrf.mxu0
    %v2427 = vpop.f32.mrf.mxu0
    %v2428 = vadd.f32 0.0, %v2427
    %v2429 = vpop.f32.mrf.mxu0
    %2430 = vdwg.mxu0
    %2432 = vrot.lane.b32.xlu0 %v2228, 120
    %v2433 = vpop.permute.xlu0 %2432
    %2434 = vrot.lane.b32.xlu0 %v2243, 88
    %v2435 = vpop.permute.xlu0 %2434
    %v2437 = vsel %vm273, %v2433, 0
    %v2440 = vsel %vm273, %v2435, 0
    %2442 = vmatprep.subr.bf16.mxu0 0
    %2443 = vmatpush1.bf16.xpose.msra.mxu0 0
    %2444 = vmatprep.subr.bf16.mxu0 0
    %2445 = vmatpush1.bf16.xpose.msra.mxu0 0
    %2446 = vmatprep.subr.bf16.mxu0 0
    %2447 = vmatpush1.bf16.xpose.msra.mxu0 0
    %2448 = vmatprep.subr.bf16.mxu0 0
    %2449 = vmatpush1.bf16.xpose.msra.mxu0 0
    %2450 = vmatprep.subr.bf16.mxu0 0
    %2451 = vmatpush1.bf16.xpose.msra.mxu0 0
    %2452 = vmatprep.subr.bf16.mxu0 0
    %2453 = vmatpush1.bf16.xpose.msra.mxu0 0
    %2454 = vmatprep.subr.bf16.mxu0 0
    %2455 = vmatpush1.bf16.xpose.msra.mxu0 0
    %2456 = vmatprep.subr.bf16.mxu0 0
    %2457 = vmatpush1.bf16.xpose.msra.mxu0 %v2440
    %2458 = vmatprep.subr.bf16.mxu0 0
    %2459 = vmatpush2.bf16.xpose.msra.mxu0 0
    %2460 = vmatprep.subr.bf16.mxu0 0
    %2461 = vmatpush2.bf16.xpose.msra.mxu0 0
    %2462 = vmatprep.subr.bf16.mxu0 0
    %2463 = vmatpush2.bf16.xpose.msra.mxu0 0
    %2464 = vmatprep.subr.bf16.mxu0 0
    %2465 = vmatpush2.bf16.xpose.msra.mxu0 0
    %2466 = vmatprep.subr.bf16.mxu0 0
    %2467 = vmatpush2.bf16.xpose.msra.mxu0 0
    %2468 = vmatprep.subr.bf16.mxu0 0
    %2469 = vmatpush2.bf16.xpose.msra.mxu0 0
    %2470 = vmatprep.subr.bf16.mxu0 0
    %2471 = vmatpush2.bf16.xpose.msra.mxu0 0
    %2472 = vmatprep.subr.bf16.mxu0 0
    %2473 = vmatpush2.bf16.xpose.msra.mxu0 0
    %2474 = vmatprep.mubr.bf16.mxu0 0
    %2475 = vmatmul.mubr.bf16.gmra.mxu0 %v2437
    %v2476 = vpop.f32.mrf.mxu0
    %v2477 = vadd.f32 0.0, %v2476
    %v2478 = vpop.f32.mrf.mxu0
    %v2479 = vpop.f32.mrf.mxu0
    %v2480 = vpop.f32.mrf.mxu0
    %2481 = vdwg.mxu0
    %2483 = vrot.lane.b32.xlu0 %v2229, 120
    %v2484 = vpop.permute.xlu0 %2483
    %2485 = vrot.lane.b32.xlu0 %v2244, 88
    %v2486 = vpop.permute.xlu0 %2485
    %v2488 = vsel %vm273, %v2484, 0
    %v2491 = vsel %vm273, %v2486, 0
    %2493 = vmatprep.subr.bf16.mxu0 0
    %2494 = vmatpush1.bf16.xpose.msra.mxu0 0
    %2495 = vmatprep.subr.bf16.mxu0 0
    %2496 = vmatpush1.bf16.xpose.msra.mxu0 0
    %2497 = vmatprep.subr.bf16.mxu0 0
    %2498 = vmatpush1.bf16.xpose.msra.mxu0 0
    %2499 = vmatprep.subr.bf16.mxu0 0
    %2500 = vmatpush1.bf16.xpose.msra.mxu0 0
    %2501 = vmatprep.subr.bf16.mxu0 0
    %2502 = vmatpush1.bf16.xpose.msra.mxu0 0
    %2503 = vmatprep.subr.bf16.mxu0 0
    %2504 = vmatpush1.bf16.xpose.msra.mxu0 0
    %2505 = vmatprep.subr.bf16.mxu0 0
    %2506 = vmatpush1.bf16.xpose.msra.mxu0 0
    %2507 = vmatprep.subr.bf16.mxu0 0
    %2508 = vmatpush1.bf16.xpose.msra.mxu0 %v2491
    %2509 = vmatprep.subr.bf16.mxu0 0
    %2510 = vmatpush2.bf16.xpose.msra.mxu0 0
    %2511 = vmatprep.subr.bf16.mxu0 0
    %2512 = vmatpush2.bf16.xpose.msra.mxu0 0
    %2513 = vmatprep.subr.bf16.mxu0 0
    %2514 = vmatpush2.bf16.xpose.msra.mxu0 0
    %2515 = vmatprep.subr.bf16.mxu0 0
    %2516 = vmatpush2.bf16.xpose.msra.mxu0 0
    %2517 = vmatprep.subr.bf16.mxu0 0
    %2518 = vmatpush2.bf16.xpose.msra.mxu0 0
    %2519 = vmatprep.subr.bf16.mxu0 0
    %2520 = vmatpush2.bf16.xpose.msra.mxu0 0
    %2521 = vmatprep.subr.bf16.mxu0 0
    %2522 = vmatpush2.bf16.xpose.msra.mxu0 0
    %2523 = vmatprep.subr.bf16.mxu0 0
    %2524 = vmatpush2.bf16.xpose.msra.mxu0 0
    %2525 = vmatprep.mubr.bf16.mxu0 0
    %2526 = vmatmul.mubr.bf16.gmra.mxu0 %v2488
    %v2527 = vpop.f32.mrf.mxu0
    %v2528 = vadd.f32 0.0, %v2527
    %v2529 = vpop.f32.mrf.mxu0
    %v2530 = vpop.f32.mrf.mxu0
    %v2531 = vpop.f32.mrf.mxu0
    %2532 = vdwg.mxu0
    %2533 = vrot.lane.b32.xlu0 %v2210, 24
    %v2534 = vpop.permute.xlu0 %2533
    %2535 = vrot.lane.b32.xlu0 %v2213, 24
    %v2536 = vpop.permute.xlu0 %2535
    %2539 = vxpose.xlu0.b32.start [1/16] %v2534, 128
    %2540 = vxpose.xlu0.b32.cont [2/16] %v2536, 128
    %2541 = vxpose.xlu0.b32.cont [3/16] 0.0, 128
    %2542 = vxpose.xlu0.b32.cont [4/16] 0.0, 128
    %2543 = vxpose.xlu0.b32.cont [5/16] 0.0, 128
    %2544 = vxpose.xlu0.b32.cont [6/16] 0.0, 128
    %2545 = vxpose.xlu0.b32.cont [7/16] 0.0, 128
    %2546 = vxpose.xlu0.b32.cont [8/16] 0.0, 128
    %2547 = vxpose.xlu0.b32.cont [9/16] 0.0, 128
    %2548 = vxpose.xlu0.b32.cont [10/16] 0.0, 128
    %2549 = vxpose.xlu0.b32.cont [11/16] 0.0, 128
    %2550 = vxpose.xlu0.b32.cont [12/16] 0.0, 128
    %2551 = vxpose.xlu0.b32.cont [13/16] 0.0, 128
    %2552 = vxpose.xlu0.b32.cont [14/16] 0.0, 128
    %2553 = vxpose.xlu0.b32.cont [15/16] 0.0, 128
    %2554 = vxpose.xlu0.b32.end [16/16] 0.0, 128
    %v2555 = vpop.trf.xlu0
    %v2556 = vpop.trf.xlu0
    %v2557 = vpop.trf.xlu0
    %v2558 = vpop.trf.xlu0
    %v2559 = vpop.trf.xlu0
    %v2560 = vpop.trf.xlu0
    %v2561 = vpop.trf.xlu0
    %v2562 = vpop.trf.xlu0
    %v2563 = vpop.trf.xlu0
    %v2564 = vpop.trf.xlu0
    %v2565 = vpop.trf.xlu0
    %v2566 = vpop.trf.xlu0
    %v2567 = vpop.trf.xlu0
    %v2568 = vpop.trf.xlu0
    %v2569 = vpop.trf.xlu0
    %v2570 = vpop.trf.xlu0
    %v2571 = vpack.c.bf16 %v2555, %v2555
    %2573 = vrot.lane.b32.xlu0 %v2242, 120
    %v2574 = vpop.permute.xlu0 %2573
    %v2576 = vsel %vm273, %v2574, 0
    %v2579 = vsel %vm413, %v2571, 0
    %2581 = vmatprep.subr.bf16.mxu0 0
    %2582 = vmatpush1.bf16.msra.mxu0 0
    %2583 = vmatprep.subr.bf16.mxu0 0
    %2584 = vmatpush1.bf16.msra.mxu0 0
    %2585 = vmatprep.subr.bf16.mxu0 0
    %2586 = vmatpush1.bf16.msra.mxu0 0
    %2587 = vmatprep.subr.bf16.mxu0 0
    %2588 = vmatpush1.bf16.msra.mxu0 0
    %2589 = vmatprep.subr.bf16.mxu0 0
    %2590 = vmatpush1.bf16.msra.mxu0 0
    %2591 = vmatprep.subr.bf16.mxu0 0
    %2592 = vmatpush1.bf16.msra.mxu0 0
    %2593 = vmatprep.subr.bf16.mxu0 0
    %2594 = vmatpush1.bf16.msra.mxu0 0
    %2595 = vmatprep.subr.bf16.mxu0 0
    %2596 = vmatpush1.bf16.msra.mxu0 %v2579
    %2597 = vmatprep.subr.bf16.mxu0 0
    %2598 = vmatpush2.bf16.msra.mxu0 0
    %2599 = vmatprep.subr.bf16.mxu0 0
    %2600 = vmatpush2.bf16.msra.mxu0 0
    %2601 = vmatprep.subr.bf16.mxu0 0
    %2602 = vmatpush2.bf16.msra.mxu0 0
    %2603 = vmatprep.subr.bf16.mxu0 0
    %2604 = vmatpush2.bf16.msra.mxu0 0
    %2605 = vmatprep.subr.bf16.mxu0 0
    %2606 = vmatpush2.bf16.msra.mxu0 0
    %2607 = vmatprep.subr.bf16.mxu0 0
    %2608 = vmatpush2.bf16.msra.mxu0 0
    %2609 = vmatprep.subr.bf16.mxu0 0
    %2610 = vmatpush2.bf16.msra.mxu0 0
    %2611 = vmatprep.subr.bf16.mxu0 0
    %2612 = vmatpush2.bf16.msra.mxu0 0
    %2613 = vmatprep.mubr.bf16.mxu0 0
    %2614 = vmatmul.mubr.bf16.gmra.mxu0 %v2576
    %v2615 = vpop.f32.mrf.mxu0
    %v2616 = vadd.f32 0.0, %v2615
    %v2617 = vpop.f32.mrf.mxu0
    %v2618 = vpop.f32.mrf.mxu0
    %v2619 = vadd.f32 0.0, %v2618
    %v2620 = vpop.f32.mrf.mxu0
    %2621 = vdwg.mxu0
    %2622 = vrot.lane.b32.xlu0 %v2228, 112
    %v2623 = vpop.permute.xlu0 %2622
    %2624 = vrot.lane.b32.xlu0 %v2243, 80
    %v2625 = vpop.permute.xlu0 %2624
    %v2627 = vsel %vm273, %v2623, 0
    %v2630 = vsel %vm273, %v2625, 0
    %2632 = vmatprep.subr.bf16.mxu0 0
    %2633 = vmatpush1.bf16.xpose.msra.mxu0 0
    %2634 = vmatprep.subr.bf16.mxu0 0
    %2635 = vmatpush1.bf16.xpose.msra.mxu0 0
    %2636 = vmatprep.subr.bf16.mxu0 0
    %2637 = vmatpush1.bf16.xpose.msra.mxu0 0
    %2638 = vmatprep.subr.bf16.mxu0 0
    %2639 = vmatpush1.bf16.xpose.msra.mxu0 0
    %2640 = vmatprep.subr.bf16.mxu0 0
    %2641 = vmatpush1.bf16.xpose.msra.mxu0 0
    %2642 = vmatprep.subr.bf16.mxu0 0
    %2643 = vmatpush1.bf16.xpose.msra.mxu0 0
    %2644 = vmatprep.subr.bf16.mxu0 0
    %2645 = vmatpush1.bf16.xpose.msra.mxu0 0
    %2646 = vmatprep.subr.bf16.mxu0 0
    %2647 = vmatpush1.bf16.xpose.msra.mxu0 %v2630
    %2648 = vmatprep.subr.bf16.mxu0 0
    %2649 = vmatpush2.bf16.xpose.msra.mxu0 0
    %2650 = vmatprep.subr.bf16.mxu0 0
    %2651 = vmatpush2.bf16.xpose.msra.mxu0 0
    %2652 = vmatprep.subr.bf16.mxu0 0
    %2653 = vmatpush2.bf16.xpose.msra.mxu0 0
    %2654 = vmatprep.subr.bf16.mxu0 0
    %2655 = vmatpush2.bf16.xpose.msra.mxu0 0
    %2656 = vmatprep.subr.bf16.mxu0 0
    %2657 = vmatpush2.bf16.xpose.msra.mxu0 0
    %2658 = vmatprep.subr.bf16.mxu0 0
    %2659 = vmatpush2.bf16.xpose.msra.mxu0 0
    %2660 = vmatprep.subr.bf16.mxu0 0
    %2661 = vmatpush2.bf16.xpose.msra.mxu0 0
    %2662 = vmatprep.subr.bf16.mxu0 0
    %2663 = vmatpush2.bf16.xpose.msra.mxu0 0
    %2664 = vmatprep.mubr.bf16.mxu0 0
    %2665 = vmatmul.mubr.bf16.gmra.mxu0 %v2627
    %v2666 = vpop.f32.mrf.mxu0
    %v2667 = vadd.f32 0.0, %v2666
    %v2668 = vpop.f32.mrf.mxu0
    %v2669 = vpop.f32.mrf.mxu0
    %v2670 = vpop.f32.mrf.mxu0
    %2671 = vdwg.mxu0
    %2672 = vrot.lane.b32.xlu0 %v2229, 112
    %v2673 = vpop.permute.xlu0 %2672
    %2674 = vrot.lane.b32.xlu0 %v2244, 80
    %v2675 = vpop.permute.xlu0 %2674
    %v2677 = vsel %vm273, %v2673, 0
    %v2680 = vsel %vm273, %v2675, 0
    %2682 = vmatprep.subr.bf16.mxu0 0
    %2683 = vmatpush1.bf16.xpose.msra.mxu0 0
    %2684 = vmatprep.subr.bf16.mxu0 0
    %2685 = vmatpush1.bf16.xpose.msra.mxu0 0
    %2686 = vmatprep.subr.bf16.mxu0 0
    %2687 = vmatpush1.bf16.xpose.msra.mxu0 0
    %2688 = vmatprep.subr.bf16.mxu0 0
    %2689 = vmatpush1.bf16.xpose.msra.mxu0 0
    %2690 = vmatprep.subr.bf16.mxu0 0
    %2691 = vmatpush1.bf16.xpose.msra.mxu0 0
    %2692 = vmatprep.subr.bf16.mxu0 0
    %2693 = vmatpush1.bf16.xpose.msra.mxu0 0
    %2694 = vmatprep.subr.bf16.mxu0 0
    %2695 = vmatpush1.bf16.xpose.msra.mxu0 0
    %2696 = vmatprep.subr.bf16.mxu0 0
    %2697 = vmatpush1.bf16.xpose.msra.mxu0 %v2680
    %2698 = vmatprep.subr.bf16.mxu0 0
    %2699 = vmatpush2.bf16.xpose.msra.mxu0 0
    %2700 = vmatprep.subr.bf16.mxu0 0
    %2701 = vmatpush2.bf16.xpose.msra.mxu0 0
    %2702 = vmatprep.subr.bf16.mxu0 0
    %2703 = vmatpush2.bf16.xpose.msra.mxu0 0
    %2704 = vmatprep.subr.bf16.mxu0 0
    %2705 = vmatpush2.bf16.xpose.msra.mxu0 0
    %2706 = vmatprep.subr.bf16.mxu0 0
    %2707 = vmatpush2.bf16.xpose.msra.mxu0 0
    %2708 = vmatprep.subr.bf16.mxu0 0
    %2709 = vmatpush2.bf16.xpose.msra.mxu0 0
    %2710 = vmatprep.subr.bf16.mxu0 0
    %2711 = vmatpush2.bf16.xpose.msra.mxu0 0
    %2712 = vmatprep.subr.bf16.mxu0 0
    %2713 = vmatpush2.bf16.xpose.msra.mxu0 0
    %2714 = vmatprep.mubr.bf16.mxu0 0
    %2715 = vmatmul.mubr.bf16.gmra.mxu0 %v2677
    %v2716 = vpop.f32.mrf.mxu0
    %v2717 = vadd.f32 0.0, %v2716
    %v2718 = vpop.f32.mrf.mxu0
    %v2719 = vpop.f32.mrf.mxu0
    %v2720 = vpop.f32.mrf.mxu0
    %2721 = vdwg.mxu0
    %2722 = vrot.lane.b32.xlu0 %v2210, 16
    %v2723 = vpop.permute.xlu0 %2722
    %2724 = vrot.lane.b32.xlu0 %v2213, 16
    %v2725 = vpop.permute.xlu0 %2724
    %2728 = vxpose.xlu0.b32.start [1/16] %v2723, 128
    %2729 = vxpose.xlu0.b32.cont [2/16] %v2725, 128
    %2730 = vxpose.xlu0.b32.cont [3/16] 0.0, 128
    %2731 = vxpose.xlu0.b32.cont [4/16] 0.0, 128
    %2732 = vxpose.xlu0.b32.cont [5/16] 0.0, 128
    %2733 = vxpose.xlu0.b32.cont [6/16] 0.0, 128
    %2734 = vxpose.xlu0.b32.cont [7/16] 0.0, 128
    %2735 = vxpose.xlu0.b32.cont [8/16] 0.0, 128
    %2736 = vxpose.xlu0.b32.cont [9/16] 0.0, 128
    %2737 = vxpose.xlu0.b32.cont [10/16] 0.0, 128
    %2738 = vxpose.xlu0.b32.cont [11/16] 0.0, 128
    %2739 = vxpose.xlu0.b32.cont [12/16] 0.0, 128
    %2740 = vxpose.xlu0.b32.cont [13/16] 0.0, 128
    %2741 = vxpose.xlu0.b32.cont [14/16] 0.0, 128
    %2742 = vxpose.xlu0.b32.cont [15/16] 0.0, 128
    %2743 = vxpose.xlu0.b32.end [16/16] 0.0, 128
    %v2744 = vpop.trf.xlu0
    %v2745 = vpop.trf.xlu0
    %v2746 = vpop.trf.xlu0
    %v2747 = vpop.trf.xlu0
    %v2748 = vpop.trf.xlu0
    %v2749 = vpop.trf.xlu0
    %v2750 = vpop.trf.xlu0
    %v2751 = vpop.trf.xlu0
    %v2752 = vpop.trf.xlu0
    %v2753 = vpop.trf.xlu0
    %v2754 = vpop.trf.xlu0
    %v2755 = vpop.trf.xlu0
    %v2756 = vpop.trf.xlu0
    %v2757 = vpop.trf.xlu0
    %v2758 = vpop.trf.xlu0
    %v2759 = vpop.trf.xlu0
    %v2760 = vpack.c.bf16 %v2744, %v2744
    %2761 = vrot.lane.b32.xlu0 %v2242, 112
    %v2762 = vpop.permute.xlu0 %2761
    %v2764 = vsel %vm273, %v2762, 0
    %v2767 = vsel %vm413, %v2760, 0
    %2769 = vmatprep.subr.bf16.mxu0 0
    %2770 = vmatpush1.bf16.msra.mxu0 0
    %2771 = vmatprep.subr.bf16.mxu0 0
    %2772 = vmatpush1.bf16.msra.mxu0 0
    %2773 = vmatprep.subr.bf16.mxu0 0
    %2774 = vmatpush1.bf16.msra.mxu0 0
    %2775 = vmatprep.subr.bf16.mxu0 0
    %2776 = vmatpush1.bf16.msra.mxu0 0
    %2777 = vmatprep.subr.bf16.mxu0 0
    %2778 = vmatpush1.bf16.msra.mxu0 0
    %2779 = vmatprep.subr.bf16.mxu0 0
    %2780 = vmatpush1.bf16.msra.mxu0 0
    %2781 = vmatprep.subr.bf16.mxu0 0
    %2782 = vmatpush1.bf16.msra.mxu0 0
    %2783 = vmatprep.subr.bf16.mxu0 0
    %2784 = vmatpush1.bf16.msra.mxu0 %v2767
    %2785 = vmatprep.subr.bf16.mxu0 0
    %2786 = vmatpush2.bf16.msra.mxu0 0
    %2787 = vmatprep.subr.bf16.mxu0 0
    %2788 = vmatpush2.bf16.msra.mxu0 0
    %2789 = vmatprep.subr.bf16.mxu0 0
    %2790 = vmatpush2.bf16.msra.mxu0 0
    %2791 = vmatprep.subr.bf16.mxu0 0
    %2792 = vmatpush2.bf16.msra.mxu0 0
    %2793 = vmatprep.subr.bf16.mxu0 0
    %2794 = vmatpush2.bf16.msra.mxu0 0
    %2795 = vmatprep.subr.bf16.mxu0 0
    %2796 = vmatpush2.bf16.msra.mxu0 0
    %2797 = vmatprep.subr.bf16.mxu0 0
    %2798 = vmatpush2.bf16.msra.mxu0 0
    %2799 = vmatprep.subr.bf16.mxu0 0
    %2800 = vmatpush2.bf16.msra.mxu0 0
    %2801 = vmatprep.mubr.bf16.mxu0 0
    %2802 = vmatmul.mubr.bf16.gmra.mxu0 %v2764
    %v2803 = vpop.f32.mrf.mxu0
    %v2804 = vadd.f32 0.0, %v2803
    %v2805 = vpop.f32.mrf.mxu0
    %v2806 = vpop.f32.mrf.mxu0
    %v2807 = vadd.f32 0.0, %v2806
    %v2808 = vpop.f32.mrf.mxu0
    %2809 = vdwg.mxu0
    %2810 = vrot.lane.b32.xlu0 %v2228, 104
    %v2811 = vpop.permute.xlu0 %2810
    %2812 = vrot.lane.b32.xlu0 %v2243, 72
    %v2813 = vpop.permute.xlu0 %2812
    %v2815 = vsel %vm273, %v2811, 0
    %v2818 = vsel %vm273, %v2813, 0
    %2820 = vmatprep.subr.bf16.mxu0 0
    %2821 = vmatpush1.bf16.xpose.msra.mxu0 0
    %2822 = vmatprep.subr.bf16.mxu0 0
    %2823 = vmatpush1.bf16.xpose.msra.mxu0 0
    %2824 = vmatprep.subr.bf16.mxu0 0
    %2825 = vmatpush1.bf16.xpose.msra.mxu0 0
    %2826 = vmatprep.subr.bf16.mxu0 0
    %2827 = vmatpush1.bf16.xpose.msra.mxu0 0
    %2828 = vmatprep.subr.bf16.mxu0 0
    %2829 = vmatpush1.bf16.xpose.msra.mxu0 0
    %2830 = vmatprep.subr.bf16.mxu0 0
    %2831 = vmatpush1.bf16.xpose.msra.mxu0 0
    %2832 = vmatprep.subr.bf16.mxu0 0
    %2833 = vmatpush1.bf16.xpose.msra.mxu0 0
    %2834 = vmatprep.subr.bf16.mxu0 0
    %2835 = vmatpush1.bf16.xpose.msra.mxu0 %v2818
    %2836 = vmatprep.subr.bf16.mxu0 0
    %2837 = vmatpush2.bf16.xpose.msra.mxu0 0
    %2838 = vmatprep.subr.bf16.mxu0 0
    %2839 = vmatpush2.bf16.xpose.msra.mxu0 0
    %2840 = vmatprep.subr.bf16.mxu0 0
    %2841 = vmatpush2.bf16.xpose.msra.mxu0 0
    %2842 = vmatprep.subr.bf16.mxu0 0
    %2843 = vmatpush2.bf16.xpose.msra.mxu0 0
    %2844 = vmatprep.subr.bf16.mxu0 0
    %2845 = vmatpush2.bf16.xpose.msra.mxu0 0
    %2846 = vmatprep.subr.bf16.mxu0 0
    %2847 = vmatpush2.bf16.xpose.msra.mxu0 0
    %2848 = vmatprep.subr.bf16.mxu0 0
    %2849 = vmatpush2.bf16.xpose.msra.mxu0 0
    %2850 = vmatprep.subr.bf16.mxu0 0
    %2851 = vmatpush2.bf16.xpose.msra.mxu0 0
    %2852 = vmatprep.mubr.bf16.mxu0 0
    %2853 = vmatmul.mubr.bf16.gmra.mxu0 %v2815
    %v2854 = vpop.f32.mrf.mxu0
    %v2855 = vadd.f32 0.0, %v2854
    %v2856 = vpop.f32.mrf.mxu0
    %v2857 = vpop.f32.mrf.mxu0
    %v2858 = vpop.f32.mrf.mxu0
    %2859 = vdwg.mxu0
    %2860 = vrot.lane.b32.xlu0 %v2229, 104
    %v2861 = vpop.permute.xlu0 %2860
    %2862 = vrot.lane.b32.xlu0 %v2244, 72
    %v2863 = vpop.permute.xlu0 %2862
    %v2865 = vsel %vm273, %v2861, 0
    %v2868 = vsel %vm273, %v2863, 0
    %2870 = vmatprep.subr.bf16.mxu0 0
    %2871 = vmatpush1.bf16.xpose.msra.mxu0 0
    %2872 = vmatprep.subr.bf16.mxu0 0
    %2873 = vmatpush1.bf16.xpose.msra.mxu0 0
    %2874 = vmatprep.subr.bf16.mxu0 0
    %2875 = vmatpush1.bf16.xpose.msra.mxu0 0
    %2876 = vmatprep.subr.bf16.mxu0 0
    %2877 = vmatpush1.bf16.xpose.msra.mxu0 0
    %2878 = vmatprep.subr.bf16.mxu0 0
    %2879 = vmatpush1.bf16.xpose.msra.mxu0 0
    %2880 = vmatprep.subr.bf16.mxu0 0
    %2881 = vmatpush1.bf16.xpose.msra.mxu0 0
    %2882 = vmatprep.subr.bf16.mxu0 0
    %2883 = vmatpush1.bf16.xpose.msra.mxu0 0
    %2884 = vmatprep.subr.bf16.mxu0 0
    %2885 = vmatpush1.bf16.xpose.msra.mxu0 %v2868
    %2886 = vmatprep.subr.bf16.mxu0 0
    %2887 = vmatpush2.bf16.xpose.msra.mxu0 0
    %2888 = vmatprep.subr.bf16.mxu0 0
    %2889 = vmatpush2.bf16.xpose.msra.mxu0 0
    %2890 = vmatprep.subr.bf16.mxu0 0
    %2891 = vmatpush2.bf16.xpose.msra.mxu0 0
    %2892 = vmatprep.subr.bf16.mxu0 0
    %2893 = vmatpush2.bf16.xpose.msra.mxu0 0
    %2894 = vmatprep.subr.bf16.mxu0 0
    %2895 = vmatpush2.bf16.xpose.msra.mxu0 0
    %2896 = vmatprep.subr.bf16.mxu0 0
    %2897 = vmatpush2.bf16.xpose.msra.mxu0 0
    %2898 = vmatprep.subr.bf16.mxu0 0
    %2899 = vmatpush2.bf16.xpose.msra.mxu0 0
    %2900 = vmatprep.subr.bf16.mxu0 0
    %2901 = vmatpush2.bf16.xpose.msra.mxu0 0
    %2902 = vmatprep.mubr.bf16.mxu0 0
    %2903 = vmatmul.mubr.bf16.gmra.mxu0 %v2865
    %v2904 = vpop.f32.mrf.mxu0
    %v2905 = vadd.f32 0.0, %v2904
    %v2906 = vpop.f32.mrf.mxu0
    %v2907 = vpop.f32.mrf.mxu0
    %v2908 = vpop.f32.mrf.mxu0
    %2909 = vdwg.mxu0
    %2910 = vrot.lane.b32.xlu0 %v2210, 8
    %v2911 = vpop.permute.xlu0 %2910
    %2912 = vrot.lane.b32.xlu0 %v2213, 8
    %v2913 = vpop.permute.xlu0 %2912
    %2916 = vxpose.xlu0.b32.start [1/16] %v2911, 128
    %2917 = vxpose.xlu0.b32.cont [2/16] %v2913, 128
    %2918 = vxpose.xlu0.b32.cont [3/16] 0.0, 128
    %2919 = vxpose.xlu0.b32.cont [4/16] 0.0, 128
    %2920 = vxpose.xlu0.b32.cont [5/16] 0.0, 128
    %2921 = vxpose.xlu0.b32.cont [6/16] 0.0, 128
    %2922 = vxpose.xlu0.b32.cont [7/16] 0.0, 128
    %2923 = vxpose.xlu0.b32.cont [8/16] 0.0, 128
    %2924 = vxpose.xlu0.b32.cont [9/16] 0.0, 128
    %2925 = vxpose.xlu0.b32.cont [10/16] 0.0, 128
    %2926 = vxpose.xlu0.b32.cont [11/16] 0.0, 128
    %2927 = vxpose.xlu0.b32.cont [12/16] 0.0, 128
    %2928 = vxpose.xlu0.b32.cont [13/16] 0.0, 128
    %2929 = vxpose.xlu0.b32.cont [14/16] 0.0, 128
    %2930 = vxpose.xlu0.b32.cont [15/16] 0.0, 128
    %2931 = vxpose.xlu0.b32.end [16/16] 0.0, 128
    %v2932 = vpop.trf.xlu0
    %v2933 = vpop.trf.xlu0
    %v2934 = vpop.trf.xlu0
    %v2935 = vpop.trf.xlu0
    %v2936 = vpop.trf.xlu0
    %v2937 = vpop.trf.xlu0
    %v2938 = vpop.trf.xlu0
    %v2939 = vpop.trf.xlu0
    %v2940 = vpop.trf.xlu0
    %v2941 = vpop.trf.xlu0
    %v2942 = vpop.trf.xlu0
    %v2943 = vpop.trf.xlu0
    %v2944 = vpop.trf.xlu0
    %v2945 = vpop.trf.xlu0
    %v2946 = vpop.trf.xlu0
    %v2947 = vpop.trf.xlu0
    %v2948 = vpack.c.bf16 %v2932, %v2932
    %2949 = vrot.lane.b32.xlu0 %v2242, 104
    %v2950 = vpop.permute.xlu0 %2949
    %v2952 = vsel %vm273, %v2950, 0
    %v2955 = vsel %vm413, %v2948, 0
    %2957 = vmatprep.subr.bf16.mxu0 0
    %2958 = vmatpush1.bf16.msra.mxu0 0
    %2959 = vmatprep.subr.bf16.mxu0 0
    %2960 = vmatpush1.bf16.msra.mxu0 0
    %2961 = vmatprep.subr.bf16.mxu0 0
    %2962 = vmatpush1.bf16.msra.mxu0 0
    %2963 = vmatprep.subr.bf16.mxu0 0
    %2964 = vmatpush1.bf16.msra.mxu0 0
    %2965 = vmatprep.subr.bf16.mxu0 0
    %2966 = vmatpush1.bf16.msra.mxu0 0
    %2967 = vmatprep.subr.bf16.mxu0 0
    %2968 = vmatpush1.bf16.msra.mxu0 0
    %2969 = vmatprep.subr.bf16.mxu0 0
    %2970 = vmatpush1.bf16.msra.mxu0 0
    %2971 = vmatprep.subr.bf16.mxu0 0
    %2972 = vmatpush1.bf16.msra.mxu0 %v2955
    %2973 = vmatprep.subr.bf16.mxu0 0
    %2974 = vmatpush2.bf16.msra.mxu0 0
    %2975 = vmatprep.subr.bf16.mxu0 0
    %2976 = vmatpush2.bf16.msra.mxu0 0
    %2977 = vmatprep.subr.bf16.mxu0 0
    %2978 = vmatpush2.bf16.msra.mxu0 0
    %2979 = vmatprep.subr.bf16.mxu0 0
    %2980 = vmatpush2.bf16.msra.mxu0 0
    %2981 = vmatprep.subr.bf16.mxu0 0
    %2982 = vmatpush2.bf16.msra.mxu0 0
    %2983 = vmatprep.subr.bf16.mxu0 0
    %2984 = vmatpush2.bf16.msra.mxu0 0
    %2985 = vmatprep.subr.bf16.mxu0 0
    %2986 = vmatpush2.bf16.msra.mxu0 0
    %2987 = vmatprep.subr.bf16.mxu0 0
    %2988 = vmatpush2.bf16.msra.mxu0 0
    %2989 = vmatprep.mubr.bf16.mxu0 0
    %2990 = vmatmul.mubr.bf16.gmra.mxu0 %v2952
    %v2991 = vpop.f32.mrf.mxu0
    %v2992 = vadd.f32 0.0, %v2991
    %v2993 = vpop.f32.mrf.mxu0
    %v2994 = vpop.f32.mrf.mxu0
    %v2995 = vadd.f32 0.0, %v2994
    %v2996 = vpop.f32.mrf.mxu0
    %2997 = vdwg.mxu0
    %3006 = vrot.lane.b32.xlu0 %v2425, 1
    %v3007 = vpop.permute.xlu0 %3006
    %3008 = vrot.lane.b32.xlu0 %v2428, 1
    %v3009 = vpop.permute.xlu0 %3008
    %3010 = vrot.lane.b32.xlu0 %v2616, 1
    %v3011 = vpop.permute.xlu0 %3010
    %3012 = vrot.lane.b32.xlu0 %v2619, 1
    %v3013 = vpop.permute.xlu0 %3012
    %3014 = vrot.lane.b32.xlu0 %v2804, 1
    %v3015 = vpop.permute.xlu0 %3014
    %3016 = vrot.lane.b32.xlu0 %v2807, 1
    %v3017 = vpop.permute.xlu0 %3016
    %3018 = vrot.lane.b32.xlu0 %v2992, 1
    %v3019 = vpop.permute.xlu0 %3018
    %3020 = vrot.lane.b32.xlu0 %v2995, 1
    %v3021 = vpop.permute.xlu0 %3020
    %3030 = vrot.lane.b32.xlu0 %v2425, 2
    %v3031 = vpop.permute.xlu0 %3030
    %3032 = vrot.lane.b32.xlu0 %v2428, 2
    %v3033 = vpop.permute.xlu0 %3032
    %3034 = vrot.lane.b32.xlu0 %v2616, 2
    %v3035 = vpop.permute.xlu0 %3034
    %3036 = vrot.lane.b32.xlu0 %v2619, 2
    %v3037 = vpop.permute.xlu0 %3036
    %3038 = vrot.lane.b32.xlu0 %v2804, 2
    %v3039 = vpop.permute.xlu0 %3038
    %3040 = vrot.lane.b32.xlu0 %v2807, 2
    %v3041 = vpop.permute.xlu0 %3040
    %3042 = vrot.lane.b32.xlu0 %v2992, 2
    %v3043 = vpop.permute.xlu0 %3042
    %3044 = vrot.lane.b32.xlu0 %v2995, 2
    %v3045 = vpop.permute.xlu0 %3044
    %3054 = vrot.lane.b32.xlu0 %v2425, 3
    %v3055 = vpop.permute.xlu0 %3054
    %3056 = vrot.lane.b32.xlu0 %v2428, 3
    %v3057 = vpop.permute.xlu0 %3056
    %3058 = vrot.lane.b32.xlu0 %v2616, 3
    %v3059 = vpop.permute.xlu0 %3058
    %3060 = vrot.lane.b32.xlu0 %v2619, 3
    %v3061 = vpop.permute.xlu0 %3060
    %3062 = vrot.lane.b32.xlu0 %v2804, 3
    %v3063 = vpop.permute.xlu0 %3062
    %3064 = vrot.lane.b32.xlu0 %v2807, 3
    %v3065 = vpop.permute.xlu0 %3064
    %3066 = vrot.lane.b32.xlu0 %v2992, 3
    %v3067 = vpop.permute.xlu0 %3066
    %3068 = vrot.lane.b32.xlu0 %v2995, 3
    %v3069 = vpop.permute.xlu0 %3068
    %3078 = vrot.lane.b32.xlu0 %v2425, 4
    %v3079 = vpop.permute.xlu0 %3078
    %3080 = vrot.lane.b32.xlu0 %v2428, 4
    %v3081 = vpop.permute.xlu0 %3080
    %3082 = vrot.lane.b32.xlu0 %v2616, 4
    %v3083 = vpop.permute.xlu0 %3082
    %3084 = vrot.lane.b32.xlu0 %v2619, 4
    %v3085 = vpop.permute.xlu0 %3084
    %3086 = vrot.lane.b32.xlu0 %v2804, 4
    %v3087 = vpop.permute.xlu0 %3086
    %3088 = vrot.lane.b32.xlu0 %v2807, 4
    %v3089 = vpop.permute.xlu0 %3088
    %3090 = vrot.lane.b32.xlu0 %v2992, 4
    %v3091 = vpop.permute.xlu0 %3090
    %3092 = vrot.lane.b32.xlu0 %v2995, 4
    %v3093 = vpop.permute.xlu0 %3092
    %3102 = vrot.lane.b32.xlu0 %v2425, 5
    %v3103 = vpop.permute.xlu0 %3102
    %3104 = vrot.lane.b32.xlu0 %v2428, 5
    %v3105 = vpop.permute.xlu0 %3104
    %3106 = vrot.lane.b32.xlu0 %v2616, 5
    %v3107 = vpop.permute.xlu0 %3106
    %3108 = vrot.lane.b32.xlu0 %v2619, 5
    %v3109 = vpop.permute.xlu0 %3108
    %3110 = vrot.lane.b32.xlu0 %v2804, 5
    %v3111 = vpop.permute.xlu0 %3110
    %3112 = vrot.lane.b32.xlu0 %v2807, 5
    %v3113 = vpop.permute.xlu0 %3112
    %3114 = vrot.lane.b32.xlu0 %v2992, 5
    %v3115 = vpop.permute.xlu0 %3114
    %3116 = vrot.lane.b32.xlu0 %v2995, 5
    %v3117 = vpop.permute.xlu0 %3116
    %3126 = vrot.lane.b32.xlu0 %v2425, 6
    %v3127 = vpop.permute.xlu0 %3126
    %3128 = vrot.lane.b32.xlu0 %v2428, 6
    %v3129 = vpop.permute.xlu0 %3128
    %3130 = vrot.lane.b32.xlu0 %v2616, 6
    %v3131 = vpop.permute.xlu0 %3130
    %3132 = vrot.lane.b32.xlu0 %v2619, 6
    %v3133 = vpop.permute.xlu0 %3132
    %3134 = vrot.lane.b32.xlu0 %v2804, 6
    %v3135 = vpop.permute.xlu0 %3134
    %3136 = vrot.lane.b32.xlu0 %v2807, 6
    %v3137 = vpop.permute.xlu0 %3136
    %3138 = vrot.lane.b32.xlu0 %v2992, 6
    %v3139 = vpop.permute.xlu0 %3138
    %3140 = vrot.lane.b32.xlu0 %v2995, 6
    %v3141 = vpop.permute.xlu0 %3140
    %3150 = vrot.lane.b32.xlu0 %v2425, 7
    %v3151 = vpop.permute.xlu0 %3150
    %3152 = vrot.lane.b32.xlu0 %v2428, 7
    %v3153 = vpop.permute.xlu0 %3152
    %3154 = vrot.lane.b32.xlu0 %v2616, 7
    %v3155 = vpop.permute.xlu0 %3154
    %3156 = vrot.lane.b32.xlu0 %v2619, 7
    %v3157 = vpop.permute.xlu0 %3156
    %3158 = vrot.lane.b32.xlu0 %v2804, 7
    %v3159 = vpop.permute.xlu0 %3158
    %3160 = vrot.lane.b32.xlu0 %v2807, 7
    %v3161 = vpop.permute.xlu0 %3160
    %3162 = vrot.lane.b32.xlu0 %v2992, 7
    %v3163 = vpop.permute.xlu0 %3162
    %3164 = vrot.lane.b32.xlu0 %v2995, 7
    %v3165 = vpop.permute.xlu0 %3164
    %v3174 = vsel %vm1201, %v2425, %v3007
    %v3175 = vsel %vm1201, %v2428, %v3009
    %v3176 = vsel %vm1201, %v2616, %v3011
    %v3177 = vsel %vm1201, %v2619, %v3013
    %v3178 = vsel %vm1201, %v2804, %v3015
    %v3179 = vsel %vm1201, %v2807, %v3017
    %v3180 = vsel %vm1201, %v2992, %v3019
    %v3181 = vsel %vm1201, %v2995, %v3021
    %v3182 = vsel %vm1210, %v3174, %v3031
    %v3183 = vsel %vm1210, %v3175, %v3033
    %v3184 = vsel %vm1210, %v3176, %v3035
    %v3185 = vsel %vm1210, %v3177, %v3037
    %v3186 = vsel %vm1210, %v3178, %v3039
    %v3187 = vsel %vm1210, %v3179, %v3041
    %v3188 = vsel %vm1210, %v3180, %v3043
    %v3189 = vsel %vm1210, %v3181, %v3045
    %v3190 = vsel %vm1219, %v3182, %v3055
    %v3191 = vsel %vm1219, %v3183, %v3057
    %v3192 = vsel %vm1219, %v3184, %v3059
    %v3193 = vsel %vm1219, %v3185, %v3061
    %v3194 = vsel %vm1219, %v3186, %v3063
    %v3195 = vsel %vm1219, %v3187, %v3065
    %v3196 = vsel %vm1219, %v3188, %v3067
    %v3197 = vsel %vm1219, %v3189, %v3069
    %v3198 = vsel %vm413, %v3190, %v3079
    %v3199 = vsel %vm413, %v3191, %v3081
    %v3200 = vsel %vm413, %v3192, %v3083
    %v3201 = vsel %vm413, %v3193, %v3085
    %v3202 = vsel %vm413, %v3194, %v3087
    %v3203 = vsel %vm413, %v3195, %v3089
    %v3204 = vsel %vm413, %v3196, %v3091
    %v3205 = vsel %vm413, %v3197, %v3093
    %v3206 = vsel %vm1236, %v3198, %v3103
    %v3207 = vsel %vm1236, %v3199, %v3105
    %v3208 = vsel %vm1236, %v3200, %v3107
    %v3209 = vsel %vm1236, %v3201, %v3109
    %v3210 = vsel %vm1236, %v3202, %v3111
    %v3211 = vsel %vm1236, %v3203, %v3113
    %v3212 = vsel %vm1236, %v3204, %v3115
    %v3213 = vsel %vm1236, %v3205, %v3117
    %v3214 = vsel %vm1245, %v3206, %v3127
    %v3215 = vsel %vm1245, %v3207, %v3129
    %v3216 = vsel %vm1245, %v3208, %v3131
    %v3217 = vsel %vm1245, %v3209, %v3133
    %v3218 = vsel %vm1245, %v3210, %v3135
    %v3219 = vsel %vm1245, %v3211, %v3137
    %v3220 = vsel %vm1245, %v3212, %v3139
    %v3221 = vsel %vm1245, %v3213, %v3141
    %v3222 = vsel %vm1254, %v3214, %v3151
    %v3223 = vsel %vm1254, %v3215, %v3153
    %v3224 = vsel %vm1254, %v3216, %v3155
    %v3225 = vsel %vm1254, %v3217, %v3157
    %v3226 = vsel %vm1254, %v3218, %v3159
    %v3227 = vsel %vm1254, %v3219, %v3161
    %v3228 = vsel %vm1254, %v3220, %v3163
    %v3229 = vsel %vm1254, %v3221, %v3165
    %3238 = vrot.lane.b32.xlu0 %v3222, 120
    %v3239 = vpop.permute.xlu0 %3238
    %3240 = vrot.lane.b32.xlu0 %v3223, 120
    %v3241 = vpop.permute.xlu0 %3240
    %3242 = vrot.lane.b32.xlu0 %v3224, 120
    %v3243 = vpop.permute.xlu0 %3242
    %3244 = vrot.lane.b32.xlu0 %v3225, 120
    %v3245 = vpop.permute.xlu0 %3244
    %3246 = vrot.lane.b32.xlu0 %v3226, 120
    %v3247 = vpop.permute.xlu0 %3246
    %3248 = vrot.lane.b32.xlu0 %v3227, 120
    %v3249 = vpop.permute.xlu0 %3248
    %3250 = vrot.lane.b32.xlu0 %v3228, 120
    %v3251 = vpop.permute.xlu0 %3250
    %3252 = vrot.lane.b32.xlu0 %v3229, 120
    %v3253 = vpop.permute.xlu0 %3252
    %v3262 = vadd.f32 %v2289, %v3239
    %v3263 = vadd.f32 %v2338, %v3241
    %v3264 = vadd.f32 %v2477, %v3243
    %v3265 = vadd.f32 %v2528, %v3245
    %v3266 = vadd.f32 %v2667, %v3247
    %v3267 = vadd.f32 %v2717, %v3249
    %v3268 = vadd.f32 %v2855, %v3251
    %v3269 = vadd.f32 %v2905, %v3253
    %v3270 = vadd.f32 %v3262, %v163
    %v3271 = vadd.f32 %v3263, %v164
    %v3272 = vadd.f32 %v3264, %v163
    %v3273 = vadd.f32 %v3265, %v164
    %v3274 = vadd.f32 %v3266, %v163
    %v3275 = vadd.f32 %v3267, %v164
    %v3276 = vadd.f32 %v3268, %v163
    %v3277 = vadd.f32 %v3269, %v164
    %v3278 = vsel %vm273, %v3270, -inf
    %3279 = vmax.xlane.f32.xlu0 %v3278
    %v3280 = vpop.xlane.xlu0 %3279
    %v3281 = vsel %vm273, %v3271, -inf
    %3282 = vmax.xlane.f32.xlu0 %v3281
    %v3283 = vpop.xlane.xlu0 %3282
    %v3284 = vsel %vm273, %v3272, -inf
    %3285 = vmax.xlane.f32.xlu0 %v3284
    %v3286 = vpop.xlane.xlu0 %3285
    %v3287 = vsel %vm273, %v3273, -inf
    %3288 = vmax.xlane.f32.xlu0 %v3287
    %v3289 = vpop.xlane.xlu0 %3288
    %v3290 = vsel %vm273, %v3274, -inf
    %3291 = vmax.xlane.f32.xlu0 %v3290
    %v3292 = vpop.xlane.xlu0 %3291
    %v3293 = vsel %vm273, %v3275, -inf
    %3294 = vmax.xlane.f32.xlu0 %v3293
    %v3295 = vpop.xlane.xlu0 %3294
    %v3296 = vsel %vm273, %v3276, -inf
    %3297 = vmax.xlane.f32.xlu0 %v3296
    %v3298 = vpop.xlane.xlu0 %3297
    %v3299 = vsel %vm273, %v3277, -inf
    %3300 = vmax.xlane.f32.xlu0 %v3299
    %v3301 = vpop.xlane.xlu0 %3300
    %v3302 = vsub.f32 %v3270, %v3280
    %v3303 = vsub.f32 %v3271, %v3283
    %v3304 = vsub.f32 %v3272, %v3286
    %v3305 = vsub.f32 %v3273, %v3289
    %v3306 = vsub.f32 %v3274, %v3292
    %v3307 = vsub.f32 %v3275, %v3295
    %v3308 = vsub.f32 %v3276, %v3298
    %v3309 = vsub.f32 %v3277, %v3301
    %v3310 = vmul.f32 %v3302, 1.442695
    %v3311 = vpow.pop %v3310
    %v3312 = vmul.f32 %v3303, 1.442695
    %v3313 = vpow.pop %v3312
    %v3314 = vmul.f32 %v3304, 1.442695
    %v3315 = vpow.pop %v3314
    %v3316 = vmul.f32 %v3305, 1.442695
    %v3317 = vpow.pop %v3316
    %v3318 = vmul.f32 %v3306, 1.442695
    %v3319 = vpow.pop %v3318
    %v3320 = vmul.f32 %v3307, 1.442695
    %v3321 = vpow.pop %v3320
    %v3322 = vmul.f32 %v3308, 1.442695
    %v3323 = vpow.pop %v3322
    %v3324 = vmul.f32 %v3309, 1.442695
    %v3325 = vpow.pop %v3324
    %v3326 = vsel %vm273, %v3311, 0.0
    %3327 = vadd.xlane.f32.xlu0 %v3326
    %v3328 = vpop.xlane.xlu0 %3327
    %v3329 = vsel %vm273, %v3313, 0.0
    %3330 = vadd.xlane.f32.xlu0 %v3329
    %v3331 = vpop.xlane.xlu0 %3330
    %v3332 = vsel %vm273, %v3315, 0.0
    %3333 = vadd.xlane.f32.xlu0 %v3332
    %v3334 = vpop.xlane.xlu0 %3333
    %v3335 = vsel %vm273, %v3317, 0.0
    %3336 = vadd.xlane.f32.xlu0 %v3335
    %v3337 = vpop.xlane.xlu0 %3336
    %v3338 = vsel %vm273, %v3319, 0.0
    %3339 = vadd.xlane.f32.xlu0 %v3338
    %v3340 = vpop.xlane.xlu0 %3339
    %v3341 = vsel %vm273, %v3321, 0.0
    %3342 = vadd.xlane.f32.xlu0 %v3341
    %v3343 = vpop.xlane.xlu0 %3342
    %v3344 = vsel %vm273, %v3323, 0.0
    %3345 = vadd.xlane.f32.xlu0 %v3344
    %v3346 = vpop.xlane.xlu0 %3345
    %v3347 = vsel %vm273, %v3325, 0.0
    %3348 = vadd.xlane.f32.xlu0 %v3347
    %v3349 = vpop.xlane.xlu0 %3348
    %v3350 = vrcp.pop %v3328
    %v3351 = vrcp.pop %v3331
    %v3352 = vrcp.pop %v3334
    %v3353 = vrcp.pop %v3337
    %v3354 = vrcp.pop %v3340
    %v3355 = vrcp.pop %v3343
    %v3356 = vrcp.pop %v3346
    %v3357 = vrcp.pop %v3349
    %v3358 = vmul.f32 %v3311, %v3350
    %v3359 = vmul.f32 %v3313, %v3351
    %v3360 = vmul.f32 %v3315, %v3352
    %v3361 = vmul.f32 %v3317, %v3353
    %v3362 = vmul.f32 %v3319, %v3354
    %v3363 = vmul.f32 %v3321, %v3355
    %v3364 = vmul.f32 %v3323, %v3356
    %v3365 = vmul.f32 %v3325, %v3357
    %v3366 = vpack.c.bf16 %v3358, %v3358
    %v3367 = vpack.c.bf16 %v3359, %v3359
    %v3368 = vpack.c.bf16 %v3360, %v3360
    %v3369 = vpack.c.bf16 %v3361, %v3361
    %v3370 = vpack.c.bf16 %v3362, %v3362
    %v3371 = vpack.c.bf16 %v3363, %v3363
    %v3372 = vpack.c.bf16 %v3364, %v3364
    %v3373 = vpack.c.bf16 %v3365, %v3365
    %3374 = vrot.lane.b32.xlu0 %v2243, 64
    %v3375 = vpop.permute.xlu0 %3374
    %v3377 = vsel %vm273, %v3366, 0
    %v3380 = vsel %vm413, %v3375, 0
    %3382 = vmatprep.subr.bf16.mxu0 0
    %3383 = vmatpush1.bf16.msra.mxu0 0
    %3384 = vmatprep.subr.bf16.mxu0 0
    %3385 = vmatpush1.bf16.msra.mxu0 0
    %3386 = vmatprep.subr.bf16.mxu0 0
    %3387 = vmatpush1.bf16.msra.mxu0 0
    %3388 = vmatprep.subr.bf16.mxu0 0
    %3389 = vmatpush1.bf16.msra.mxu0 0
    %3390 = vmatprep.subr.bf16.mxu0 0
    %3391 = vmatpush1.bf16.msra.mxu0 0
    %3392 = vmatprep.subr.bf16.mxu0 0
    %3393 = vmatpush1.bf16.msra.mxu0 0
    %3394 = vmatprep.subr.bf16.mxu0 0
    %3395 = vmatpush1.bf16.msra.mxu0 0
    %3396 = vmatprep.subr.bf16.mxu0 0
    %3397 = vmatpush1.bf16.msra.mxu0 %v3380
    %3398 = vmatprep.subr.bf16.mxu0 0
    %3399 = vmatpush2.bf16.msra.mxu0 0
    %3400 = vmatprep.subr.bf16.mxu0 0
    %3401 = vmatpush2.bf16.msra.mxu0 0
    %3402 = vmatprep.subr.bf16.mxu0 0
    %3403 = vmatpush2.bf16.msra.mxu0 0
    %3404 = vmatprep.subr.bf16.mxu0 0
    %3405 = vmatpush2.bf16.msra.mxu0 0
    %3406 = vmatprep.subr.bf16.mxu0 0
    %3407 = vmatpush2.bf16.msra.mxu0 0
    %3408 = vmatprep.subr.bf16.mxu0 0
    %3409 = vmatpush2.bf16.msra.mxu0 0
    %3410 = vmatprep.subr.bf16.mxu0 0
    %3411 = vmatpush2.bf16.msra.mxu0 0
    %3412 = vmatprep.subr.bf16.mxu0 0
    %3413 = vmatpush2.bf16.msra.mxu0 0
    %3414 = vmatprep.mubr.bf16.mxu0 0
    %3415 = vmatmul.mubr.bf16.gmra.mxu0 %v3377
    %v3416 = vpop.f32.mrf.mxu0
    %v3417 = vadd.f32 0.0, %v3416
    %v3418 = vpop.f32.mrf.mxu0
    %v3419 = vpop.f32.mrf.mxu0
    %v3420 = vpop.f32.mrf.mxu0
    %3421 = vdwg.mxu0
    %3422 = vrot.lane.b32.xlu0 %v2244, 64
    %v3423 = vpop.permute.xlu0 %3422
    %v3425 = vsel %vm273, %v3367, 0
    %v3428 = vsel %vm413, %v3423, 0
    %3430 = vmatprep.subr.bf16.mxu0 0
    %3431 = vmatpush1.bf16.msra.mxu0 0
    %3432 = vmatprep.subr.bf16.mxu0 0
    %3433 = vmatpush1.bf16.msra.mxu0 0
    %3434 = vmatprep.subr.bf16.mxu0 0
    %3435 = vmatpush1.bf16.msra.mxu0 0
    %3436 = vmatprep.subr.bf16.mxu0 0
    %3437 = vmatpush1.bf16.msra.mxu0 0
    %3438 = vmatprep.subr.bf16.mxu0 0
    %3439 = vmatpush1.bf16.msra.mxu0 0
    %3440 = vmatprep.subr.bf16.mxu0 0
    %3441 = vmatpush1.bf16.msra.mxu0 0
    %3442 = vmatprep.subr.bf16.mxu0 0
    %3443 = vmatpush1.bf16.msra.mxu0 0
    %3444 = vmatprep.subr.bf16.mxu0 0
    %3445 = vmatpush1.bf16.msra.mxu0 %v3428
    %3446 = vmatprep.subr.bf16.mxu0 0
    %3447 = vmatpush2.bf16.msra.mxu0 0
    %3448 = vmatprep.subr.bf16.mxu0 0
    %3449 = vmatpush2.bf16.msra.mxu0 0
    %3450 = vmatprep.subr.bf16.mxu0 0
    %3451 = vmatpush2.bf16.msra.mxu0 0
    %3452 = vmatprep.subr.bf16.mxu0 0
    %3453 = vmatpush2.bf16.msra.mxu0 0
    %3454 = vmatprep.subr.bf16.mxu0 0
    %3455 = vmatpush2.bf16.msra.mxu0 0
    %3456 = vmatprep.subr.bf16.mxu0 0
    %3457 = vmatpush2.bf16.msra.mxu0 0
    %3458 = vmatprep.subr.bf16.mxu0 0
    %3459 = vmatpush2.bf16.msra.mxu0 0
    %3460 = vmatprep.subr.bf16.mxu0 0
    %3461 = vmatpush2.bf16.msra.mxu0 0
    %3462 = vmatprep.mubr.bf16.mxu0 0
    %3463 = vmatmul.mubr.bf16.gmra.mxu0 %v3425
    %v3464 = vpop.f32.mrf.mxu0
    %v3465 = vadd.f32 0.0, %v3464
    %v3466 = vpop.f32.mrf.mxu0
    %v3467 = vpop.f32.mrf.mxu0
    %v3468 = vpop.f32.mrf.mxu0
    %3469 = vdwg.mxu0
    %3470 = vrot.lane.b32.xlu0 %v2243, 56
    %v3471 = vpop.permute.xlu0 %3470
    %v3473 = vsel %vm273, %v3368, 0
    %v3476 = vsel %vm413, %v3471, 0
    %3478 = vmatprep.subr.bf16.mxu0 0
    %3479 = vmatpush1.bf16.msra.mxu0 0
    %3480 = vmatprep.subr.bf16.mxu0 0
    %3481 = vmatpush1.bf16.msra.mxu0 0
    %3482 = vmatprep.subr.bf16.mxu0 0
    %3483 = vmatpush1.bf16.msra.mxu0 0
    %3484 = vmatprep.subr.bf16.mxu0 0
    %3485 = vmatpush1.bf16.msra.mxu0 0
    %3486 = vmatprep.subr.bf16.mxu0 0
    %3487 = vmatpush1.bf16.msra.mxu0 0
    %3488 = vmatprep.subr.bf16.mxu0 0
    %3489 = vmatpush1.bf16.msra.mxu0 0
    %3490 = vmatprep.subr.bf16.mxu0 0
    %3491 = vmatpush1.bf16.msra.mxu0 0
    %3492 = vmatprep.subr.bf16.mxu0 0
    %3493 = vmatpush1.bf16.msra.mxu0 %v3476
    %3494 = vmatprep.subr.bf16.mxu0 0
    %3495 = vmatpush2.bf16.msra.mxu0 0
    %3496 = vmatprep.subr.bf16.mxu0 0
    %3497 = vmatpush2.bf16.msra.mxu0 0
    %3498 = vmatprep.subr.bf16.mxu0 0
    %3499 = vmatpush2.bf16.msra.mxu0 0
    %3500 = vmatprep.subr.bf16.mxu0 0
    %3501 = vmatpush2.bf16.msra.mxu0 0
    %3502 = vmatprep.subr.bf16.mxu0 0
    %3503 = vmatpush2.bf16.msra.mxu0 0
    %3504 = vmatprep.subr.bf16.mxu0 0
    %3505 = vmatpush2.bf16.msra.mxu0 0
    %3506 = vmatprep.subr.bf16.mxu0 0
    %3507 = vmatpush2.bf16.msra.mxu0 0
    %3508 = vmatprep.subr.bf16.mxu0 0
    %3509 = vmatpush2.bf16.msra.mxu0 0
    %3510 = vmatprep.mubr.bf16.mxu0 0
    %3511 = vmatmul.mubr.bf16.gmra.mxu0 %v3473
    %v3512 = vpop.f32.mrf.mxu0
    %v3513 = vadd.f32 0.0, %v3512
    %v3514 = vpop.f32.mrf.mxu0
    %v3515 = vpop.f32.mrf.mxu0
    %v3516 = vpop.f32.mrf.mxu0
    %3517 = vdwg.mxu0
    %3518 = vrot.lane.b32.xlu0 %v2244, 56
    %v3519 = vpop.permute.xlu0 %3518
    %v3521 = vsel %vm273, %v3369, 0
    %v3524 = vsel %vm413, %v3519, 0
    %3526 = vmatprep.subr.bf16.mxu0 0
    %3527 = vmatpush1.bf16.msra.mxu0 0
    %3528 = vmatprep.subr.bf16.mxu0 0
    %3529 = vmatpush1.bf16.msra.mxu0 0
    %3530 = vmatprep.subr.bf16.mxu0 0
    %3531 = vmatpush1.bf16.msra.mxu0 0
    %3532 = vmatprep.subr.bf16.mxu0 0
    %3533 = vmatpush1.bf16.msra.mxu0 0
    %3534 = vmatprep.subr.bf16.mxu0 0
    %3535 = vmatpush1.bf16.msra.mxu0 0
    %3536 = vmatprep.subr.bf16.mxu0 0
    %3537 = vmatpush1.bf16.msra.mxu0 0
    %3538 = vmatprep.subr.bf16.mxu0 0
    %3539 = vmatpush1.bf16.msra.mxu0 0
    %3540 = vmatprep.subr.bf16.mxu0 0
    %3541 = vmatpush1.bf16.msra.mxu0 %v3524
    %3542 = vmatprep.subr.bf16.mxu0 0
    %3543 = vmatpush2.bf16.msra.mxu0 0
    %3544 = vmatprep.subr.bf16.mxu0 0
    %3545 = vmatpush2.bf16.msra.mxu0 0
    %3546 = vmatprep.subr.bf16.mxu0 0
    %3547 = vmatpush2.bf16.msra.mxu0 0
    %3548 = vmatprep.subr.bf16.mxu0 0
    %3549 = vmatpush2.bf16.msra.mxu0 0
    %3550 = vmatprep.subr.bf16.mxu0 0
    %3551 = vmatpush2.bf16.msra.mxu0 0
    %3552 = vmatprep.subr.bf16.mxu0 0
    %3553 = vmatpush2.bf16.msra.mxu0 0
    %3554 = vmatprep.subr.bf16.mxu0 0
    %3555 = vmatpush2.bf16.msra.mxu0 0
    %3556 = vmatprep.subr.bf16.mxu0 0
    %3557 = vmatpush2.bf16.msra.mxu0 0
    %3558 = vmatprep.mubr.bf16.mxu0 0
    %3559 = vmatmul.mubr.bf16.gmra.mxu0 %v3521
    %v3560 = vpop.f32.mrf.mxu0
    %v3561 = vadd.f32 0.0, %v3560
    %v3562 = vpop.f32.mrf.mxu0
    %v3563 = vpop.f32.mrf.mxu0
    %v3564 = vpop.f32.mrf.mxu0
    %3565 = vdwg.mxu0
    %3566 = vrot.lane.b32.xlu0 %v2243, 48
    %v3567 = vpop.permute.xlu0 %3566
    %v3569 = vsel %vm273, %v3370, 0
    %v3572 = vsel %vm413, %v3567, 0
    %3574 = vmatprep.subr.bf16.mxu0 0
    %3575 = vmatpush1.bf16.msra.mxu0 0
    %3576 = vmatprep.subr.bf16.mxu0 0
    %3577 = vmatpush1.bf16.msra.mxu0 0
    %3578 = vmatprep.subr.bf16.mxu0 0
    %3579 = vmatpush1.bf16.msra.mxu0 0
    %3580 = vmatprep.subr.bf16.mxu0 0
    %3581 = vmatpush1.bf16.msra.mxu0 0
    %3582 = vmatprep.subr.bf16.mxu0 0
    %3583 = vmatpush1.bf16.msra.mxu0 0
    %3584 = vmatprep.subr.bf16.mxu0 0
    %3585 = vmatpush1.bf16.msra.mxu0 0
    %3586 = vmatprep.subr.bf16.mxu0 0
    %3587 = vmatpush1.bf16.msra.mxu0 0
    %3588 = vmatprep.subr.bf16.mxu0 0
    %3589 = vmatpush1.bf16.msra.mxu0 %v3572
    %3590 = vmatprep.subr.bf16.mxu0 0
    %3591 = vmatpush2.bf16.msra.mxu0 0
    %3592 = vmatprep.subr.bf16.mxu0 0
    %3593 = vmatpush2.bf16.msra.mxu0 0
    %3594 = vmatprep.subr.bf16.mxu0 0
    %3595 = vmatpush2.bf16.msra.mxu0 0
    %3596 = vmatprep.subr.bf16.mxu0 0
    %3597 = vmatpush2.bf16.msra.mxu0 0
    %3598 = vmatprep.subr.bf16.mxu0 0
    %3599 = vmatpush2.bf16.msra.mxu0 0
    %3600 = vmatprep.subr.bf16.mxu0 0
    %3601 = vmatpush2.bf16.msra.mxu0 0
    %3602 = vmatprep.subr.bf16.mxu0 0
    %3603 = vmatpush2.bf16.msra.mxu0 0
    %3604 = vmatprep.subr.bf16.mxu0 0
    %3605 = vmatpush2.bf16.msra.mxu0 0
    %3606 = vmatprep.mubr.bf16.mxu0 0
    %3607 = vmatmul.mubr.bf16.gmra.mxu0 %v3569
    %v3608 = vpop.f32.mrf.mxu0
    %v3609 = vadd.f32 0.0, %v3608
    %v3610 = vpop.f32.mrf.mxu0
    %v3611 = vpop.f32.mrf.mxu0
    %v3612 = vpop.f32.mrf.mxu0
    %3613 = vdwg.mxu0
    %3614 = vrot.lane.b32.xlu0 %v2244, 48
    %v3615 = vpop.permute.xlu0 %3614
    %v3617 = vsel %vm273, %v3371, 0
    %v3620 = vsel %vm413, %v3615, 0
    %3622 = vmatprep.subr.bf16.mxu0 0
    %3623 = vmatpush1.bf16.msra.mxu0 0
    %3624 = vmatprep.subr.bf16.mxu0 0
    %3625 = vmatpush1.bf16.msra.mxu0 0
    %3626 = vmatprep.subr.bf16.mxu0 0
    %3627 = vmatpush1.bf16.msra.mxu0 0
    %3628 = vmatprep.subr.bf16.mxu0 0
    %3629 = vmatpush1.bf16.msra.mxu0 0
    %3630 = vmatprep.subr.bf16.mxu0 0
    %3631 = vmatpush1.bf16.msra.mxu0 0
    %3632 = vmatprep.subr.bf16.mxu0 0
    %3633 = vmatpush1.bf16.msra.mxu0 0
    %3634 = vmatprep.subr.bf16.mxu0 0
    %3635 = vmatpush1.bf16.msra.mxu0 0
    %3636 = vmatprep.subr.bf16.mxu0 0
    %3637 = vmatpush1.bf16.msra.mxu0 %v3620
    %3638 = vmatprep.subr.bf16.mxu0 0
    %3639 = vmatpush2.bf16.msra.mxu0 0
    %3640 = vmatprep.subr.bf16.mxu0 0
    %3641 = vmatpush2.bf16.msra.mxu0 0
    %3642 = vmatprep.subr.bf16.mxu0 0
    %3643 = vmatpush2.bf16.msra.mxu0 0
    %3644 = vmatprep.subr.bf16.mxu0 0
    %3645 = vmatpush2.bf16.msra.mxu0 0
    %3646 = vmatprep.subr.bf16.mxu0 0
    %3647 = vmatpush2.bf16.msra.mxu0 0
    %3648 = vmatprep.subr.bf16.mxu0 0
    %3649 = vmatpush2.bf16.msra.mxu0 0
    %3650 = vmatprep.subr.bf16.mxu0 0
    %3651 = vmatpush2.bf16.msra.mxu0 0
    %3652 = vmatprep.subr.bf16.mxu0 0
    %3653 = vmatpush2.bf16.msra.mxu0 0
    %3654 = vmatprep.mubr.bf16.mxu0 0
    %3655 = vmatmul.mubr.bf16.gmra.mxu0 %v3617
    %v3656 = vpop.f32.mrf.mxu0
    %v3657 = vadd.f32 0.0, %v3656
    %v3658 = vpop.f32.mrf.mxu0
    %v3659 = vpop.f32.mrf.mxu0
    %v3660 = vpop.f32.mrf.mxu0
    %3661 = vdwg.mxu0
    %3662 = vrot.lane.b32.xlu0 %v2243, 40
    %v3663 = vpop.permute.xlu0 %3662
    %v3665 = vsel %vm273, %v3372, 0
    %v3668 = vsel %vm413, %v3663, 0
    %3670 = vmatprep.subr.bf16.mxu0 0
    %3671 = vmatpush1.bf16.msra.mxu0 0
    %3672 = vmatprep.subr.bf16.mxu0 0
    %3673 = vmatpush1.bf16.msra.mxu0 0
    %3674 = vmatprep.subr.bf16.mxu0 0
    %3675 = vmatpush1.bf16.msra.mxu0 0
    %3676 = vmatprep.subr.bf16.mxu0 0
    %3677 = vmatpush1.bf16.msra.mxu0 0
    %3678 = vmatprep.subr.bf16.mxu0 0
    %3679 = vmatpush1.bf16.msra.mxu0 0
    %3680 = vmatprep.subr.bf16.mxu0 0
    %3681 = vmatpush1.bf16.msra.mxu0 0
    %3682 = vmatprep.subr.bf16.mxu0 0
    %3683 = vmatpush1.bf16.msra.mxu0 0
    %3684 = vmatprep.subr.bf16.mxu0 0
    %3685 = vmatpush1.bf16.msra.mxu0 %v3668
    %3686 = vmatprep.subr.bf16.mxu0 0
    %3687 = vmatpush2.bf16.msra.mxu0 0
    %3688 = vmatprep.subr.bf16.mxu0 0
    %3689 = vmatpush2.bf16.msra.mxu0 0
    %3690 = vmatprep.subr.bf16.mxu0 0
    %3691 = vmatpush2.bf16.msra.mxu0 0
    %3692 = vmatprep.subr.bf16.mxu0 0
    %3693 = vmatpush2.bf16.msra.mxu0 0
    %3694 = vmatprep.subr.bf16.mxu0 0
    %3695 = vmatpush2.bf16.msra.mxu0 0
    %3696 = vmatprep.subr.bf16.mxu0 0
    %3697 = vmatpush2.bf16.msra.mxu0 0
    %3698 = vmatprep.subr.bf16.mxu0 0
    %3699 = vmatpush2.bf16.msra.mxu0 0
    %3700 = vmatprep.subr.bf16.mxu0 0
    %3701 = vmatpush2.bf16.msra.mxu0 0
    %3702 = vmatprep.mubr.bf16.mxu0 0
    %3703 = vmatmul.mubr.bf16.gmra.mxu0 %v3665
    %v3704 = vpop.f32.mrf.mxu0
    %v3705 = vadd.f32 0.0, %v3704
    %v3706 = vpop.f32.mrf.mxu0
    %v3707 = vpop.f32.mrf.mxu0
    %v3708 = vpop.f32.mrf.mxu0
    %3709 = vdwg.mxu0
    %3710 = vrot.lane.b32.xlu0 %v2244, 40
    %v3711 = vpop.permute.xlu0 %3710
    %v3713 = vsel %vm273, %v3373, 0
    %v3716 = vsel %vm413, %v3711, 0
    %3718 = vmatprep.subr.bf16.mxu0 0
    %3719 = vmatpush1.bf16.msra.mxu0 0
    %3720 = vmatprep.subr.bf16.mxu0 0
    %3721 = vmatpush1.bf16.msra.mxu0 0
    %3722 = vmatprep.subr.bf16.mxu0 0
    %3723 = vmatpush1.bf16.msra.mxu0 0
    %3724 = vmatprep.subr.bf16.mxu0 0
    %3725 = vmatpush1.bf16.msra.mxu0 0
    %3726 = vmatprep.subr.bf16.mxu0 0
    %3727 = vmatpush1.bf16.msra.mxu0 0
    %3728 = vmatprep.subr.bf16.mxu0 0
    %3729 = vmatpush1.bf16.msra.mxu0 0
    %3730 = vmatprep.subr.bf16.mxu0 0
    %3731 = vmatpush1.bf16.msra.mxu0 0
    %3732 = vmatprep.subr.bf16.mxu0 0
    %3733 = vmatpush1.bf16.msra.mxu0 %v3716
    %3734 = vmatprep.subr.bf16.mxu0 0
    %3735 = vmatpush2.bf16.msra.mxu0 0
    %3736 = vmatprep.subr.bf16.mxu0 0
    %3737 = vmatpush2.bf16.msra.mxu0 0
    %3738 = vmatprep.subr.bf16.mxu0 0
    %3739 = vmatpush2.bf16.msra.mxu0 0
    %3740 = vmatprep.subr.bf16.mxu0 0
    %3741 = vmatpush2.bf16.msra.mxu0 0
    %3742 = vmatprep.subr.bf16.mxu0 0
    %3743 = vmatpush2.bf16.msra.mxu0 0
    %3744 = vmatprep.subr.bf16.mxu0 0
    %3745 = vmatpush2.bf16.msra.mxu0 0
    %3746 = vmatprep.subr.bf16.mxu0 0
    %3747 = vmatpush2.bf16.msra.mxu0 0
    %3748 = vmatprep.subr.bf16.mxu0 0
    %3749 = vmatpush2.bf16.msra.mxu0 0
    %3750 = vmatprep.mubr.bf16.mxu0 0
    %3751 = vmatmul.mubr.bf16.gmra.mxu0 %v3713
    %v3752 = vpop.f32.mrf.mxu0
    %v3753 = vadd.f32 0.0, %v3752
    %v3754 = vpop.f32.mrf.mxu0
    %v3755 = vpop.f32.mrf.mxu0
    %v3756 = vpop.f32.mrf.mxu0
    %3757 = vdwg.mxu0
    %3760 = vrot.lane.b32.xlu0 %v3513, 8
    %v3761 = vpop.permute.xlu0 %3760
    %3762 = vrot.lane.b32.xlu0 %v3561, 8
    %v3763 = vpop.permute.xlu0 %3762
    %3768 = vrot.lane.b32.xlu0 %v3609, 16
    %v3769 = vpop.permute.xlu0 %3768
    %3770 = vrot.lane.b32.xlu0 %v3657, 16
    %v3771 = vpop.permute.xlu0 %3770
    %3776 = vrot.lane.b32.xlu0 %v3705, 24
    %v3777 = vpop.permute.xlu0 %3776
    %3778 = vrot.lane.b32.xlu0 %v3753, 24
    %v3779 = vpop.permute.xlu0 %3778
    %v3782 = vsel %vm273, %v3417, %v3761
    %v3783 = vsel %vm273, %v3465, %v3763
    %v3784 = vsel %vm1817, %v3782, %v3769
    %v3785 = vsel %vm1817, %v3783, %v3771
    %v3786 = vsel %vm1820, %v3784, %v3777
    %v3787 = vsel %vm1820, %v3785, %v3779
    %v3788 = vpack.c.bf16 %v3787, %v3786
    %s3789 = scalar_lea.vmem %s6, 16
    %v3790 = vld [vmem:[%s3789] sm:$0xf]
    %v3791 = vld [vmem:[%s3789 + $0x4] sm:$0xf]
    %v3792 = vld [vmem:[%s3789 + $0x8] sm:$0xf]
    %v3793 = vld [vmem:[%s3789 + $0xc] sm:$0xf]
    %v3798 = vunpack.c.l.b16 %v3790
    %v3799 = vunpack.c.l.b16 %v3791
    %v3800 = vunpack.c.l.b16 %v3792
    %v3801 = vunpack.c.l.b16 %v3793
    %v3802 = vpack.c.b16 %v3799, %v3798
    %v3803 = vpack.c.b16 %v3801, %v3800
    %v3807 = vsel %vm187, %v3788, 0
    %3809 = vmatprep.subr.bf16.mxu0 0
    %3810 = vmatpush1.bf16.msra.mxu0 0
    %3811 = vmatprep.subr.bf16.mxu0 0
    %3812 = vmatpush1.bf16.msra.mxu0 0
    %3813 = vmatprep.subr.bf16.mxu0 0
    %3814 = vmatpush1.bf16.msra.mxu0 0
    %3815 = vmatprep.subr.bf16.mxu0 0
    %3816 = vmatpush1.bf16.msra.mxu0 0
    %3817 = vmatprep.subr.bf16.mxu0 0
    %3818 = vmatpush1.bf16.msra.mxu0 0
    %3819 = vmatprep.subr.bf16.mxu0 0
    %3820 = vmatpush1.bf16.msra.mxu0 0
    %3821 = vmatprep.subr.bf16.mxu0 0
    %3822 = vmatpush1.bf16.msra.mxu0 %v3803
    %3823 = vmatprep.subr.bf16.mxu0 0
    %3824 = vmatpush1.bf16.msra.mxu0 %v3802
    %3825 = vmatprep.subr.bf16.mxu0 0
    %3826 = vmatpush2.bf16.msra.mxu0 0
    %3827 = vmatprep.subr.bf16.mxu0 0
    %3828 = vmatpush2.bf16.msra.mxu0 0
    %3829 = vmatprep.subr.bf16.mxu0 0
    %3830 = vmatpush2.bf16.msra.mxu0 0
    %3831 = vmatprep.subr.bf16.mxu0 0
    %3832 = vmatpush2.bf16.msra.mxu0 0
    %3833 = vmatprep.subr.bf16.mxu0 0
    %3834 = vmatpush2.bf16.msra.mxu0 0
    %3835 = vmatprep.subr.bf16.mxu0 0
    %3836 = vmatpush2.bf16.msra.mxu0 0
    %3837 = vmatprep.subr.bf16.mxu0 0
    %3838 = vmatpush2.bf16.msra.mxu0 0
    %3839 = vmatprep.subr.bf16.mxu0 0
    %3840 = vmatpush2.bf16.msra.mxu0 0
    %3841 = vmatprep.mubr.bf16.mxu0 0
    %3842 = vmatmul.mubr.bf16.gmra.mxu0 %v3807
    %v3843 = vpop.f32.mrf.mxu0
    %v3844 = vadd.f32 %v2144, %v3843
    %v3845 = vpop.f32.mrf.mxu0
    %v3846 = vpop.f32.mrf.mxu0
    %v3847 = vadd.f32 %v2145, %v3846
    %v3848 = vpop.f32.mrf.mxu0
    %3849 = vdwg.mxu0
    %s3850 = scalar_lea.vmem %s7, 1
    %v3851 = vld [vmem:[%s3850] sm:$0x1]
    %s3852 = scalar_lea.vmem [#allocation8], 1
    %v3853 = vld [vmem:[%s3852] sm:$0x1]
    %v3854 = vsel %vm187, %v3844, 0.0
    %3855 = vadd.xlane.f32.xlu0 %v3854
    %v3856 = vpop.xlane.xlu0 %3855
    %v3857 = vsel %vm187, %v3847, 0.0
    %3858 = vadd.xlane.f32.xlu0 %v3857
    %v3859 = vpop.xlane.xlu0 %3858
    %v3860 = vmul.f32 %v3856, %v1892
    %v3861 = vmul.f32 %v3859, %v1892
    %v3862 = vsub.f32 %v3844, %v3860
    %v3863 = vsub.f32 %v3847, %v3861
    %v3864 = vmul.f32 %v3862, %v3862
    %v3865 = vmul.f32 %v3863, %v3863
    %v3866 = vsel %vm187, %v3864, 0.0
    %3867 = vadd.xlane.f32.xlu0 %v3866
    %v3868 = vpop.xlane.xlu0 %3867
    %v3869 = vsel %vm187, %v3865, 0.0
    %3870 = vadd.xlane.f32.xlu0 %v3869
    %v3871 = vpop.xlane.xlu0 %3870
    %v3872 = vmul.f32 %v3868, %v1892
    %v3873 = vmul.f32 %v3871, %v1892
    %v3874 = vadd.f32 %v3872, 1e-12
    %v3875 = vadd.f32 %v3873, 1e-12
    %v3876 = vrsqrt.pop %v3874
    %v3877 = vrsqrt.pop %v3875
    %v3878 = vmul.f32 %v3862, %v3876
    %v3879 = vmul.f32 %v3863, %v3877
    %v3881 = vlaneseq
    %v3882 = vshrl.u32 %v3881, 7
    %v3883 = vsub.s32 0, %v3882
    %v3884 = vrot.slane %v3851, %v3883
    %v3886 = vmul.f32 %v3878, %v3884
    %v3887 = vmul.f32 %v3879, %v3884
    %v3889 = vlaneseq
    %v3890 = vshrl.u32 %v3889, 7
    %v3891 = vsub.s32 0, %v3890
    %v3892 = vrot.slane %v3853, %v3891
    %v3894 = vadd.f32 %v3886, %v3892
    %v3895 = vadd.f32 %v3887, %v3892
    %v3896 = vpack.c.bf16 %v3895, %v3894
    %s3897 = scalar_lea.vmem %s9, 16
    %v3898 = vld [vmem:[%s3897] sm:$0xf]
    %v3899 = vld [vmem:[%s3897 + $0x4] sm:$0xf]
    %v3900 = vld [vmem:[%s3897 + $0x8] sm:$0xf]
    %v3901 = vld [vmem:[%s3897 + $0xc] sm:$0xf]
    %s3902 = scalar_lea.vmem [#allocation10], 1
    %v3903 = vld [vmem:[%s3902] sm:$0x1]
    %v3905 = vlaneseq
    %v3906 = vshrl.u32 %v3905, 7
    %v3907 = vsub.s32 0, %v3906
    %v3908 = vrot.slane %v3903, %v3907
    %v3914 = vunpack.c.l.b16 %v3898
    %v3915 = vunpack.c.l.b16 %v3899
    %v3916 = vunpack.c.l.b16 %v3900
    %v3917 = vunpack.c.l.b16 %v3901
    %v3918 = vpack.c.b16 %v3915, %v3914
    %v3919 = vpack.c.b16 %v3917, %v3916
    %v3923 = vsel %vm187, %v3896, 0
    %3925 = vmatprep.subr.bf16.mxu0 0
    %3926 = vmatpush1.bf16.msra.mxu0 0
    %3927 = vmatprep.subr.bf16.mxu0 0
    %3928 = vmatpush1.bf16.msra.mxu0 0
    %3929 = vmatprep.subr.bf16.mxu0 0
    %3930 = vmatpush1.bf16.msra.mxu0 0
    %3931 = vmatprep.subr.bf16.mxu0 0
    %3932 = vmatpush1.bf16.msra.mxu0 0
    %3933 = vmatprep.subr.bf16.mxu0 0
    %3934 = vmatpush1.bf16.msra.mxu0 0
    %3935 = vmatprep.subr.bf16.mxu0 0
    %3936 = vmatpush1.bf16.msra.mxu0 0
    %3937 = vmatprep.subr.bf16.mxu0 0
    %3938 = vmatpush1.bf16.msra.mxu0 %v3919
    %3939 = vmatprep.subr.bf16.mxu0 0
    %3940 = vmatpush1.bf16.msra.mxu0 %v3918
    %3941 = vmatprep.subr.bf16.mxu0 0
    %3942 = vmatpush2.bf16.msra.mxu0 0
    %3943 = vmatprep.subr.bf16.mxu0 0
    %3944 = vmatpush2.bf16.msra.mxu0 0
    %3945 = vmatprep.subr.bf16.mxu0 0
    %3946 = vmatpush2.bf16.msra.mxu0 0
    %3947 = vmatprep.subr.bf16.mxu0 0
    %3948 = vmatpush2.bf16.msra.mxu0 0
    %3949 = vmatprep.subr.bf16.mxu0 0
    %3950 = vmatpush2.bf16.msra.mxu0 0
    %3951 = vmatprep.subr.bf16.mxu0 0
    %3952 = vmatpush2.bf16.msra.mxu0 0
    %3953 = vmatprep.subr.bf16.mxu0 0
    %3954 = vmatpush2.bf16.msra.mxu0 0
    %3955 = vmatprep.subr.bf16.mxu0 0
    %3956 = vmatpush2.bf16.msra.mxu0 0
    %3957 = vmatprep.mubr.bf16.mxu0 0
    %3958 = vmatmul.mubr.bf16.gmra.mxu0 %v3923
    %v3959 = vpop.f32.mrf.mxu0
    %v3960 = vadd.f32 %v3908, %v3959
    %v3961 = vpop.f32.mrf.mxu0
    %v3962 = vpop.f32.mrf.mxu0
    %v3963 = vadd.f32 %v3908, %v3962
    %v3964 = vpop.f32.mrf.mxu0
    %3965 = vdwg.mxu0
    %v3966 = vmul.f32 %v3960, %v3960
    %v3967 = vmul.f32 %v3963, %v3963
    %v3968 = vmul.f32 %v3960, %v3966
    %v3969 = vmul.f32 %v3963, %v3967
    %v3970 = vmul.f32 %v3968, 0.044715
    %v3971 = vmul.f32 %v3969, 0.044715
    %v3972 = vadd.f32 %v3960, %v3970
    %v3973 = vadd.f32 %v3963, %v3971
    %v3974 = vmul.f32 %v3972, 0.7978846
    %v3975 = vmul.f32 %v3973, 0.7978846
    %v3976 = vtanh.pop %v3974
    %v3977 = vtanh.pop %v3975
    %v3978 = vadd.f32 %v3976, 1.0
    %v3979 = vadd.f32 %v3977, 1.0
    %v3980 = vmul.f32 %v3978, 0.5
    %v3981 = vmul.f32 %v3979, 0.5
    %v3982 = vmul.f32 %v3960, %v3980
    %v3983 = vmul.f32 %v3963, %v3981
    %v3984 = vpack.c.bf16 %v3983, %v3982
    %s3985 = scalar_lea.vmem %s11, 32
    %v3986 = vld [vmem:[%s3985] sm:$0xf]
    %v3987 = vld [vmem:[%s3985 + $0x4] sm:$0xf]
    %v3988 = vld [vmem:[%s3985 + $0x8] sm:$0xf]
    %v3989 = vld [vmem:[%s3985 + $0xc] sm:$0xf]
    %v3990 = vld [vmem:[%s3985 + $0x10] sm:$0xf]
    %v3991 = vld [vmem:[%s3985 + $0x14] sm:$0xf]
    %v3992 = vld [vmem:[%s3985 + $0x18] sm:$0xf]
    %v3993 = vld [vmem:[%s3985 + $0x1c] sm:$0xf]
    %s3994 = scalar_lea.vmem [#allocation11], 1
    %v3995 = vld [vmem:[%s3994] sm:$0x1]
    %v3997 = vlaneseq
    %v3998 = vshrl.u32 %v3997, 7
    %v3999 = vsub.s32 0, %v3998
    %v4000 = vrot.slane %v3995, %v3999
    %v4010 = vunpack.c.l.b16 %v3986
    %v4011 = vunpack.c.l.b16 %v3987
    %v4012 = vunpack.c.l.b16 %v3988
    %v4013 = vunpack.c.l.b16 %v3989
    %v4014 = vunpack.c.l.b16 %v3990
    %v4015 = vunpack.c.l.b16 %v3991
    %v4016 = vunpack.c.l.b16 %v3992
    %v4017 = vunpack.c.l.b16 %v3993
    %v4018 = vpack.c.b16 %v4011, %v4010
    %v4019 = vpack.c.b16 %v4013, %v4012
    %v4020 = vpack.c.b16 %v4015, %v4014
    %v4021 = vpack.c.b16 %v4017, %v4016
    %v4027 = vsel %vm2055, %v3984, 0
    %4029 = vmatprep.subr.bf16.mxu0 0
    %4030 = vmatpush1.bf16.msra.mxu0 0
    %4031 = vmatprep.subr.bf16.mxu0 0
    %4032 = vmatpush1.bf16.msra.mxu0 0
    %4033 = vmatprep.subr.bf16.mxu0 0
    %4034 = vmatpush1.bf16.msra.mxu0 0
    %4035 = vmatprep.subr.bf16.mxu0 0
    %4036 = vmatpush1.bf16.msra.mxu0 0
    %4037 = vmatprep.subr.bf16.mxu0 0
    %4038 = vmatpush1.bf16.msra.mxu0 %v4021
    %4039 = vmatprep.subr.bf16.mxu0 0
    %4040 = vmatpush1.bf16.msra.mxu0 %v4020
    %4041 = vmatprep.subr.bf16.mxu0 0
    %4042 = vmatpush1.bf16.msra.mxu0 %v4019
    %4043 = vmatprep.subr.bf16.mxu0 0
    %4044 = vmatpush1.bf16.msra.mxu0 %v4018
    %4045 = vmatprep.subr.bf16.mxu0 0
    %4046 = vmatpush2.bf16.msra.mxu0 0
    %4047 = vmatprep.subr.bf16.mxu0 0
    %4048 = vmatpush2.bf16.msra.mxu0 0
    %4049 = vmatprep.subr.bf16.mxu0 0
    %4050 = vmatpush2.bf16.msra.mxu0 0
    %4051 = vmatprep.subr.bf16.mxu0 0
    %4052 = vmatpush2.bf16.msra.mxu0 0
    %4053 = vmatprep.subr.bf16.mxu0 0
    %4054 = vmatpush2.bf16.msra.mxu0 0
    %4055 = vmatprep.subr.bf16.mxu0 0
    %4056 = vmatpush2.bf16.msra.mxu0 0
    %4057 = vmatprep.subr.bf16.mxu0 0
    %4058 = vmatpush2.bf16.msra.mxu0 0
    %4059 = vmatprep.subr.bf16.mxu0 0
    %4060 = vmatpush2.bf16.msra.mxu0 0
    %4061 = vmatprep.mubr.bf16.mxu0 0
    %4062 = vmatmul.mubr.bf16.gmra.mxu0 %v4027
    %v4063 = vpop.f32.mrf.mxu0
    %v4064 = vadd.f32 %v4000, %v4063
    %v4065 = vpop.f32.mrf.mxu0
    %v4066 = vpop.f32.mrf.mxu0
    %v4067 = vadd.f32 %v4000, %v4066
    %v4068 = vpop.f32.mrf.mxu0
    %4069 = vdwg.mxu0
    %v4070 = vadd.f32 %v4064, %v3894
    %v4071 = vadd.f32 %v4067, %v3895
    %s4072 = scalar_lea.vmem %s13, 1
    %v4073 = vld [vmem:[%s4072] sm:$0x1]
    %s4074 = scalar_lea.vmem %s14, 1
    %v4075 = vld [vmem:[%s4074] sm:$0x1]
    %v4076 = vsel %vm187, %v4070, 0.0
    %4077 = vadd.xlane.f32.xlu0 %v4076
    %v4078 = vpop.xlane.xlu0 %4077
    %v4079 = vsel %vm187, %v4071, 0.0
    %4080 = vadd.xlane.f32.xlu0 %v4079
    %v4081 = vpop.xlane.xlu0 %4080
    %v4082 = vmul.f32 %v4078, %v1892
    %v4083 = vmul.f32 %v4081, %v1892
    %v4084 = vsub.f32 %v4070, %v4082
    %v4085 = vsub.f32 %v4071, %v4083
    %v4086 = vmul.f32 %v4084, %v4084
    %v4087 = vmul.f32 %v4085, %v4085
    %v4088 = vsel %vm187, %v4086, 0.0
    %4089 = vadd.xlane.f32.xlu0 %v4088
    %v4090 = vpop.xlane.xlu0 %4089
    %v4091 = vsel %vm187, %v4087, 0.0
    %4092 = vadd.xlane.f32.xlu0 %v4091
    %v4093 = vpop.xlane.xlu0 %4092
    %v4094 = vmul.f32 %v4090, %v1892
    %v4095 = vmul.f32 %v4093, %v1892
    %v4096 = vadd.f32 %v4094, 1e-12
    %v4097 = vadd.f32 %v4095, 1e-12
    %v4098 = vrsqrt.pop %v4096
    %v4099 = vrsqrt.pop %v4097
    %v4100 = vmul.f32 %v4084, %v4098
    %v4101 = vmul.f32 %v4085, %v4099
    %v4103 = vlaneseq
    %v4104 = vshrl.u32 %v4103, 7
    %v4105 = vsub.s32 0, %v4104
    %v4106 = vrot.slane %v4073, %v4105
    %v4108 = vmul.f32 %v4100, %v4106
    %v4109 = vmul.f32 %v4101, %v4106
    %v4111 = vlaneseq
    %v4112 = vshrl.u32 %v4111, 7
    %v4113 = vsub.s32 0, %v4112
    %v4114 = vrot.slane %v4075, %v4113
    %v4116 = vadd.f32 %v4108, %v4114
    %v4117 = vadd.f32 %v4109, %v4114
    %v4119 = vrot.slane %v4116, 7
    %v4122 = vrot.slane %v4117, 6
    %v4124 = vsel %vm1201, %v4119, %v4122
    %v4125 = vpack.c.bf16 %v4124, %v4124
    %v4126 = vld [vmem:[#allocation13] sm:$0xf]
    %v4127 = vld [vmem:[#allocation13 + $0x4] sm:$0xf]
    %v4128 = vld [vmem:[#allocation13 + $0x8] sm:$0xf]
    %v4129 = vld [vmem:[#allocation13 + $0xc] sm:$0xf]
    %v4130 = vld [vmem:[%s16] sm:$0x1]
    %v4132 = vlaneseq
    %v4133 = vshrl.u32 %v4132, 7
    %v4134 = vsub.s32 0, %v4133
    %v4135 = vrot.slane %v4130, %v4134
    %v4141 = vunpack.c.l.b16 %v4126
    %v4142 = vunpack.c.l.b16 %v4127
    %v4143 = vunpack.c.l.b16 %v4128
    %v4144 = vunpack.c.l.b16 %v4129
    %v4145 = vpack.c.b16 %v4142, %v4141
    %v4146 = vpack.c.b16 %v4144, %v4143
    %v4150 = vsel %vm187, %v4125, 0
    %4152 = vmatprep.subr.bf16.mxu0 0
    %4153 = vmatpush1.bf16.msra.mxu0 0
    %4154 = vmatprep.subr.bf16.mxu0 0
    %4155 = vmatpush1.bf16.msra.mxu0 0
    %4156 = vmatprep.subr.bf16.mxu0 0
    %4157 = vmatpush1.bf16.msra.mxu0 0
    %4158 = vmatprep.subr.bf16.mxu0 0
    %4159 = vmatpush1.bf16.msra.mxu0 0
    %4160 = vmatprep.subr.bf16.mxu0 0
    %4161 = vmatpush1.bf16.msra.mxu0 0
    %4162 = vmatprep.subr.bf16.mxu0 0
    %4163 = vmatpush1.bf16.msra.mxu0 0
    %4164 = vmatprep.subr.bf16.mxu0 0
    %4165 = vmatpush1.bf16.msra.mxu0 %v4146
    %4166 = vmatprep.subr.bf16.mxu0 0
    %4167 = vmatpush1.bf16.msra.mxu0 %v4145
    %4168 = vmatprep.subr.bf16.mxu0 0
    %4169 = vmatpush2.bf16.msra.mxu0 0
    %4170 = vmatprep.subr.bf16.mxu0 0
    %4171 = vmatpush2.bf16.msra.mxu0 0
    %4172 = vmatprep.subr.bf16.mxu0 0
    %4173 = vmatpush2.bf16.msra.mxu0 0
    %4174 = vmatprep.subr.bf16.mxu0 0
    %4175 = vmatpush2.bf16.msra.mxu0 0
    %4176 = vmatprep.subr.bf16.mxu0 0
    %4177 = vmatpush2.bf16.msra.mxu0 0
    %4178 = vmatprep.subr.bf16.mxu0 0
    %4179 = vmatpush2.bf16.msra.mxu0 0
    %4180 = vmatprep.subr.bf16.mxu0 0
    %4181 = vmatpush2.bf16.msra.mxu0 0
    %4182 = vmatprep.subr.bf16.mxu0 0
    %4183 = vmatpush2.bf16.msra.mxu0 0
    %4184 = vmatprep.mubr.bf16.mxu0 0
    %4185 = vmatmul.mubr.bf16.gmra.mxu0 %v4150
    %v4186 = vpop.f32.mrf.mxu0
    %v4187 = vadd.f32 %v4135, %v4186
    %v4188 = vpop.f32.mrf.mxu0
    %v4189 = vpop.f32.mrf.mxu0
    %v4190 = vpop.f32.mrf.mxu0
    %4191 = vdwg.mxu0
    %v4192 = vtanh.pop %v4187
    %v4193 = vpack.c.bf16 %v4192, %v4192
    %v4194 = vld [vmem:[%s17] sm:$0xf]
    %v4195 = vld [vmem:[%s17 + $0x4] sm:$0xf]
    %v4196 = vld [vmem:[%s17 + $0x8] sm:$0xf]
    %v4197 = vld [vmem:[%s17 + $0xc] sm:$0xf]
    %v4198 = vld [vmem:[%s18] sm:$0x1]
    %v4200 = vlaneseq
    %v4201 = vshrl.u32 %v4200, 7
    %v4202 = vsub.s32 0, %v4201
    %v4203 = vrot.slane %v4198, %v4202
    %v4209 = vunpack.c.l.b16 %v4194
    %v4210 = vunpack.c.l.b16 %v4195
    %v4211 = vunpack.c.l.b16 %v4196
    %v4212 = vunpack.c.l.b16 %v4197
    %v4213 = vpack.c.b16 %v4210, %v4209
    %v4214 = vpack.c.b16 %v4212, %v4211
    %v4218 = vsel %vm187, %v4193, 0
    %4220 = vmatprep.subr.bf16.mxu0 0
    %4221 = vmatpush1.bf16.msra.mxu0 0
    %4222 = vmatprep.subr.bf16.mxu0 0
    %4223 = vmatpush1.bf16.msra.mxu0 0
    %4224 = vmatprep.subr.bf16.mxu0 0
    %4225 = vmatpush1.bf16.msra.mxu0 0
    %4226 = vmatprep.subr.bf16.mxu0 0
    %4227 = vmatpush1.bf16.msra.mxu0 0
    %4228 = vmatprep.subr.bf16.mxu0 0
    %4229 = vmatpush1.bf16.msra.mxu0 0
    %4230 = vmatprep.subr.bf16.mxu0 0
    %4231 = vmatpush1.bf16.msra.mxu0 0
    %4232 = vmatprep.subr.bf16.mxu0 0
    %4233 = vmatpush1.bf16.msra.mxu0 %v4214
    %4234 = vmatprep.subr.bf16.mxu0 0
    %4235 = vmatpush1.bf16.msra.mxu0 %v4213
    %4236 = vmatprep.subr.bf16.mxu0 0
    %4237 = vmatpush2.bf16.msra.mxu0 0
    %4238 = vmatprep.subr.bf16.mxu0 0
    %4239 = vmatpush2.bf16.msra.mxu0 0
    %4240 = vmatprep.subr.bf16.mxu0 0
    %4241 = vmatpush2.bf16.msra.mxu0 0
    %4242 = vmatprep.subr.bf16.mxu0 0
    %4243 = vmatpush2.bf16.msra.mxu0 0
    %4244 = vmatprep.subr.bf16.mxu0 0
    %4245 = vmatpush2.bf16.msra.mxu0 0
    %4246 = vmatprep.subr.bf16.mxu0 0
    %4247 = vmatpush2.bf16.msra.mxu0 0
    %4248 = vmatprep.subr.bf16.mxu0 0
    %4249 = vmatpush2.bf16.msra.mxu0 0
    %4250 = vmatprep.subr.bf16.mxu0 0
    %4251 = vmatpush2.bf16.msra.mxu0 0
    %4252 = vmatprep.mubr.bf16.mxu0 0
    %4253 = vmatmul.mubr.bf16.gmra.mxu0 %v4218
    %v4254 = vpop.f32.mrf.mxu0
    %v4255 = vadd.f32 %v4203, %v4254
    %v4256 = vpop.f32.mrf.mxu0
    %v4257 = vpop.f32.mrf.mxu0
    %v4258 = vpop.f32.mrf.mxu0
    %4259 = vdwg.mxu0
    %vm4260 = vcmask 17408
    %4261 = vst.msk [vmem:[#allocation14] sm:$0x3] %vm4260, %v4255
    // Predicated region
    $region106: #{tpu_custom_call.1} parent=1 // pred_check
      _
    $region107: #{tpu_custom_call.1} parent=1 // pred_check_branch
      %4263 = sbr.rel (0) target = $region109
    $region108: #{tpu_custom_call.1} parent=1 // pred_region
      %s4265 = ssub.s32 32, 32
      %4266 = vsyncadd [#allocation4], %s4265
      %s4268 = sshll.u32 [#allocation14], 4
      %s4269 = int_to_ptr.vmem [resolvable:$true] %s4268
      %4271 = dma.vmem_to_hbm [thread:$0]  %s4269, 32, %s19, [#allocation4]
    $region109: #{tpu_custom_call.1} parent=1 // pred_fallthru
      _
    // Predicated region
    $region110: #{tpu_custom_call.1} parent=1 // pred_check
      _
    $region111: #{tpu_custom_call.1} parent=1 // pred_check_branch
      %4273 = sbr.rel (0) target = $region113
    $region112: #{tpu_custom_call.1} parent=1 // pred_region
      %4274 = dma.done [#allocation4], 32
    $region113: #{tpu_custom_call.1} parent=1 // pred_fallthru
      _
    %4275 = vsyncpa [#allocation3], 1
    %4276 = vsyncpa [#allocation6], 1
    %4277 = vsyncpa [#allocation9], 1
    %4278 = vsyncpa [#allocation12], 1
    %4279 = vsyncpa [#allocation4], 1

</llo_original>
